<compile_context>
chip_gen: v6e
topology: v6e:2x2x1
jax: 0.10.0
libtpu: 0.0.40
codegen_flags: <defaults>
</compile_context>

<pallas_src>
import jax
import jax.numpy as jnp
from jax.experimental import pallas as pl
from jax.experimental.pallas import tpu as pltpu


def _pam_flash_kernel(alpha_ref, xq_ref, xk_ref, fd_ref, m_ref, v_ref,
                      o_ref, q_sc, m_sc, l_sc, acc_sc):
    """One (batch, query-tile, key-tile) grid step of PAM attention.

    alpha_ref : (1, 1)   f32   in SMEM (scalar path)
    xq_ref    : (1, TQ, Cp) bf16  query tile of x (also the residual)
    xk_ref    : (1, TK, Cp) bf16  key tile of x
    fd_ref    : (1, TK, Cp) bf16  precomputed conv_d values for the key tile
    m_ref     : (Cp, Cp) bf16     fused gram weight  M = Wb^T @ Wc
    v_ref     : (1, Cp)  f32      key-side bias  v = Wc^T @ bb (folded into q_sc)
    o_ref     : (1, TQ, Cp) f32   output tile
    q_sc      : (TQ, Cp) bf16     cached query projection (x_q @ M + v)
    m_sc,l_sc : (TQ, 1)  f32      online-softmax running max / sum
    acc_sc    : (TQ, Cp) f32      un-normalized attention output accumulator
    """
    ki = pl.program_id(2)

    @pl.when(ki == 0)
    def _init():
        m_sc[...] = jnp.full(m_sc.shape, -jnp.inf, m_sc.dtype)
        l_sc[...] = jnp.zeros(l_sc.shape, l_sc.dtype)
        acc_sc[...] = jnp.zeros(acc_sc.shape, acc_sc.dtype)
        # Query projection through the fused weight, computed once per
        # (batch, query-tile).  The key-side bias is folded in here:
        #   energy[i,j] = (x_i M + v) . x_j   (j-constant terms cancel in softmax)
        q = jnp.dot(xq_ref[0], m_ref[...], preferred_element_type=jnp.float32)
        q_sc[...] = (q + v_ref[...]).astype(jnp.bfloat16)

    xk = xk_ref[0]                                              # (TK, Cp) bf16

    # Energy tile (TQ, TK) — single MXU contraction over the full channel dim.
    s = jax.lax.dot_general(q_sc[...], xk, (((1,), (1,)), ((), ())),
                            preferred_element_type=jnp.float32)

    # Online-softmax update (statistics in f32, P.V matmul in bf16).
    m_prev = m_sc[...]
    m_new = jnp.maximum(m_prev, jnp.max(s, axis=-1, keepdims=True))
    corr = jnp.exp(m_prev - m_new)
    p = jnp.exp(s - m_new)
    l_sc[...] = corr * l_sc[...] + jnp.sum(p, axis=-1, keepdims=True)
    acc_sc[...] = corr * acc_sc[...] + jnp.dot(
        p.astype(jnp.bfloat16), fd_ref[0], preferred_element_type=jnp.float32)
    m_sc[...] = m_new

    @pl.when(ki == pl.num_programs(2) - 1)
    def _finalize():
        inv_l = pl.reciprocal(l_sc[...], approx=True)           # EUP slot, ~free
        feat_e = acc_sc[...] * inv_l
        o_ref[0] = (alpha_ref[0, 0] * feat_e
                    + xq_ref[0].astype(jnp.float32))            # residual


def pam_forward(x_nchw, wb, bb, wc, bc, wd, bd, alpha, *, tq=512, tk=512,
                vmem_limit_bytes=48 * 1024 * 1024):
    """PAM forward.  x_nchw: (B, C, H, W) f32 -> (B, C, H, W) f32.

    Note: bc is intentionally unused — it only contributes terms that are
    constant along the softmax axis and therefore cancel exactly.
    On v5e/v6e (128 MiB VMEM) vmem_limit_bytes can be raised to ~96 MiB to
    allow tq up to 1024; the 48 MiB default is the v7x-safe budget.
    """
    B, C, H, W = x_nchw.shape
    HW = H * W
    # bf16 operands pack 2 rows/sublane -> tiles must be multiples of 16.
    assert HW % 16 == 0, "H*W must be a multiple of 16"
    # TODO(synk): pad/mask the HW axis to support ragged spatial sizes.

    align = 16

    def _fit(t):
        t = max(align, min(t, HW))
        t -= t % align
        while HW % t:
            t -= align
        return t

    tq, tk = _fit(tq), _fit(tk)

    # Lane-dense channel padding (multiple of 128): unmasked stores even when
    # C < 128; a no-op for typical PAM widths (C >= 128).
    Cp = ((C + 127) // 128) * 128
    pad_c = Cp - C

    # Keep both TensorCores busy on v7x when B == 1.
    if B == 1 and HW // tq < 2 and HW >= 2 * align:
        tq = _fit(max(align, HW // 2))

    # Fully VMEM-resident keys: if the bf16 key + value slabs for one batch fit
    # a modest budget (and the (tq, HW) f32 temporaries stay small), cover HW
    # with a single key block.  Its block index is then constant across query
    # tiles, so Pallas fetches keys once per batch instead of nq times.
    if HW * Cp * 4 <= 4 * 1024 * 1024 and HW * tq * 4 <= 8 * 1024 * 1024:
        tk = HW

    # NCHW -> (B, HW, C) f32 (kept only as an XLA intermediate), then a single
    # bf16 HBM copy of x used for both the query and the key stream.
    x_hwc = jnp.transpose(x_nchw, (0, 2, 3, 1)).reshape(B, HW, C)
    x_hwc = x_hwc.astype(jnp.float32)
    x_bf16 = jnp.pad(x_hwc, ((0, 0), (0, 0), (0, pad_c))).astype(jnp.bfloat16)

    # conv_d precomputed once as one big XLA matmul (f32), stored bf16.
    feat_d = x_hwc @ wd.T.astype(jnp.float32) + bd.astype(jnp.float32)
    feat_d = jnp.pad(feat_d, ((0, 0), (0, 0), (0, pad_c))).astype(jnp.bfloat16)

    # Fuse conv_b / conv_c:
    #   energy[i,j] = x_i (Wb^T Wc) x_j^T + (Wc^T bb).x_j + [const in j -> cancels]
    # NOTE: the bf16 gram fusion changes rounding vs the two-step reference;
    # re-validate tolerance at production channel counts (C >= 512).
    fused_m = (wb.T @ wc).astype(jnp.float32)                     # (C, C)
    key_bias = (wc.T @ bb).astype(jnp.float32)                    # (C,)
    fused_m = jnp.pad(fused_m, ((0, pad_c), (0, pad_c))).astype(jnp.bfloat16)
    key_bias = jnp.pad(key_bias, (0, pad_c)).reshape(1, Cp).astype(jnp.float32)

    alpha_smem = jnp.asarray(alpha, jnp.float32).reshape(1, 1)

    nq, nk = HW // tq, HW // tk

    out_flat = pl.pallas_call(
        _pam_flash_kernel,
        out_shape=jax.ShapeDtypeStruct((B, HW, Cp), jnp.float32),
        grid_spec=pltpu.PrefetchScalarGridSpec(
            num_scalar_prefetch=0,
            grid=(B, nq, nk),
            in_specs=[
                pl.BlockSpec(memory_space=pltpu.MemorySpace.SMEM),        # alpha
                pl.BlockSpec((1, tq, Cp), lambda b, qi, ki: (b, qi, 0)),  # x query tile
                pl.BlockSpec((1, tk, Cp), lambda b, qi, ki: (b, ki, 0)),  # x key tile
                pl.BlockSpec((1, tk, Cp), lambda b, qi, ki: (b, ki, 0)),  # feat_d tile
                pl.BlockSpec((Cp, Cp), lambda b, qi, ki: (0, 0)),         # Wb^T Wc
                pl.BlockSpec((1, Cp), lambda b, qi, ki: (0, 0)),          # Wc^T bb
            ],
            out_specs=pl.BlockSpec((1, tq, Cp), lambda b, qi, ki: (b, qi, 0)),
            scratch_shapes=[
                pltpu.VMEM((tq, Cp), jnp.bfloat16),   # cached x_q @ M + v
                pltpu.VMEM((tq, 1), jnp.float32),     # running max
                pltpu.VMEM((tq, 1), jnp.float32),     # running sum
                pltpu.VMEM((tq, Cp), jnp.float32),    # output accumulator
            ]),
        compiler_params=pltpu.CompilerParams(
            dimension_semantics=("parallel", "parallel", "arbitrary"),
            vmem_limit_bytes=vmem_limit_bytes),
    )(alpha_smem, x_bf16, x_bf16, feat_d, fused_m, key_bias)

    # (B, HW, Cp) -> strip channel padding -> NCHW
    out_flat = out_flat[:, :, :C]
    return jnp.transpose(out_flat.reshape(B, H, W, C), (0, 3, 1, 2))


def pam_reference(x_nchw, wb, bb, wc, bc, wd, bd, alpha):
    """Pure-JAX f32 reference mirroring the PyTorch forward exactly (NCHW)."""
    B, C, H, W = x_nchw.shape
    HW = H * W

    def conv1x1(x, w, b):  # x: (B,C,H,W), w: (Cout,Cin), b: (Cout,)
        return jnp.einsum('bchw,oc->bohw', x, w) + b[None, :, None, None]

    feat_b = conv1x1(x_nchw, wb, bb).reshape(B, -1, HW).transpose(0, 2, 1)  # (B,HW,Cr)
    feat_c = conv1x1(x_nchw, wc, bc).reshape(B, -1, HW)                     # (B,Cr,HW)
    energy = jnp.einsum('bik,bkj->bij', feat_b, feat_c)                     # (B,HW,HW)
    attn = jax.nn.softmax(energy, axis=-1)
    feat_d = conv1x1(x_nchw, wd, bd).reshape(B, -1, HW)                     # (B,C,HW)
    feat_e = jnp.einsum('bcj,bij->bci', feat_d, attn).reshape(B, C, H, W)
    return alpha * feat_e + x_nchw


if __name__ == "__main__":
    B, C, H, W = 2, 32, 16, 16
    Cr = C // 8

    key = jax.random.PRNGKey(0)
    kx, kwb, kbb, kwc, kbc, kwd, kbd = jax.random.split(key, 7)

    x = jax.random.normal(kx, (B, C, H, W), jnp.float32)

    # Deterministic parameter init (1x1 conv kernels squeezed to (Cout, Cin)).
    wb = 0.1 * jax.random.normal(kwb, (Cr, C), jnp.float32)
    bb = 0.1 * jax.random.normal(kbb, (Cr,), jnp.float32)
    wc = 0.1 * jax.random.normal(kwc, (Cr, C), jnp.float32)
    bc = 0.1 * jax.random.normal(kbc, (Cr,), jnp.float32)
    wd = 0.1 * jax.random.normal(kwd, (C, C), jnp.float32)
    bd = 0.1 * jax.random.normal(kbd, (C,), jnp.float32)
    # PyTorch inits alpha to 0 (out == x); use a nonzero value so the attention
    # path actually contributes to the tested output.
    alpha = jnp.float32(0.3)

    out = pam_forward(x, wb, bb, wc, bc, wd, bd, alpha)
    out = jax.block_until_ready(out)

    ref = pam_reference(x, wb, bb, wc, bc, wd, bd, alpha)
    assert out.shape == (B, C, H, W)
    max_err = float(jnp.max(jnp.abs(out - ref)))
    # bf16 MXU operands, bf16 residual source + approx reciprocal: relaxed tol.
    assert jnp.allclose(out, ref, atol=2e-2, rtol=2e-2), max_err

    print("KERNEL_OK")
</pallas_src>

<mosaic_0001>
module attributes {stable_mosaic.version = 11 : i64} {
  func.func @_pam_flash_kernel(%arg0: i32, %arg1: i32, %arg2: i32, %arg3: memref<1x1xf32, #tpu.memory_space<smem>>, %arg4: memref<1x256x128xbf16, #tpu.memory_space<vmem>>, %arg5: memref<1x256x128xbf16, #tpu.memory_space<vmem>>, %arg6: memref<1x256x128xbf16, #tpu.memory_space<vmem>>, %arg7: memref<128x128xbf16, #tpu.memory_space<vmem>>, %arg8: memref<1x128xf32, #tpu.memory_space<vmem>>, %arg9: memref<1x256x128xf32, #tpu.memory_space<vmem>>, %arg10: memref<256x128xbf16, #tpu.memory_space<vmem>>, %arg11: memref<256x1xf32, #tpu.memory_space<vmem>>, %arg12: memref<256x1xf32, #tpu.memory_space<vmem>>, %arg13: memref<256x128xf32, #tpu.memory_space<vmem>>) attributes {dimension_semantics = [#tpu.dimension_semantics<parallel>, #tpu.dimension_semantics<parallel>, #tpu.dimension_semantics<arbitrary>], iteration_bounds = array<i64: 2, 1, 1>, scalar_prefetch = 0 : i64, scratch_operands = 4 : i64, tpu.core_type = #tpu.core_type<tc>, window_params = [{transform_indices = @transform_0, window_bounds = array<i64: 1, 1>}, {transform_indices = @transform_1, window_bounds = array<i64: 1, 256, 128>}, {transform_indices = @transform_2, window_bounds = array<i64: 1, 256, 128>}, {transform_indices = @transform_3, window_bounds = array<i64: 1, 256, 128>}, {pipeline_mode = #tpu.pipeline_mode<synchronous>, transform_indices = @transform_4, window_bounds = array<i64: 128, 128>}, {pipeline_mode = #tpu.pipeline_mode<synchronous>, transform_indices = @transform_5, window_bounds = array<i64: 1, 128>}, {transform_indices = @transform_6, window_bounds = array<i64: 1, 256, 128>}]} {
    %c0_i32 = arith.constant 0 : i32
    %0 = arith.cmpi eq, %arg2, %c0_i32 : i32
    %1 = arith.extui %0 : i1 to i32
    %c0_i32_0 = arith.constant 0 : i32
    %2 = arith.cmpi ne, %1, %c0_i32_0 : i32
    scf.if %2 {
      %cst_25 = arith.constant 0xFF800000 : f32
      %35 = vector.broadcast %cst_25 : f32 to vector<256x1xf32>
      %c0_26 = arith.constant 0 : index
      %c0_27 = arith.constant 0 : index
      %36 = vector.load %arg11[%c0_26, %c0_27] : memref<256x1xf32, #tpu.memory_space<vmem>>, vector<256x1xf32>
      tpu.vector_store %arg11[%c0_26, %c0_27], %35 {strides = array<i32>} : memref<256x1xf32, #tpu.memory_space<vmem>>, vector<256x1xf32>,
      %cst_28 = arith.constant 0.000000e+00 : f32
      %37 = vector.broadcast %cst_28 : f32 to vector<256x1xf32>
      %c0_29 = arith.constant 0 : index
      %c0_30 = arith.constant 0 : index
      %38 = vector.load %arg12[%c0_29, %c0_30] : memref<256x1xf32, #tpu.memory_space<vmem>>, vector<256x1xf32>
      tpu.vector_store %arg12[%c0_29, %c0_30], %37 {strides = array<i32>} : memref<256x1xf32, #tpu.memory_space<vmem>>, vector<256x1xf32>,
      %cst_31 = arith.constant 0.000000e+00 : f32
      %39 = vector.broadcast %cst_31 : f32 to vector<256x128xf32>
      %c0_32 = arith.constant 0 : index
      %c0_33 = arith.constant 0 : index
      %40 = vector.load %arg13[%c0_32, %c0_33] : memref<256x128xf32, #tpu.memory_space<vmem>>, vector<256x128xf32>
      tpu.vector_store %arg13[%c0_32, %c0_33], %39 {strides = array<i32>} : memref<256x128xf32, #tpu.memory_space<vmem>>, vector<256x128xf32>,
      %c0_34 = arith.constant 0 : index
      %c0_35 = arith.constant 0 : index
      %c0_36 = arith.constant 0 : index
      %41 = vector.load %arg4[%c0_34, %c0_35, %c0_36] : memref<1x256x128xbf16, #tpu.memory_space<vmem>>, vector<1x256x128xbf16>
      %42 = vector.shape_cast %41 : vector<1x256x128xbf16> to vector<256x128xbf16>
      %c0_37 = arith.constant 0 : index
      %c0_38 = arith.constant 0 : index
      %43 = vector.load %arg7[%c0_37, %c0_38] : memref<128x128xbf16, #tpu.memory_space<vmem>>, vector<128x128xbf16>
      %cst_39 = arith.constant dense<0.000000e+00> : vector<256x128xf32>
      %44 = tpu.matmul %42, %43, %cst_39 {dimension_numbers = #tpu.dot_dimension_numbers<[1], [0], [0], [1], [0, 0, 1, 1], [], []>} : vector<256x128xbf16>, vector<128x128xbf16>, vector<256x128xf32> -> vector<256x128xf32>
      %c0_40 = arith.constant 0 : index
      %c0_41 = arith.constant 0 : index
      %45 = vector.load %arg8[%c0_40, %c0_41] : memref<1x128xf32, #tpu.memory_space<vmem>>, vector<1x128xf32>
      %46 = vector.broadcast %45 : vector<1x128xf32> to vector<256x128xf32>
      %47 = arith.addf %44, %46 : vector<256x128xf32>
      %48 = arith.truncf %47 : vector<256x128xf32> to vector<256x128xbf16>
      %c0_42 = arith.constant 0 : index
      %c0_43 = arith.constant 0 : index
      %49 = vector.load %arg10[%c0_42, %c0_43] : memref<256x128xbf16, #tpu.memory_space<vmem>>, vector<256x128xbf16>
      tpu.vector_store %arg10[%c0_42, %c0_43], %48 {strides = array<i32>} : memref<256x128xbf16, #tpu.memory_space<vmem>>, vector<256x128xbf16>,
    } else {
    }
    %c0 = arith.constant 0 : index
    %c0_1 = arith.constant 0 : index
    %c0_2 = arith.constant 0 : index
    %3 = vector.load %arg5[%c0, %c0_1, %c0_2] : memref<1x256x128xbf16, #tpu.memory_space<vmem>>, vector<1x256x128xbf16>
    %4 = vector.shape_cast %3 : vector<1x256x128xbf16> to vector<256x128xbf16>
    %c0_3 = arith.constant 0 : index
    %c0_4 = arith.constant 0 : index
    %5 = vector.load %arg10[%c0_3, %c0_4] : memref<256x128xbf16, #tpu.memory_space<vmem>>, vector<256x128xbf16>
    %cst = arith.constant dense<0.000000e+00> : vector<256x256xf32>
    %6 = tpu.matmul %5, %4, %cst {dimension_numbers = #tpu.dot_dimension_numbers<[1], [1], [0], [0], [0, 0, 1, 0], [], []>} : vector<256x128xbf16>, vector<256x128xbf16>, vector<256x256xf32> -> vector<256x256xf32>
    %c0_5 = arith.constant 0 : index
    %c0_6 = arith.constant 0 : index
    %7 = vector.load %arg11[%c0_5, %c0_6] : memref<256x1xf32, #tpu.memory_space<vmem>>, vector<256x1xf32>
    %cst_7 = arith.constant dense<0xFF800000> : vector<256xf32>
    %8 = vector.multi_reduction <maximumf>, %6, %cst_7 [1] : vector<256x256xf32> to vector<256xf32>
    %9 = vector.shape_cast %8 : vector<256xf32> to vector<256x1xf32>
    %10 = arith.maximumf %7, %9 : vector<256x1xf32>
    %11 = arith.subf %7, %10 : vector<256x1xf32>
    %12 = math.exp %11 : vector<256x1xf32>
    %13 = vector.broadcast %10 : vector<256x1xf32> to vector<256x256xf32>
    %14 = arith.subf %6, %13 : vector<256x256xf32>
    %15 = math.exp %14 : vector<256x256xf32>
    %c0_8 = arith.constant 0 : index
    %c0_9 = arith.constant 0 : index
    %16 = vector.load %arg12[%c0_8, %c0_9] : memref<256x1xf32, #tpu.memory_space<vmem>>, vector<256x1xf32>
    %17 = arith.mulf %12, %16 : vector<256x1xf32>
    %cst_10 = arith.constant dense<0.000000e+00> : vector<256xf32>
    %18 = vector.multi_reduction <add>, %15, %cst_10 [1] : vector<256x256xf32> to vector<256xf32>
    %19 = vector.shape_cast %18 : vector<256xf32> to vector<256x1xf32>
    %20 = arith.addf %17, %19 : vector<256x1xf32>
    %c0_11 = arith.constant 0 : index
    %c0_12 = arith.constant 0 : index
    %21 = vector.load %arg12[%c0_11, %c0_12] : memref<256x1xf32, #tpu.memory_space<vmem>>, vector<256x1xf32>
    tpu.vector_store %arg12[%c0_11, %c0_12], %20 {strides = array<i32>} : memref<256x1xf32, #tpu.memory_space<vmem>>, vector<256x1xf32>,
    %c0_13 = arith.constant 0 : index
    %c0_14 = arith.constant 0 : index
    %22 = vector.load %arg13[%c0_13, %c0_14] : memref<256x128xf32, #tpu.memory_space<vmem>>, vector<256x128xf32>
    %23 = vector.broadcast %12 : vector<256x1xf32> to vector<256x128xf32>
    %24 = arith.mulf %23, %22 : vector<256x128xf32>
    %25 = arith.truncf %15 : vector<256x256xf32> to vector<256x256xbf16>
    %c0_15 = arith.constant 0 : index
    %c0_16 = arith.constant 0 : index
    %c0_17 = arith.constant 0 : index
    %26 = vector.load %arg6[%c0_15, %c0_16, %c0_17] : memref<1x256x128xbf16, #tpu.memory_space<vmem>>, vector<1x256x128xbf16>
    %27 = vector.shape_cast %26 : vector<1x256x128xbf16> to vector<256x128xbf16>
    %cst_18 = arith.constant dense<0.000000e+00> : vector<256x128xf32>
    %28 = tpu.matmul %25, %27, %cst_18 {dimension_numbers = #tpu.dot_dimension_numbers<[1], [0], [0], [1], [0, 0, 1, 1], [], []>} : vector<256x256xbf16>, vector<256x128xbf16>, vector<256x128xf32> -> vector<256x128xf32>
    %29 = arith.addf %24, %28 : vector<256x128xf32>
    %c0_19 = arith.constant 0 : index
    %c0_20 = arith.constant 0 : index
    %30 = vector.load %arg13[%c0_19, %c0_20] : memref<256x128xf32, #tpu.memory_space<vmem>>, vector<256x128xf32>
    tpu.vector_store %arg13[%c0_19, %c0_20], %29 {strides = array<i32>} : memref<256x128xf32, #tpu.memory_space<vmem>>, vector<256x128xf32>,
    %c0_21 = arith.constant 0 : index
    %c0_22 = arith.constant 0 : index
    %31 = vector.load %arg11[%c0_21, %c0_22] : memref<256x1xf32, #tpu.memory_space<vmem>>, vector<256x1xf32>
    tpu.vector_store %arg11[%c0_21, %c0_22], %10 {strides = array<i32>} : memref<256x1xf32, #tpu.memory_space<vmem>>, vector<256x1xf32>,
    %c0_i32_23 = arith.constant 0 : i32
    %32 = arith.cmpi eq, %arg2, %c0_i32_23 : i32
    %33 = arith.extui %32 : i1 to i32
    %c0_i32_24 = arith.constant 0 : i32
    %34 = arith.cmpi ne, %33, %c0_i32_24 : i32
    scf.if %34 {
      %c0_25 = arith.constant 0 : index
      %c0_26 = arith.constant 0 : index
      %35 = vector.load %arg12[%c0_25, %c0_26] : memref<256x1xf32, #tpu.memory_space<vmem>>, vector<256x1xf32>
      %36 = tpu.reciprocal %35 {approx = true} : vector<256x1xf32> -> vector<256x1xf32>
      %c0_27 = arith.constant 0 : index
      %c0_28 = arith.constant 0 : index
      %37 = vector.load %arg13[%c0_27, %c0_28] : memref<256x128xf32, #tpu.memory_space<vmem>>, vector<256x128xf32>
      %38 = vector.broadcast %36 : vector<256x1xf32> to vector<256x128xf32>
      %39 = arith.mulf %37, %38 : vector<256x128xf32>
      %c0_29 = arith.constant 0 : index
      %c0_30 = arith.constant 0 : index
      %40 = memref.load %arg3[%c0_29, %c0_30] : memref<1x1xf32, #tpu.memory_space<smem>>
      %41 = vector.broadcast %40 : f32 to vector<256x128xf32>
      %42 = arith.mulf %41, %39 : vector<256x128xf32>
      %c0_31 = arith.constant 0 : index
      %c0_32 = arith.constant 0 : index
      %c0_33 = arith.constant 0 : index
      %43 = vector.load %arg4[%c0_31, %c0_32, %c0_33] : memref<1x256x128xbf16, #tpu.memory_space<vmem>>, vector<1x256x128xbf16>
      %44 = vector.shape_cast %43 : vector<1x256x128xbf16> to vector<256x128xbf16>
      %45 = arith.extf %44 : vector<256x128xbf16> to vector<256x128xf32>
      %46 = arith.addf %42, %45 : vector<256x128xf32>
      %c0_34 = arith.constant 0 : index
      %c0_35 = arith.constant 0 : index
      %c0_36 = arith.constant 0 : index
      %47 = vector.load %arg9[%c0_34, %c0_35, %c0_36] : memref<1x256x128xf32, #tpu.memory_space<vmem>>, vector<1x256x128xf32>
      %48 = vector.shape_cast %47 : vector<1x256x128xf32> to vector<256x128xf32>
      %49 = vector.shape_cast %46 : vector<256x128xf32> to vector<1x256x128xf32>
      tpu.vector_store %arg9[%c0_34, %c0_35, %c0_36], %49 {strides = array<i32>} : memref<1x256x128xf32, #tpu.memory_space<vmem>>, vector<1x256x128xf32>,
    } else {
    }
    return
  }
  func.func @transform_0(%arg0: i32, %arg1: i32, %arg2: i32) -> (i32, i32) {
    %c0_i32 = arith.constant 0 : i32
    %c0_i32_0 = arith.constant 0 : i32
    %c0_i32_1 = arith.constant 0 : i32
    return %c0_i32, %c0_i32_0 : i32, i32
  }
  func.func @transform_1(%arg0: i32, %arg1: i32, %arg2: i32) -> (i32, i32, i32) {
    %c0_i32 = arith.constant 0 : i32
    %c0_i32_0 = arith.constant 0 : i32
    return %arg0, %arg1, %c0_i32 : i32, i32, i32
  }
  func.func @transform_2(%arg0: i32, %arg1: i32, %arg2: i32) -> (i32, i32, i32) {
    %c0_i32 = arith.constant 0 : i32
    %c0_i32_0 = arith.constant 0 : i32
    return %arg0, %arg2, %c0_i32 : i32, i32, i32
  }
  func.func @transform_3(%arg0: i32, %arg1: i32, %arg2: i32) -> (i32, i32, i32) {
    %c0_i32 = arith.constant 0 : i32
    %c0_i32_0 = arith.constant 0 : i32
    return %arg0, %arg2, %c0_i32 : i32, i32, i32
  }
  func.func @transform_4(%arg0: i32, %arg1: i32, %arg2: i32) -> (i32, i32) {
    %c0_i32 = arith.constant 0 : i32
    %c0_i32_0 = arith.constant 0 : i32
    %c0_i32_1 = arith.constant 0 : i32
    return %c0_i32, %c0_i32_0 : i32, i32
  }
  func.func @transform_5(%arg0: i32, %arg1: i32, %arg2: i32) -> (i32, i32) {
    %c0_i32 = arith.constant 0 : i32
    %c0_i32_0 = arith.constant 0 : i32
    %c0_i32_1 = arith.constant 0 : i32
    return %c0_i32, %c0_i32_0 : i32, i32
  }
  func.func @transform_6(%arg0: i32, %arg1: i32, %arg2: i32) -> (i32, i32, i32) {
    %c0_i32 = arith.constant 0 : i32
    %c0_i32_0 = arith.constant 0 : i32
    return %arg0, %arg1, %c0_i32 : i32, i32, i32
  }
}

</mosaic_0001>

<llo_original>
// kernel: tpu_custom_call.1
$region0: #{tpu_custom_call.1}
  #allocation0 [shape = 'u32[]', space=smem, size = 0x4, offset = 0x4, fixed_abs, tag = 'smem constant byte address 0x4 - core index']
  #allocation1 [shape = 'u32[144,128]{1,0:T(1,128)}', space=vmem, size = 0x12000, scoped, tag = 'internal scratch']
  #allocation2 [shape = 'bf16[256,128]{1,0:T(8,128)(2,1)}', space=vmem, size = 0x10000, scoped, tag = 'scratch operand']
  #allocation3 [shape = 'f32[256,1]{1,0:T(8,128)}', space=vmem, size = 0x20000, scoped, tag = 'scratch operand']
  #allocation4 [shape = 'f32[256,1]{1,0:T(8,128)}', space=vmem, size = 0x20000, scoped, tag = 'scratch operand']
  #allocation5 [shape = 'f32[256,128]{1,0:T(8,128)}', space=vmem, size = 0x20000, scoped, tag = 'scratch operand']
  #allocation6 [shape = 'f32[1,1]{1,0:T(1,128)S(6)}', space=smem, size = 0x200, scoped, tag = 'scoped memory for tpu_custom_call.1']
  %s0 = inlined_call_operand.<no memory space> [shape: f32[1,1], index: 0, kind: input, shape index: {}]
  %s1 = inlined_call_operand.hbm [shape: bf16[2,256,128], index: 1, kind: input, shape index: {}]
  %s2 = inlined_call_operand.hbm [shape: bf16[2,256,128], index: 2, kind: input, shape index: {}]
  %s3 = inlined_call_operand.hbm [shape: bf16[2,256,128], index: 3, kind: input, shape index: {}]
  %s4 = inlined_call_operand.hbm [shape: bf16[128,128], index: 4, kind: input, shape index: {}]
  %s5 = inlined_call_operand.vmem [shape: f32[1,128], index: 5, kind: input, shape index: {}]
  %s6 = inlined_call_operand.hbm [shape: f32[2,256,128], index: 6, kind: output, shape index: {}]
  %s7 = sld [smem:[#allocation0]]
  $region81: #{tpu_custom_call.1} parent=0
    _
  %s9 = ssub.s32 1, %s7
  %s10 = scalar_select 0, %s9, %s7
  %11 = sst [smem:[#allocation6]] %s0
  $region1: #{tpu_custom_call.1} parent=0
    #allocation7 [shape = 'u8[131072]{0}', space=vmem, size = 0x20000, scoped, tag = 'input window, operand 1']
    #allocation8 [shape = 's32[2]{0}', space=sflag, size = 0x8, scoped, tag = 'scoped memory for tpu_custom_call.1']
    #allocation9 [shape = 's32[2]{0}', space=sflag, size = 0x8, scoped, tag = 'scoped memory for tpu_custom_call.1']
    #allocation10 [shape = 'u8[131072]{0}', space=vmem, size = 0x20000, scoped, tag = 'input window, operand 2']
    #allocation11 [shape = 's32[2]{0}', space=sflag, size = 0x8, scoped, tag = 'scoped memory for tpu_custom_call.1']
    #allocation12 [shape = 'u8[131072]{0}', space=vmem, size = 0x20000, scoped, tag = 'input window, operand 3']
    #allocation13 [shape = 'u8[32768]{0}', space=vmem, size = 0x8000, scoped, tag = 'input window, operand 4, single buffered']
    #allocation14 [shape = 's32[1]{0}', space=sflag, size = 0x4, scoped, tag = 'scoped memory for tpu_custom_call.1']
    #allocation15 [shape = 'u8[262144]{0}', space=vmem, size = 0x40000, scoped, tag = 'output window, operand 0']
    %12 = vsyncpa [#allocation8], 0
    %s13 = scalar_lea.sflag [#allocation8], 1
    %14 = vsyncpa %s13, 0
    %15 = vsyncpa [#allocation11], 0
    %s16 = scalar_lea.sflag [#allocation11], 1
    %17 = vsyncpa %s16, 0
    %18 = vsyncpa [#allocation14], 0
    %19 = vsyncpa [#allocation9], 0
    %s20 = scalar_lea.sflag [#allocation9], 1
    %21 = vsyncpa %s20, 0
    loop: start=0, step=1, limit=4
    $region2: #{tpu_custom_call.1} parent=1 // loop_pre_header
      _
    $region3: #{tpu_custom_call.1} parent=1 // loop_header
      %s23 = sphi 0, %s27
      %p24 = scmp.ge.s32.totalorder %s23, 4
      %s30 = sphi 0, %s49
      %s31 = sphi 0, %s45
      %s32 = sphi 0, %s41
      %s33 = sphi 0, %s30
      %s34 = sphi 0, %s31
      %s35 = sphi 0, %s32
      %s36 = sphi 0, %s33
      %s37 = sphi 0, %s34
      %s38 = sphi 0, %s35
      %s50 = sphi 0, %s50
      %s52 = sphi 0, %s50
      %s53 = sphi 0, %s52
      %s67 = sphi 0, %s53
      %s75 = sphi 0, %s77
      %s78 = sphi 0, %s75
      %s79 = sphi 0, %s78
      %s95 = sphi 0, %s79
      %s103 = sphi 0, %s105
      %s106 = sphi 0, %s103
      %s107 = sphi 0, %s106
      %s123 = sphi 0, %s107
      %s131 = sphi 0, %s133
      %s134 = sphi 0, %s131
      %s135 = sphi 0, %s134
      %s151 = sphi 0, %s135
      %s155 = sphi 0, %s155
      %s157 = sphi 0, %s155
      %s158 = sphi 0, %s157
      %s172 = sphi 0, %s158
      %s176 = sphi 0, %s176
      %s178 = sphi 0, %s176
      %s179 = sphi 0, %s178
      %s193 = sphi 0, %s179
      %s201 = sphi 0, %s203
      %s204 = sphi 0, %s201
      %s205 = sphi 0, %s204
      %s221 = sphi 0, %s205
    $region4: #{tpu_custom_call.1} parent=1 // loop_header_branch
      %26 = sbr.rel (%p24) target = $region8
    $region5: #{tpu_custom_call.1} parent=1 // loop_body
      %s28 = ssub.s32 %s23, 1
      %s29 = ssub.s32 %s23, 2
      %s39 = sadd.s32 1, %s32
      %p40 = scmp.ge.s32.totalorder %s39, 1
      %s41 = scalar_select %p40, 0, %s39
      %s42 = sadd.s32 1, %s31
      %s43 = scalar_select %p40, %s42, %s31
      %p44 = scmp.ge.s32.totalorder %s43, 1
      %s45 = scalar_select %p44, 0, %s43
      %s46 = sadd.s32 1, %s30
      %s47 = scalar_select %p44, %s46, %s30
      %p48 = scmp.ge.s32.totalorder %s47, 2
      %s49 = scalar_select %p48, 0, %s47
      %s51 = sadd.s32 %s50, 1
      %p54 = scmp.eq.s32.totalorder %s23, 1
      %p55 = scmp.ne.s32.totalorder %s50, %s52
      %p56 = scmp.eq.s32.totalorder %s23, 0
      %p57 = por %p55, %p56
      %p58 = scmp.ne.s32.totalorder %s50, %s52
      %p59 = scmp.eq.s32.totalorder %s28, 1
      %p60 = por %p58, %p59
      %p61 = scmp.ne.s32.totalorder %s52, %s53
      %p62 = scmp.eq.s32.totalorder %s28, 0
      %p63 = por %p61, %p62
      %p64 = scmp.ne.s32.totalorder %s52, %s53
      %p65 = scmp.eq.s32.totalorder %s29, 1
      %p66 = por %p64, %p65
      %p68 = scmp.ne.s32.totalorder %s53, %s67
      %p69 = scmp.eq.s32.totalorder %s29, 0
      %p70 = por %p68, %p69
      %s71 = ssub.s32 %s30, %s49
      %s72 = ssub.s32 %s31, %s45
      %s73 = sor.u32 %s71, %s72
      %p74 = scmp.eq.s32.totalorder %s73, 0
      %s76 = sadd.s32 %s75, 1
      %s77 = scalar_select %p74, %s75, %s76
      %p80 = pneg %p74
      %p81 = scmp.eq.s32.totalorder %s23, 1
      %p82 = por %p80, %p81
      %p83 = scmp.ne.s32.totalorder %s75, %s78
      %p84 = scmp.eq.s32.totalorder %s23, 0
      %p85 = por %p83, %p84
      %p86 = scmp.ne.s32.totalorder %s75, %s78
      %p87 = scmp.eq.s32.totalorder %s28, 1
      %p88 = por %p86, %p87
      %p89 = scmp.ne.s32.totalorder %s78, %s79
      %p90 = scmp.eq.s32.totalorder %s28, 0
      %p91 = por %p89, %p90
      %p92 = scmp.ne.s32.totalorder %s78, %s79
      %p93 = scmp.eq.s32.totalorder %s29, 1
      %p94 = por %p92, %p93
      %p96 = scmp.ne.s32.totalorder %s79, %s95
      %p97 = scmp.eq.s32.totalorder %s29, 0
      %p98 = por %p96, %p97
      %s99 = ssub.s32 %s30, %s49
      %s100 = ssub.s32 %s32, %s41
      %s101 = sor.u32 %s99, %s100
      %p102 = scmp.eq.s32.totalorder %s101, 0
      %s104 = sadd.s32 %s103, 1
      %s105 = scalar_select %p102, %s103, %s104
      %p108 = pneg %p102
      %p109 = scmp.eq.s32.totalorder %s23, 1
      %p110 = por %p108, %p109
      %p111 = scmp.ne.s32.totalorder %s103, %s106
      %p112 = scmp.eq.s32.totalorder %s23, 0
      %p113 = por %p111, %p112
      %p114 = scmp.ne.s32.totalorder %s103, %s106
      %p115 = scmp.eq.s32.totalorder %s28, 1
      %p116 = por %p114, %p115
      %p117 = scmp.ne.s32.totalorder %s106, %s107
      %p118 = scmp.eq.s32.totalorder %s28, 0
      %p119 = por %p117, %p118
      %p120 = scmp.ne.s32.totalorder %s106, %s107
      %p121 = scmp.eq.s32.totalorder %s29, 1
      %p122 = por %p120, %p121
      %p124 = scmp.ne.s32.totalorder %s107, %s123
      %p125 = scmp.eq.s32.totalorder %s29, 0
      %p126 = por %p124, %p125
      %s127 = ssub.s32 %s30, %s49
      %s128 = ssub.s32 %s32, %s41
      %s129 = sor.u32 %s127, %s128
      %p130 = scmp.eq.s32.totalorder %s129, 0
      %s132 = sadd.s32 %s131, 1
      %s133 = scalar_select %p130, %s131, %s132
      %p136 = pneg %p130
      %p137 = scmp.eq.s32.totalorder %s23, 1
      %p138 = por %p136, %p137
      %p139 = scmp.ne.s32.totalorder %s131, %s134
      %p140 = scmp.eq.s32.totalorder %s23, 0
      %p141 = por %p139, %p140
      %p142 = scmp.ne.s32.totalorder %s131, %s134
      %p143 = scmp.eq.s32.totalorder %s28, 1
      %p144 = por %p142, %p143
      %p145 = scmp.ne.s32.totalorder %s134, %s135
      %p146 = scmp.eq.s32.totalorder %s28, 0
      %p147 = por %p145, %p146
      %p148 = scmp.ne.s32.totalorder %s134, %s135
      %p149 = scmp.eq.s32.totalorder %s29, 1
      %p150 = por %p148, %p149
      %p152 = scmp.ne.s32.totalorder %s135, %s151
      %p153 = scmp.eq.s32.totalorder %s29, 0
      %p154 = por %p152, %p153
      %s156 = sadd.s32 %s155, 1
      %p159 = scmp.eq.s32.totalorder %s23, 1
      %p160 = scmp.ne.s32.totalorder %s155, %s157
      %p161 = scmp.eq.s32.totalorder %s23, 0
      %p162 = por %p160, %p161
      %p163 = scmp.ne.s32.totalorder %s155, %s157
      %p164 = scmp.eq.s32.totalorder %s28, 1
      %p165 = por %p163, %p164
      %p166 = scmp.ne.s32.totalorder %s157, %s158
      %p167 = scmp.eq.s32.totalorder %s28, 0
      %p168 = por %p166, %p167
      %p169 = scmp.ne.s32.totalorder %s157, %s158
      %p170 = scmp.eq.s32.totalorder %s29, 1
      %p171 = por %p169, %p170
      %p173 = scmp.ne.s32.totalorder %s158, %s172
      %p174 = scmp.eq.s32.totalorder %s29, 0
      %p175 = por %p173, %p174
      %s177 = sadd.s32 %s176, 1
      %p180 = scmp.eq.s32.totalorder %s23, 1
      %p181 = scmp.ne.s32.totalorder %s176, %s178
      %p182 = scmp.eq.s32.totalorder %s23, 0
      %p183 = por %p181, %p182
      %p184 = scmp.ne.s32.totalorder %s176, %s178
      %p185 = scmp.eq.s32.totalorder %s28, 1
      %p186 = por %p184, %p185
      %p187 = scmp.ne.s32.totalorder %s178, %s179
      %p188 = scmp.eq.s32.totalorder %s28, 0
      %p189 = por %p187, %p188
      %p190 = scmp.ne.s32.totalorder %s178, %s179
      %p191 = scmp.eq.s32.totalorder %s29, 1
      %p192 = por %p190, %p191
      %p194 = scmp.ne.s32.totalorder %s179, %s193
      %p195 = scmp.eq.s32.totalorder %s29, 0
      %p196 = por %p194, %p195
      %s197 = ssub.s32 %s30, %s49
      %s198 = ssub.s32 %s31, %s45
      %s199 = sor.u32 %s197, %s198
      %p200 = scmp.eq.s32.totalorder %s199, 0
      %s202 = sadd.s32 %s201, 1
      %s203 = scalar_select %p200, %s201, %s202
      %p206 = pneg %p200
      %p207 = scmp.eq.s32.totalorder %s23, 1
      %p208 = por %p206, %p207
      %p209 = scmp.ne.s32.totalorder %s201, %s204
      %p210 = scmp.eq.s32.totalorder %s23, 0
      %p211 = por %p209, %p210
      %p212 = scmp.ne.s32.totalorder %s201, %s204
      %p213 = scmp.eq.s32.totalorder %s28, 1
      %p214 = por %p212, %p213
      %p215 = scmp.ne.s32.totalorder %s204, %s205
      %p216 = scmp.eq.s32.totalorder %s28, 0
      %p217 = por %p215, %p216
      %p218 = scmp.ne.s32.totalorder %s204, %s205
      %p219 = scmp.eq.s32.totalorder %s29, 1
      %p220 = por %p218, %p219
      %p222 = scmp.ne.s32.totalorder %s205, %s221
      %p223 = scmp.eq.s32.totalorder %s29, 0
      %p224 = por %p222, %p223
      %p225 = scmp.le.s32.totalorder 1, %s23
      %p226 = scmp.lt.s32.totalorder %s23, 3
      %p227 = pnand %p225, %p226
      %p228 = pneg %p227
      // Predicated region
      $region9: #{tpu_custom_call.1} parent=5 // pred_check
        _
      $region10: #{tpu_custom_call.1} parent=5 // pred_check_branch
        %230 = sbr.rel (%p227) target = $region12
      $region11: #{tpu_custom_call.1} parent=5 // pred_region
        %s231 = ssub.s32 %s23, 1
        // Predicated region
        $region13: #{tpu_custom_call.1} parent=11 // pred_check
          %p232 = pneg %p63
        $region14: #{tpu_custom_call.1} parent=11 // pred_check_branch
          %234 = sbr.rel (%p232) target = $region16
        $region15: #{tpu_custom_call.1} parent=11 // pred_region
          _
        $region16: #{tpu_custom_call.1} parent=11 // pred_fallthru
          _
        // Predicated region
        $region17: #{tpu_custom_call.1} parent=11 // pred_check
          %p235 = pneg %p168
        $region18: #{tpu_custom_call.1} parent=11 // pred_check_branch
          %237 = sbr.rel (%p235) target = $region20
        $region19: #{tpu_custom_call.1} parent=11 // pred_region
          %s239 = ssub.s32 1024, 1024
          %240 = vsyncadd [#allocation14], %s239
          %s241 = sshll.u32 [#allocation13], 4
          %s242 = int_to_ptr.vmem [resolvable:$true] %s241
          %247 = dma.hbm_to_vmem [thread:$0]  %s4, 1024, %s242, [#allocation14], 64, 64, 4
        $region20: #{tpu_custom_call.1} parent=11 // pred_fallthru
          _
        // Predicated region
        $region21: #{tpu_custom_call.1} parent=11 // pred_check
          %p248 = pneg %p189
        $region22: #{tpu_custom_call.1} parent=11 // pred_check_branch
          %250 = sbr.rel (%p248) target = $region24
        $region23: #{tpu_custom_call.1} parent=11 // pred_region
          _
        $region24: #{tpu_custom_call.1} parent=11 // pred_fallthru
          _
      $region12: #{tpu_custom_call.1} parent=5 // pred_fallthru
        _
      %p251 = scmp.lt.s32.totalorder %s23, 2
      // Predicated region
      $region25: #{tpu_custom_call.1} parent=5 // pred_check
        %p252 = pneg %p251
      $region26: #{tpu_custom_call.1} parent=5 // pred_check_branch
        %254 = sbr.rel (%p252) target = $region28
      $region27: #{tpu_custom_call.1} parent=5 // pred_region
        // Predicated region
        $region29: #{tpu_custom_call.1} parent=27 // pred_check
          %p255 = pneg %p85
        $region30: #{tpu_custom_call.1} parent=27 // pred_check_branch
          %257 = sbr.rel (%p255) target = $region32
        $region31: #{tpu_custom_call.1} parent=27 // pred_region
          %s258 = sand.u32 %s75, 1
          %s259 = scalar_lea.sflag [#allocation8], %s258
          %s260 = sand.u32 %s75, 1
          %s261 = smul.addr %s260, 128
          %s262 = scalar_lea.vmem [#allocation7], %s261
          %s263 = smul.u32 32, %s31
          %s265 = ssub.s32 2048, 2048
          %266 = vsyncadd %s259, %s265
          %s267 = smul.addr %s30, 32
          %s268 = sadd.s32 %s263, %s267
          %s269 = smul.addr %s268, 64
          %s270 = scalar_lea.hbm %s1, %s269
          %s271 = sshll.u32 %s262, 4
          %s272 = int_to_ptr.vmem [resolvable:$true] %s271
          %277 = dma.hbm_to_vmem [thread:$0]  %s270, 2048, %s272, %s259, 64, 64, 4
        $region32: #{tpu_custom_call.1} parent=27 // pred_fallthru
          _
        // Predicated region
        $region33: #{tpu_custom_call.1} parent=27 // pred_check
          %p278 = pneg %p113
        $region34: #{tpu_custom_call.1} parent=27 // pred_check_branch
          %280 = sbr.rel (%p278) target = $region36
        $region35: #{tpu_custom_call.1} parent=27 // pred_region
          %s281 = sand.u32 %s23, 1
          %s282 = scalar_lea.sflag [#allocation11], %s281
          %s283 = sand.u32 %s103, 1
          %s284 = smul.addr %s283, 128
          %s285 = scalar_lea.vmem [#allocation10], %s284
          %s286 = smul.u32 32, %s32
          %s288 = ssub.s32 2048, 2048
          %289 = vsyncadd %s282, %s288
          %s290 = smul.addr %s30, 32
          %s291 = sadd.s32 %s286, %s290
          %s292 = smul.addr %s291, 64
          %s293 = scalar_lea.hbm %s2, %s292
          %s294 = sshll.u32 %s285, 4
          %s295 = int_to_ptr.vmem [resolvable:$true] %s294
          %300 = dma.hbm_to_vmem [thread:$0]  %s293, 2048, %s295, %s282, 64, 64, 4
        $region36: #{tpu_custom_call.1} parent=27 // pred_fallthru
          _
        // Predicated region
        $region37: #{tpu_custom_call.1} parent=27 // pred_check
          %p301 = pneg %p141
        $region38: #{tpu_custom_call.1} parent=27 // pred_check_branch
          %303 = sbr.rel (%p301) target = $region40
        $region39: #{tpu_custom_call.1} parent=27 // pred_region
          %s304 = sand.u32 %s23, 1
          %s305 = scalar_lea.sflag [#allocation11], %s304
          %s306 = sand.u32 %s131, 1
          %s307 = smul.addr %s306, 128
          %s308 = scalar_lea.vmem [#allocation12], %s307
          %s309 = smul.u32 32, %s32
          %s311 = ssub.s32 2048, 2048
          %312 = vsyncadd %s305, %s311
          %s313 = smul.addr %s30, 32
          %s314 = sadd.s32 %s309, %s313
          %s315 = smul.addr %s314, 64
          %s316 = scalar_lea.hbm %s3, %s315
          %s317 = sshll.u32 %s308, 4
          %s318 = int_to_ptr.vmem [resolvable:$true] %s317
          %323 = dma.hbm_to_vmem [thread:$0]  %s316, 2048, %s318, %s305, 64, 64, 4
        $region40: #{tpu_custom_call.1} parent=27 // pred_fallthru
          _
      $region28: #{tpu_custom_call.1} parent=5 // pred_fallthru
        _
      %p324 = scmp.le.s32.totalorder 1, %s23
      %p325 = scmp.lt.s32.totalorder %s23, 3
      %p326 = pnand %p324, %p325
      %p327 = pneg %p326
      // Predicated region
      $region41: #{tpu_custom_call.1} parent=5 // pred_check
        _
      $region42: #{tpu_custom_call.1} parent=5 // pred_check_branch
        %329 = sbr.rel (%p326) target = $region44
      $region43: #{tpu_custom_call.1} parent=5 // pred_region
        %s330 = ssub.s32 %s23, 1
        %s331 = sand.u32 %s78, 1
        %s332 = scalar_lea.sflag [#allocation8], %s331
        %s333 = sand.u32 %s78, 1
        %s334 = smul.addr %s333, 128
        %s335 = scalar_lea.vmem [#allocation7], %s334
        // Predicated region
        $region45: #{tpu_custom_call.1} parent=43 // pred_check
          %p336 = pneg %p91
        $region46: #{tpu_custom_call.1} parent=43 // pred_check_branch
          %338 = sbr.rel (%p336) target = $region48
        $region47: #{tpu_custom_call.1} parent=43 // pred_region
          %339 = dma.done %s332, 2048
        $region48: #{tpu_custom_call.1} parent=43 // pred_fallthru
          _
        %s340 = sand.u32 %s28, 1
        %s341 = scalar_lea.sflag [#allocation11], %s340
        %s342 = sand.u32 %s106, 1
        %s343 = smul.addr %s342, 128
        %s344 = scalar_lea.vmem [#allocation10], %s343
        // Predicated region
        $region49: #{tpu_custom_call.1} parent=43 // pred_check
          %p345 = pneg %p119
        $region50: #{tpu_custom_call.1} parent=43 // pred_check_branch
          %347 = sbr.rel (%p345) target = $region52
        $region51: #{tpu_custom_call.1} parent=43 // pred_region
          %348 = dma.done %s341, 2048
        $region52: #{tpu_custom_call.1} parent=43 // pred_fallthru
          _
        %s349 = sand.u32 %s28, 1
        %s350 = scalar_lea.sflag [#allocation11], %s349
        %s351 = sand.u32 %s134, 1
        %s352 = smul.addr %s351, 128
        %s353 = scalar_lea.vmem [#allocation12], %s352
        // Predicated region
        $region53: #{tpu_custom_call.1} parent=43 // pred_check
          %p354 = pneg %p147
        $region54: #{tpu_custom_call.1} parent=43 // pred_check_branch
          %356 = sbr.rel (%p354) target = $region56
        $region55: #{tpu_custom_call.1} parent=43 // pred_region
          %357 = dma.done %s350, 2048
        $region56: #{tpu_custom_call.1} parent=43 // pred_fallthru
          _
        // Predicated region
        $region57: #{tpu_custom_call.1} parent=43 // pred_check
          %p358 = pneg %p168
        $region58: #{tpu_custom_call.1} parent=43 // pred_check_branch
          %360 = sbr.rel (%p358) target = $region60
        $region59: #{tpu_custom_call.1} parent=43 // pred_region
          %361 = dma.done [#allocation14], 1024
        $region60: #{tpu_custom_call.1} parent=43 // pred_fallthru
          _
        %p362 = pneg %p63
        %p363 = pneg %p60
        %s364 = sand.u32 %s78, 1
        %s365 = scalar_lea.sflag [#allocation8], %s364
        %s366 = sand.u32 %s78, 1
        %s367 = smul.addr %s366, 128
        %s368 = scalar_lea.vmem [#allocation7], %s367
        %p369 = pneg %p91
        %p370 = pneg %p88
        %s371 = sand.u32 %s28, 1
        %s372 = scalar_lea.sflag [#allocation11], %s371
        %s373 = sand.u32 %s106, 1
        %s374 = smul.addr %s373, 128
        %s375 = scalar_lea.vmem [#allocation10], %s374
        %p376 = pneg %p119
        %p377 = pneg %p116
        %s378 = sand.u32 %s28, 1
        %s379 = scalar_lea.sflag [#allocation11], %s378
        %s380 = sand.u32 %s134, 1
        %s381 = smul.addr %s380, 128
        %s382 = scalar_lea.vmem [#allocation12], %s381
        %p383 = pneg %p147
        %p384 = pneg %p144
        %p385 = pneg %p168
        %p386 = pneg %p165
        %p387 = pneg %p189
        %p388 = pneg %p186
        %p389 = pneg %p217
        %p390 = pneg %p214
        %s391 = sand.u32 %s204, 1
        %s392 = scalar_lea.sflag [#allocation9], %s391
        %s393 = sand.u32 %s204, 1
        %s394 = smul.addr %s393, 256
        %s395 = scalar_lea.vmem [#allocation15], %s394
        %s396 = smul.u32 32, %s34
        %s397 = smul.u32 32, %s35
        %s398 = smul.u32 32, %s35
        %s399 = smul.u32 32, %s34
        %p401 = scmp.eq.s32.totalorder %s35, 0
        // Predicated region
        $region61: #{tpu_custom_call.1} parent=43 // pred_check
          %p402 = pneg %p401
        $region62: #{tpu_custom_call.1} parent=43 // pred_check_branch
          %404 = sbr.rel (%p402) target = $region64
        $region63: #{tpu_custom_call.1} parent=43 // pred_region
          %vm405 = vcmask 7168
          %406 = vst.msk [vmem:[#allocation3] sm:$0xff] %vm405, -inf
          %407 = vst.msk [vmem:[#allocation3 + $0x8] sm:$0xff] %vm405, -inf
          %408 = vst.msk [vmem:[#allocation3 + $0x10] sm:$0xff] %vm405, -inf
          %409 = vst.msk [vmem:[#allocation3 + $0x18] sm:$0xff] %vm405, -inf
          %410 = vst.msk [vmem:[#allocation3 + $0x20] sm:$0xff] %vm405, -inf
          %411 = vst.msk [vmem:[#allocation3 + $0x28] sm:$0xff] %vm405, -inf
          %412 = vst.msk [vmem:[#allocation3 + $0x30] sm:$0xff] %vm405, -inf
          %413 = vst.msk [vmem:[#allocation3 + $0x38] sm:$0xff] %vm405, -inf
          %414 = vst.msk [vmem:[#allocation3 + $0x40] sm:$0xff] %vm405, -inf
          %415 = vst.msk [vmem:[#allocation3 + $0x48] sm:$0xff] %vm405, -inf
          %416 = vst.msk [vmem:[#allocation3 + $0x50] sm:$0xff] %vm405, -inf
          %417 = vst.msk [vmem:[#allocation3 + $0x58] sm:$0xff] %vm405, -inf
          %418 = vst.msk [vmem:[#allocation3 + $0x60] sm:$0xff] %vm405, -inf
          %419 = vst.msk [vmem:[#allocation3 + $0x68] sm:$0xff] %vm405, -inf
          %420 = vst.msk [vmem:[#allocation3 + $0x70] sm:$0xff] %vm405, -inf
          %421 = vst.msk [vmem:[#allocation3 + $0x78] sm:$0xff] %vm405, -inf
          %422 = vst.msk [vmem:[#allocation3 + $0x80] sm:$0xff] %vm405, -inf
          %423 = vst.msk [vmem:[#allocation3 + $0x88] sm:$0xff] %vm405, -inf
          %424 = vst.msk [vmem:[#allocation3 + $0x90] sm:$0xff] %vm405, -inf
          %425 = vst.msk [vmem:[#allocation3 + $0x98] sm:$0xff] %vm405, -inf
          %426 = vst.msk [vmem:[#allocation3 + $0xa0] sm:$0xff] %vm405, -inf
          %427 = vst.msk [vmem:[#allocation3 + $0xa8] sm:$0xff] %vm405, -inf
          %428 = vst.msk [vmem:[#allocation3 + $0xb0] sm:$0xff] %vm405, -inf
          %429 = vst.msk [vmem:[#allocation3 + $0xb8] sm:$0xff] %vm405, -inf
          %430 = vst.msk [vmem:[#allocation3 + $0xc0] sm:$0xff] %vm405, -inf
          %431 = vst.msk [vmem:[#allocation3 + $0xc8] sm:$0xff] %vm405, -inf
          %432 = vst.msk [vmem:[#allocation3 + $0xd0] sm:$0xff] %vm405, -inf
          %433 = vst.msk [vmem:[#allocation3 + $0xd8] sm:$0xff] %vm405, -inf
          %434 = vst.msk [vmem:[#allocation3 + $0xe0] sm:$0xff] %vm405, -inf
          %435 = vst.msk [vmem:[#allocation3 + $0xe8] sm:$0xff] %vm405, -inf
          %436 = vst.msk [vmem:[#allocation3 + $0xf0] sm:$0xff] %vm405, -inf
          %437 = vst.msk [vmem:[#allocation3 + $0xf8] sm:$0xff] %vm405, -inf
          %438 = vst.msk [vmem:[#allocation4] sm:$0xff] %vm405, 0.0
          %439 = vst.msk [vmem:[#allocation4 + $0x8] sm:$0xff] %vm405, 0.0
          %440 = vst.msk [vmem:[#allocation4 + $0x10] sm:$0xff] %vm405, 0.0
          %441 = vst.msk [vmem:[#allocation4 + $0x18] sm:$0xff] %vm405, 0.0
          %442 = vst.msk [vmem:[#allocation4 + $0x20] sm:$0xff] %vm405, 0.0
          %443 = vst.msk [vmem:[#allocation4 + $0x28] sm:$0xff] %vm405, 0.0
          %444 = vst.msk [vmem:[#allocation4 + $0x30] sm:$0xff] %vm405, 0.0
          %445 = vst.msk [vmem:[#allocation4 + $0x38] sm:$0xff] %vm405, 0.0
          %446 = vst.msk [vmem:[#allocation4 + $0x40] sm:$0xff] %vm405, 0.0
          %447 = vst.msk [vmem:[#allocation4 + $0x48] sm:$0xff] %vm405, 0.0
          %448 = vst.msk [vmem:[#allocation4 + $0x50] sm:$0xff] %vm405, 0.0
          %449 = vst.msk [vmem:[#allocation4 + $0x58] sm:$0xff] %vm405, 0.0
          %450 = vst.msk [vmem:[#allocation4 + $0x60] sm:$0xff] %vm405, 0.0
          %451 = vst.msk [vmem:[#allocation4 + $0x68] sm:$0xff] %vm405, 0.0
          %452 = vst.msk [vmem:[#allocation4 + $0x70] sm:$0xff] %vm405, 0.0
          %453 = vst.msk [vmem:[#allocation4 + $0x78] sm:$0xff] %vm405, 0.0
          %454 = vst.msk [vmem:[#allocation4 + $0x80] sm:$0xff] %vm405, 0.0
          %455 = vst.msk [vmem:[#allocation4 + $0x88] sm:$0xff] %vm405, 0.0
          %456 = vst.msk [vmem:[#allocation4 + $0x90] sm:$0xff] %vm405, 0.0
          %457 = vst.msk [vmem:[#allocation4 + $0x98] sm:$0xff] %vm405, 0.0
          %458 = vst.msk [vmem:[#allocation4 + $0xa0] sm:$0xff] %vm405, 0.0
          %459 = vst.msk [vmem:[#allocation4 + $0xa8] sm:$0xff] %vm405, 0.0
          %460 = vst.msk [vmem:[#allocation4 + $0xb0] sm:$0xff] %vm405, 0.0
          %461 = vst.msk [vmem:[#allocation4 + $0xb8] sm:$0xff] %vm405, 0.0
          %462 = vst.msk [vmem:[#allocation4 + $0xc0] sm:$0xff] %vm405, 0.0
          %463 = vst.msk [vmem:[#allocation4 + $0xc8] sm:$0xff] %vm405, 0.0
          %464 = vst.msk [vmem:[#allocation4 + $0xd0] sm:$0xff] %vm405, 0.0
          %465 = vst.msk [vmem:[#allocation4 + $0xd8] sm:$0xff] %vm405, 0.0
          %466 = vst.msk [vmem:[#allocation4 + $0xe0] sm:$0xff] %vm405, 0.0
          %467 = vst.msk [vmem:[#allocation4 + $0xe8] sm:$0xff] %vm405, 0.0
          %468 = vst.msk [vmem:[#allocation4 + $0xf0] sm:$0xff] %vm405, 0.0
          %469 = vst.msk [vmem:[#allocation4 + $0xf8] sm:$0xff] %vm405, 0.0
          %470 = vst [vmem:[#allocation5] sm:$0xff] 0.0
          %471 = vst [vmem:[#allocation5 + $0x8] sm:$0xff] 0.0
          %472 = vst [vmem:[#allocation5 + $0x10] sm:$0xff] 0.0
          %473 = vst [vmem:[#allocation5 + $0x18] sm:$0xff] 0.0
          %474 = vst [vmem:[#allocation5 + $0x20] sm:$0xff] 0.0
          %475 = vst [vmem:[#allocation5 + $0x28] sm:$0xff] 0.0
          %476 = vst [vmem:[#allocation5 + $0x30] sm:$0xff] 0.0
          %477 = vst [vmem:[#allocation5 + $0x38] sm:$0xff] 0.0
          %478 = vst [vmem:[#allocation5 + $0x40] sm:$0xff] 0.0
          %479 = vst [vmem:[#allocation5 + $0x48] sm:$0xff] 0.0
          %480 = vst [vmem:[#allocation5 + $0x50] sm:$0xff] 0.0
          %481 = vst [vmem:[#allocation5 + $0x58] sm:$0xff] 0.0
          %482 = vst [vmem:[#allocation5 + $0x60] sm:$0xff] 0.0
          %483 = vst [vmem:[#allocation5 + $0x68] sm:$0xff] 0.0
          %484 = vst [vmem:[#allocation5 + $0x70] sm:$0xff] 0.0
          %485 = vst [vmem:[#allocation5 + $0x78] sm:$0xff] 0.0
          %486 = vst [vmem:[#allocation5 + $0x80] sm:$0xff] 0.0
          %487 = vst [vmem:[#allocation5 + $0x88] sm:$0xff] 0.0
          %488 = vst [vmem:[#allocation5 + $0x90] sm:$0xff] 0.0
          %489 = vst [vmem:[#allocation5 + $0x98] sm:$0xff] 0.0
          %490 = vst [vmem:[#allocation5 + $0xa0] sm:$0xff] 0.0
          %491 = vst [vmem:[#allocation5 + $0xa8] sm:$0xff] 0.0
          %492 = vst [vmem:[#allocation5 + $0xb0] sm:$0xff] 0.0
          %493 = vst [vmem:[#allocation5 + $0xb8] sm:$0xff] 0.0
          %494 = vst [vmem:[#allocation5 + $0xc0] sm:$0xff] 0.0
          %495 = vst [vmem:[#allocation5 + $0xc8] sm:$0xff] 0.0
          %496 = vst [vmem:[#allocation5 + $0xd0] sm:$0xff] 0.0
          %497 = vst [vmem:[#allocation5 + $0xd8] sm:$0xff] 0.0
          %498 = vst [vmem:[#allocation5 + $0xe0] sm:$0xff] 0.0
          %499 = vst [vmem:[#allocation5 + $0xe8] sm:$0xff] 0.0
          %500 = vst [vmem:[#allocation5 + $0xf0] sm:$0xff] 0.0
          %501 = vst [vmem:[#allocation5 + $0xf8] sm:$0xff] 0.0
          %v502 = vld [vmem:[%s335] sm:$0xf]
          %v503 = vld [vmem:[%s335 + $0x4] sm:$0xf]
          %v504 = vld [vmem:[%s335 + $0x8] sm:$0xf]
          %v505 = vld [vmem:[%s335 + $0xc] sm:$0xf]
          %v506 = vld [vmem:[%s335 + $0x10] sm:$0xf]
          %v507 = vld [vmem:[%s335 + $0x14] sm:$0xf]
          %v508 = vld [vmem:[%s335 + $0x18] sm:$0xf]
          %v509 = vld [vmem:[%s335 + $0x1c] sm:$0xf]
          %v510 = vld [vmem:[%s335 + $0x20] sm:$0xf]
          %v511 = vld [vmem:[%s335 + $0x24] sm:$0xf]
          %v512 = vld [vmem:[%s335 + $0x28] sm:$0xf]
          %v513 = vld [vmem:[%s335 + $0x2c] sm:$0xf]
          %v514 = vld [vmem:[%s335 + $0x30] sm:$0xf]
          %v515 = vld [vmem:[%s335 + $0x34] sm:$0xf]
          %v516 = vld [vmem:[%s335 + $0x38] sm:$0xf]
          %v517 = vld [vmem:[%s335 + $0x3c] sm:$0xf]
          %v518 = vld [vmem:[%s335 + $0x40] sm:$0xf]
          %v519 = vld [vmem:[%s335 + $0x44] sm:$0xf]
          %v520 = vld [vmem:[%s335 + $0x48] sm:$0xf]
          %v521 = vld [vmem:[%s335 + $0x4c] sm:$0xf]
          %v522 = vld [vmem:[%s335 + $0x50] sm:$0xf]
          %v523 = vld [vmem:[%s335 + $0x54] sm:$0xf]
          %v524 = vld [vmem:[%s335 + $0x58] sm:$0xf]
          %v525 = vld [vmem:[%s335 + $0x5c] sm:$0xf]
          %v526 = vld [vmem:[%s335 + $0x60] sm:$0xf]
          %v527 = vld [vmem:[%s335 + $0x64] sm:$0xf]
          %v528 = vld [vmem:[%s335 + $0x68] sm:$0xf]
          %v529 = vld [vmem:[%s335 + $0x6c] sm:$0xf]
          %v530 = vld [vmem:[%s335 + $0x70] sm:$0xf]
          %v531 = vld [vmem:[%s335 + $0x74] sm:$0xf]
          %v532 = vld [vmem:[%s335 + $0x78] sm:$0xf]
          %v533 = vld [vmem:[%s335 + $0x7c] sm:$0xf]
          %v534 = vld [vmem:[#allocation13] sm:$0xf]
          %v535 = vld [vmem:[#allocation13 + $0x4] sm:$0xf]
          %v536 = vld [vmem:[#allocation13 + $0x8] sm:$0xf]
          %v537 = vld [vmem:[#allocation13 + $0xc] sm:$0xf]
          %v538 = vld [vmem:[#allocation13 + $0x10] sm:$0xf]
          %v539 = vld [vmem:[#allocation13 + $0x14] sm:$0xf]
          %v540 = vld [vmem:[#allocation13 + $0x18] sm:$0xf]
          %v541 = vld [vmem:[#allocation13 + $0x1c] sm:$0xf]
          %v542 = vld [vmem:[#allocation13 + $0x20] sm:$0xf]
          %v543 = vld [vmem:[#allocation13 + $0x24] sm:$0xf]
          %v544 = vld [vmem:[#allocation13 + $0x28] sm:$0xf]
          %v545 = vld [vmem:[#allocation13 + $0x2c] sm:$0xf]
          %v546 = vld [vmem:[#allocation13 + $0x30] sm:$0xf]
          %v547 = vld [vmem:[#allocation13 + $0x34] sm:$0xf]
          %v548 = vld [vmem:[#allocation13 + $0x38] sm:$0xf]
          %v549 = vld [vmem:[#allocation13 + $0x3c] sm:$0xf]
          %v550 = vld [vmem:[%s5] sm:$0x1]
          %v552 = vlaneseq
          %v553 = vshrl.u32 %v552, 7
          %v554 = vsub.s32 0, %v553
          %v555 = vrot.slane %v550, %v554
          %v589 = vunpack.c.l.b16 %v502
          %v590 = vunpack.c.l.b16 %v503
          %v591 = vunpack.c.l.b16 %v504
          %v592 = vunpack.c.l.b16 %v505
          %v593 = vunpack.c.l.b16 %v506
          %v594 = vunpack.c.l.b16 %v507
          %v595 = vunpack.c.l.b16 %v508
          %v596 = vunpack.c.l.b16 %v509
          %v597 = vunpack.c.l.b16 %v510
          %v598 = vunpack.c.l.b16 %v511
          %v599 = vunpack.c.l.b16 %v512
          %v600 = vunpack.c.l.b16 %v513
          %v601 = vunpack.c.l.b16 %v514
          %v602 = vunpack.c.l.b16 %v515
          %v603 = vunpack.c.l.b16 %v516
          %v604 = vunpack.c.l.b16 %v517
          %v605 = vunpack.c.l.b16 %v518
          %v606 = vunpack.c.l.b16 %v519
          %v607 = vunpack.c.l.b16 %v520
          %v608 = vunpack.c.l.b16 %v521
          %v609 = vunpack.c.l.b16 %v522
          %v610 = vunpack.c.l.b16 %v523
          %v611 = vunpack.c.l.b16 %v524
          %v612 = vunpack.c.l.b16 %v525
          %v613 = vunpack.c.l.b16 %v526
          %v614 = vunpack.c.l.b16 %v527
          %v615 = vunpack.c.l.b16 %v528
          %v616 = vunpack.c.l.b16 %v529
          %v617 = vunpack.c.l.b16 %v530
          %v618 = vunpack.c.l.b16 %v531
          %v619 = vunpack.c.l.b16 %v532
          %v620 = vunpack.c.l.b16 %v533
          %v621 = vpack.c.b16 %v590, %v589
          %v622 = vpack.c.b16 %v592, %v591
          %v623 = vpack.c.b16 %v594, %v593
          %v624 = vpack.c.b16 %v596, %v595
          %v625 = vpack.c.b16 %v598, %v597
          %v626 = vpack.c.b16 %v600, %v599
          %v627 = vpack.c.b16 %v602, %v601
          %v628 = vpack.c.b16 %v604, %v603
          %v629 = vpack.c.b16 %v606, %v605
          %v630 = vpack.c.b16 %v608, %v607
          %v631 = vpack.c.b16 %v610, %v609
          %v632 = vpack.c.b16 %v612, %v611
          %v633 = vpack.c.b16 %v614, %v613
          %v634 = vpack.c.b16 %v616, %v615
          %v635 = vpack.c.b16 %v618, %v617
          %v636 = vpack.c.b16 %v620, %v619
          %v669 = vunpack.c.l.b16 %v534
          %v670 = vunpack.c.l.b16 %v535
          %v671 = vunpack.c.l.b16 %v536
          %v672 = vunpack.c.l.b16 %v537
          %v673 = vunpack.c.l.b16 %v538
          %v674 = vunpack.c.l.b16 %v539
          %v675 = vunpack.c.l.b16 %v540
          %v676 = vunpack.c.l.b16 %v541
          %v677 = vunpack.c.l.b16 %v542
          %v678 = vunpack.c.l.b16 %v543
          %v679 = vunpack.c.l.b16 %v544
          %v680 = vunpack.c.l.b16 %v545
          %v681 = vunpack.c.l.b16 %v546
          %v682 = vunpack.c.l.b16 %v547
          %v683 = vunpack.c.l.b16 %v548
          %v684 = vunpack.c.l.b16 %v549
          %v685 = vpack.c.b16 %v670, %v669
          %v686 = vpack.c.b16 %v672, %v671
          %v687 = vpack.c.b16 %v674, %v673
          %v688 = vpack.c.b16 %v676, %v675
          %v689 = vpack.c.b16 %v678, %v677
          %v690 = vpack.c.b16 %v680, %v679
          %v691 = vpack.c.b16 %v682, %v681
          %v692 = vpack.c.b16 %v684, %v683
          %701 = vmatprep.subr.bf16.mxu0 0
          %702 = vmatpush1.bf16.msra.mxu0 %v692
          %703 = vmatprep.subr.bf16.mxu0 0
          %704 = vmatpush1.bf16.msra.mxu0 %v691
          %705 = vmatprep.subr.bf16.mxu0 0
          %706 = vmatpush1.bf16.msra.mxu0 %v690
          %707 = vmatprep.subr.bf16.mxu0 0
          %708 = vmatpush1.bf16.msra.mxu0 %v689
          %709 = vmatprep.subr.bf16.mxu0 0
          %710 = vmatpush1.bf16.msra.mxu0 %v688
          %711 = vmatprep.subr.bf16.mxu0 0
          %712 = vmatpush1.bf16.msra.mxu0 %v687
          %713 = vmatprep.subr.bf16.mxu0 0
          %714 = vmatpush1.bf16.msra.mxu0 %v686
          %715 = vmatprep.subr.bf16.mxu0 0
          %716 = vmatpush1.bf16.msra.mxu0 %v685
          %717 = vmatprep.subr.bf16.mxu0 0
          %718 = vmatpush2.bf16.msra.mxu0 0
          %719 = vmatprep.subr.bf16.mxu0 0
          %720 = vmatpush2.bf16.msra.mxu0 0
          %721 = vmatprep.subr.bf16.mxu0 0
          %722 = vmatpush2.bf16.msra.mxu0 0
          %723 = vmatprep.subr.bf16.mxu0 0
          %724 = vmatpush2.bf16.msra.mxu0 0
          %725 = vmatprep.subr.bf16.mxu0 0
          %726 = vmatpush2.bf16.msra.mxu0 0
          %727 = vmatprep.subr.bf16.mxu0 0
          %728 = vmatpush2.bf16.msra.mxu0 0
          %729 = vmatprep.subr.bf16.mxu0 0
          %730 = vmatpush2.bf16.msra.mxu0 0
          %731 = vmatprep.subr.bf16.mxu0 0
          %732 = vmatpush2.bf16.msra.mxu0 0
          %733 = vmatprep.mubr.bf16.mxu0 0
          %734 = vmatmul.mubr.bf16.gmra.mxu0 %v621
          %v735 = vpop.f32.mrf.mxu0
          %v736 = vadd.f32 %v555, %v735
          %v737 = vpop.f32.mrf.mxu0
          %v738 = vpop.f32.mrf.mxu0
          %v739 = vadd.f32 %v555, %v738
          %v740 = vpop.f32.mrf.mxu0
          %741 = vmatprep.mubr.bf16.mxu0 0
          %742 = vmatmul.mubr.bf16.gmra.mxu0 %v622
          %v743 = vpop.f32.mrf.mxu0
          %v744 = vadd.f32 %v555, %v743
          %v745 = vpop.f32.mrf.mxu0
          %v746 = vpop.f32.mrf.mxu0
          %v747 = vadd.f32 %v555, %v746
          %v748 = vpop.f32.mrf.mxu0
          %749 = vmatprep.mubr.bf16.mxu0 0
          %750 = vmatmul.mubr.bf16.gmra.mxu0 %v623
          %v751 = vpop.f32.mrf.mxu0
          %v752 = vadd.f32 %v555, %v751
          %v753 = vpop.f32.mrf.mxu0
          %v754 = vpop.f32.mrf.mxu0
          %v755 = vadd.f32 %v555, %v754
          %v756 = vpop.f32.mrf.mxu0
          %757 = vmatprep.mubr.bf16.mxu0 0
          %758 = vmatmul.mubr.bf16.gmra.mxu0 %v624
          %v759 = vpop.f32.mrf.mxu0
          %v760 = vadd.f32 %v555, %v759
          %v761 = vpop.f32.mrf.mxu0
          %v762 = vpop.f32.mrf.mxu0
          %v763 = vadd.f32 %v555, %v762
          %v764 = vpop.f32.mrf.mxu0
          %765 = vmatprep.mubr.bf16.mxu0 0
          %766 = vmatmul.mubr.bf16.gmra.mxu0 %v625
          %v767 = vpop.f32.mrf.mxu0
          %v768 = vadd.f32 %v555, %v767
          %v769 = vpop.f32.mrf.mxu0
          %v770 = vpop.f32.mrf.mxu0
          %v771 = vadd.f32 %v555, %v770
          %v772 = vpop.f32.mrf.mxu0
          %773 = vmatprep.mubr.bf16.mxu0 0
          %774 = vmatmul.mubr.bf16.gmra.mxu0 %v626
          %v775 = vpop.f32.mrf.mxu0
          %v776 = vadd.f32 %v555, %v775
          %v777 = vpop.f32.mrf.mxu0
          %v778 = vpop.f32.mrf.mxu0
          %v779 = vadd.f32 %v555, %v778
          %v780 = vpop.f32.mrf.mxu0
          %781 = vmatprep.mubr.bf16.mxu0 0
          %782 = vmatmul.mubr.bf16.gmra.mxu0 %v627
          %v783 = vpop.f32.mrf.mxu0
          %v784 = vadd.f32 %v555, %v783
          %v785 = vpop.f32.mrf.mxu0
          %v786 = vpop.f32.mrf.mxu0
          %v787 = vadd.f32 %v555, %v786
          %v788 = vpop.f32.mrf.mxu0
          %789 = vmatprep.mubr.bf16.mxu0 0
          %790 = vmatmul.mubr.bf16.gmra.mxu0 %v628
          %v791 = vpop.f32.mrf.mxu0
          %v792 = vadd.f32 %v555, %v791
          %v793 = vpop.f32.mrf.mxu0
          %v794 = vpop.f32.mrf.mxu0
          %v795 = vadd.f32 %v555, %v794
          %v796 = vpop.f32.mrf.mxu0
          %797 = vmatprep.mubr.bf16.mxu0 0
          %798 = vmatmul.mubr.bf16.gmra.mxu0 %v629
          %v799 = vpop.f32.mrf.mxu0
          %v800 = vadd.f32 %v555, %v799
          %v801 = vpop.f32.mrf.mxu0
          %v802 = vpop.f32.mrf.mxu0
          %v803 = vadd.f32 %v555, %v802
          %v804 = vpop.f32.mrf.mxu0
          %805 = vmatprep.mubr.bf16.mxu0 0
          %806 = vmatmul.mubr.bf16.gmra.mxu0 %v630
          %v807 = vpop.f32.mrf.mxu0
          %v808 = vadd.f32 %v555, %v807
          %v809 = vpop.f32.mrf.mxu0
          %v810 = vpop.f32.mrf.mxu0
          %v811 = vadd.f32 %v555, %v810
          %v812 = vpop.f32.mrf.mxu0
          %813 = vmatprep.mubr.bf16.mxu0 0
          %814 = vmatmul.mubr.bf16.gmra.mxu0 %v631
          %v815 = vpop.f32.mrf.mxu0
          %v816 = vadd.f32 %v555, %v815
          %v817 = vpop.f32.mrf.mxu0
          %v818 = vpop.f32.mrf.mxu0
          %v819 = vadd.f32 %v555, %v818
          %v820 = vpop.f32.mrf.mxu0
          %821 = vmatprep.mubr.bf16.mxu0 0
          %822 = vmatmul.mubr.bf16.gmra.mxu0 %v632
          %v823 = vpop.f32.mrf.mxu0
          %v824 = vadd.f32 %v555, %v823
          %v825 = vpop.f32.mrf.mxu0
          %v826 = vpop.f32.mrf.mxu0
          %v827 = vadd.f32 %v555, %v826
          %v828 = vpop.f32.mrf.mxu0
          %829 = vmatprep.mubr.bf16.mxu0 0
          %830 = vmatmul.mubr.bf16.gmra.mxu0 %v633
          %v831 = vpop.f32.mrf.mxu0
          %v832 = vadd.f32 %v555, %v831
          %v833 = vpop.f32.mrf.mxu0
          %v834 = vpop.f32.mrf.mxu0
          %v835 = vadd.f32 %v555, %v834
          %v836 = vpop.f32.mrf.mxu0
          %837 = vmatprep.mubr.bf16.mxu0 0
          %838 = vmatmul.mubr.bf16.gmra.mxu0 %v634
          %v839 = vpop.f32.mrf.mxu0
          %v840 = vadd.f32 %v555, %v839
          %v841 = vpop.f32.mrf.mxu0
          %v842 = vpop.f32.mrf.mxu0
          %v843 = vadd.f32 %v555, %v842
          %v844 = vpop.f32.mrf.mxu0
          %845 = vmatprep.mubr.bf16.mxu0 0
          %846 = vmatmul.mubr.bf16.gmra.mxu0 %v635
          %v847 = vpop.f32.mrf.mxu0
          %v848 = vadd.f32 %v555, %v847
          %v849 = vpop.f32.mrf.mxu0
          %v850 = vpop.f32.mrf.mxu0
          %v851 = vadd.f32 %v555, %v850
          %v852 = vpop.f32.mrf.mxu0
          %853 = vmatprep.mubr.bf16.mxu0 0
          %854 = vmatmul.mubr.bf16.gmra.mxu0 %v636
          %v855 = vpop.f32.mrf.mxu0
          %v856 = vadd.f32 %v555, %v855
          %v857 = vpop.f32.mrf.mxu0
          %v858 = vpop.f32.mrf.mxu0
          %v859 = vadd.f32 %v555, %v858
          %v860 = vpop.f32.mrf.mxu0
          %861 = vdwg.mxu0
          %v862 = vpack.c.bf16 %v739, %v736
          %v863 = vpack.c.bf16 %v747, %v744
          %v864 = vpack.c.bf16 %v755, %v752
          %v865 = vpack.c.bf16 %v763, %v760
          %v866 = vpack.c.bf16 %v771, %v768
          %v867 = vpack.c.bf16 %v779, %v776
          %v868 = vpack.c.bf16 %v787, %v784
          %v869 = vpack.c.bf16 %v795, %v792
          %v870 = vpack.c.bf16 %v803, %v800
          %v871 = vpack.c.bf16 %v811, %v808
          %v872 = vpack.c.bf16 %v819, %v816
          %v873 = vpack.c.bf16 %v827, %v824
          %v874 = vpack.c.bf16 %v835, %v832
          %v875 = vpack.c.bf16 %v843, %v840
          %v876 = vpack.c.bf16 %v851, %v848
          %v877 = vpack.c.bf16 %v859, %v856
          %v894 = vunpack.c.l.b16 %v862
          %v895 = vunpack.c.h.b16 %v862
          %v896 = vunpack.c.l.b16 %v863
          %v897 = vunpack.c.h.b16 %v863
          %v898 = vunpack.c.l.b16 %v864
          %v899 = vunpack.c.h.b16 %v864
          %v900 = vunpack.c.l.b16 %v865
          %v901 = vunpack.c.h.b16 %v865
          %v902 = vunpack.c.l.b16 %v866
          %v903 = vunpack.c.h.b16 %v866
          %v904 = vunpack.c.l.b16 %v867
          %v905 = vunpack.c.h.b16 %v867
          %v906 = vunpack.c.l.b16 %v868
          %v907 = vunpack.c.h.b16 %v868
          %v908 = vunpack.c.l.b16 %v869
          %v909 = vunpack.c.h.b16 %v869
          %v910 = vunpack.c.l.b16 %v870
          %v911 = vunpack.c.h.b16 %v870
          %v912 = vunpack.c.l.b16 %v871
          %v913 = vunpack.c.h.b16 %v871
          %v914 = vunpack.c.l.b16 %v872
          %v915 = vunpack.c.h.b16 %v872
          %v916 = vunpack.c.l.b16 %v873
          %v917 = vunpack.c.h.b16 %v873
          %v918 = vunpack.c.l.b16 %v874
          %v919 = vunpack.c.h.b16 %v874
          %v920 = vunpack.c.l.b16 %v875
          %v921 = vunpack.c.h.b16 %v875
          %v922 = vunpack.c.l.b16 %v876
          %v923 = vunpack.c.h.b16 %v876
          %v924 = vunpack.c.l.b16 %v877
          %v925 = vunpack.c.h.b16 %v877
          %v926 = vpack.c.b16 %v894, %v894
          %v927 = vpack.c.b16 %v895, %v895
          %v928 = vpack.c.b16 %v896, %v896
          %v929 = vpack.c.b16 %v897, %v897
          %v930 = vpack.c.b16 %v898, %v898
          %v931 = vpack.c.b16 %v899, %v899
          %v932 = vpack.c.b16 %v900, %v900
          %v933 = vpack.c.b16 %v901, %v901
          %v934 = vpack.c.b16 %v902, %v902
          %v935 = vpack.c.b16 %v903, %v903
          %v936 = vpack.c.b16 %v904, %v904
          %v937 = vpack.c.b16 %v905, %v905
          %v938 = vpack.c.b16 %v906, %v906
          %v939 = vpack.c.b16 %v907, %v907
          %v940 = vpack.c.b16 %v908, %v908
          %v941 = vpack.c.b16 %v909, %v909
          %v942 = vpack.c.b16 %v910, %v910
          %v943 = vpack.c.b16 %v911, %v911
          %v944 = vpack.c.b16 %v912, %v912
          %v945 = vpack.c.b16 %v913, %v913
          %v946 = vpack.c.b16 %v914, %v914
          %v947 = vpack.c.b16 %v915, %v915
          %v948 = vpack.c.b16 %v916, %v916
          %v949 = vpack.c.b16 %v917, %v917
          %v950 = vpack.c.b16 %v918, %v918
          %v951 = vpack.c.b16 %v919, %v919
          %v952 = vpack.c.b16 %v920, %v920
          %v953 = vpack.c.b16 %v921, %v921
          %v954 = vpack.c.b16 %v922, %v922
          %v955 = vpack.c.b16 %v923, %v923
          %v956 = vpack.c.b16 %v924, %v924
          %v957 = vpack.c.b16 %v925, %v925
          %990 = vst [vmem:[#allocation2] sm:$0xf] %v926
          %991 = vst [vmem:[#allocation2 + $0x4] sm:$0xf] %v927
          %992 = vst [vmem:[#allocation2 + $0x8] sm:$0xf] %v928
          %993 = vst [vmem:[#allocation2 + $0xc] sm:$0xf] %v929
          %994 = vst [vmem:[#allocation2 + $0x10] sm:$0xf] %v930
          %995 = vst [vmem:[#allocation2 + $0x14] sm:$0xf] %v931
          %996 = vst [vmem:[#allocation2 + $0x18] sm:$0xf] %v932
          %997 = vst [vmem:[#allocation2 + $0x1c] sm:$0xf] %v933
          %998 = vst [vmem:[#allocation2 + $0x20] sm:$0xf] %v934
          %999 = vst [vmem:[#allocation2 + $0x24] sm:$0xf] %v935
          %1000 = vst [vmem:[#allocation2 + $0x28] sm:$0xf] %v936
          %1001 = vst [vmem:[#allocation2 + $0x2c] sm:$0xf] %v937
          %1002 = vst [vmem:[#allocation2 + $0x30] sm:$0xf] %v938
          %1003 = vst [vmem:[#allocation2 + $0x34] sm:$0xf] %v939
          %1004 = vst [vmem:[#allocation2 + $0x38] sm:$0xf] %v940
          %1005 = vst [vmem:[#allocation2 + $0x3c] sm:$0xf] %v941
          %1006 = vst [vmem:[#allocation2 + $0x40] sm:$0xf] %v942
          %1007 = vst [vmem:[#allocation2 + $0x44] sm:$0xf] %v943
          %1008 = vst [vmem:[#allocation2 + $0x48] sm:$0xf] %v944
          %1009 = vst [vmem:[#allocation2 + $0x4c] sm:$0xf] %v945
          %1010 = vst [vmem:[#allocation2 + $0x50] sm:$0xf] %v946
          %1011 = vst [vmem:[#allocation2 + $0x54] sm:$0xf] %v947
          %1012 = vst [vmem:[#allocation2 + $0x58] sm:$0xf] %v948
          %1013 = vst [vmem:[#allocation2 + $0x5c] sm:$0xf] %v949
          %1014 = vst [vmem:[#allocation2 + $0x60] sm:$0xf] %v950
          %1015 = vst [vmem:[#allocation2 + $0x64] sm:$0xf] %v951
          %1016 = vst [vmem:[#allocation2 + $0x68] sm:$0xf] %v952
          %1017 = vst [vmem:[#allocation2 + $0x6c] sm:$0xf] %v953
          %1018 = vst [vmem:[#allocation2 + $0x70] sm:$0xf] %v954
          %1019 = vst [vmem:[#allocation2 + $0x74] sm:$0xf] %v955
          %1020 = vst [vmem:[#allocation2 + $0x78] sm:$0xf] %v956
          %1021 = vst [vmem:[#allocation2 + $0x7c] sm:$0xf] %v957
        $region64: #{tpu_custom_call.1} parent=43 // pred_fallthru
          _
        %v1022 = vld [vmem:[%s344] sm:$0xf]
        %v1023 = vld [vmem:[%s344 + $0x4] sm:$0xf]
        %v1024 = vld [vmem:[%s344 + $0x8] sm:$0xf]
        %v1025 = vld [vmem:[%s344 + $0xc] sm:$0xf]
        %v1026 = vld [vmem:[%s344 + $0x10] sm:$0xf]
        %v1027 = vld [vmem:[%s344 + $0x14] sm:$0xf]
        %v1028 = vld [vmem:[%s344 + $0x18] sm:$0xf]
        %v1029 = vld [vmem:[%s344 + $0x1c] sm:$0xf]
        %v1030 = vld [vmem:[%s344 + $0x20] sm:$0xf]
        %v1031 = vld [vmem:[%s344 + $0x24] sm:$0xf]
        %v1032 = vld [vmem:[%s344 + $0x28] sm:$0xf]
        %v1033 = vld [vmem:[%s344 + $0x2c] sm:$0xf]
        %v1034 = vld [vmem:[%s344 + $0x30] sm:$0xf]
        %v1035 = vld [vmem:[%s344 + $0x34] sm:$0xf]
        %v1036 = vld [vmem:[%s344 + $0x38] sm:$0xf]
        %v1037 = vld [vmem:[%s344 + $0x3c] sm:$0xf]
        %v1038 = vld [vmem:[%s344 + $0x40] sm:$0xf]
        %v1039 = vld [vmem:[%s344 + $0x44] sm:$0xf]
        %v1040 = vld [vmem:[%s344 + $0x48] sm:$0xf]
        %v1041 = vld [vmem:[%s344 + $0x4c] sm:$0xf]
        %v1042 = vld [vmem:[%s344 + $0x50] sm:$0xf]
        %v1043 = vld [vmem:[%s344 + $0x54] sm:$0xf]
        %v1044 = vld [vmem:[%s344 + $0x58] sm:$0xf]
        %v1045 = vld [vmem:[%s344 + $0x5c] sm:$0xf]
        %v1046 = vld [vmem:[%s344 + $0x60] sm:$0xf]
        %v1047 = vld [vmem:[%s344 + $0x64] sm:$0xf]
        %v1048 = vld [vmem:[%s344 + $0x68] sm:$0xf]
        %v1049 = vld [vmem:[%s344 + $0x6c] sm:$0xf]
        %v1050 = vld [vmem:[%s344 + $0x70] sm:$0xf]
        %v1051 = vld [vmem:[%s344 + $0x74] sm:$0xf]
        %v1052 = vld [vmem:[%s344 + $0x78] sm:$0xf]
        %v1053 = vld [vmem:[%s344 + $0x7c] sm:$0xf]
        %v1054 = vld [vmem:[#allocation2] sm:$0xf]
        %v1055 = vld [vmem:[#allocation2 + $0x4] sm:$0xf]
        %v1056 = vld [vmem:[#allocation2 + $0x8] sm:$0xf]
        %v1057 = vld [vmem:[#allocation2 + $0xc] sm:$0xf]
        %v1058 = vld [vmem:[#allocation2 + $0x10] sm:$0xf]
        %v1059 = vld [vmem:[#allocation2 + $0x14] sm:$0xf]
        %v1060 = vld [vmem:[#allocation2 + $0x18] sm:$0xf]
        %v1061 = vld [vmem:[#allocation2 + $0x1c] sm:$0xf]
        %v1062 = vld [vmem:[#allocation2 + $0x20] sm:$0xf]
        %v1063 = vld [vmem:[#allocation2 + $0x24] sm:$0xf]
        %v1064 = vld [vmem:[#allocation2 + $0x28] sm:$0xf]
        %v1065 = vld [vmem:[#allocation2 + $0x2c] sm:$0xf]
        %v1066 = vld [vmem:[#allocation2 + $0x30] sm:$0xf]
        %v1067 = vld [vmem:[#allocation2 + $0x34] sm:$0xf]
        %v1068 = vld [vmem:[#allocation2 + $0x38] sm:$0xf]
        %v1069 = vld [vmem:[#allocation2 + $0x3c] sm:$0xf]
        %v1070 = vld [vmem:[#allocation2 + $0x40] sm:$0xf]
        %v1071 = vld [vmem:[#allocation2 + $0x44] sm:$0xf]
        %v1072 = vld [vmem:[#allocation2 + $0x48] sm:$0xf]
        %v1073 = vld [vmem:[#allocation2 + $0x4c] sm:$0xf]
        %v1074 = vld [vmem:[#allocation2 + $0x50] sm:$0xf]
        %v1075 = vld [vmem:[#allocation2 + $0x54] sm:$0xf]
        %v1076 = vld [vmem:[#allocation2 + $0x58] sm:$0xf]
        %v1077 = vld [vmem:[#allocation2 + $0x5c] sm:$0xf]
        %v1078 = vld [vmem:[#allocation2 + $0x60] sm:$0xf]
        %v1079 = vld [vmem:[#allocation2 + $0x64] sm:$0xf]
        %v1080 = vld [vmem:[#allocation2 + $0x68] sm:$0xf]
        %v1081 = vld [vmem:[#allocation2 + $0x6c] sm:$0xf]
        %v1082 = vld [vmem:[#allocation2 + $0x70] sm:$0xf]
        %v1083 = vld [vmem:[#allocation2 + $0x74] sm:$0xf]
        %v1084 = vld [vmem:[#allocation2 + $0x78] sm:$0xf]
        %v1085 = vld [vmem:[#allocation2 + $0x7c] sm:$0xf]
        %v1118 = vunpack.c.l.b16 %v1054
        %v1119 = vunpack.c.l.b16 %v1055
        %v1120 = vunpack.c.l.b16 %v1056
        %v1121 = vunpack.c.l.b16 %v1057
        %v1122 = vunpack.c.l.b16 %v1058
        %v1123 = vunpack.c.l.b16 %v1059
        %v1124 = vunpack.c.l.b16 %v1060
        %v1125 = vunpack.c.l.b16 %v1061
        %v1126 = vunpack.c.l.b16 %v1062
        %v1127 = vunpack.c.l.b16 %v1063
        %v1128 = vunpack.c.l.b16 %v1064
        %v1129 = vunpack.c.l.b16 %v1065
        %v1130 = vunpack.c.l.b16 %v1066
        %v1131 = vunpack.c.l.b16 %v1067
        %v1132 = vunpack.c.l.b16 %v1068
        %v1133 = vunpack.c.l.b16 %v1069
        %v1134 = vunpack.c.l.b16 %v1070
        %v1135 = vunpack.c.l.b16 %v1071
        %v1136 = vunpack.c.l.b16 %v1072
        %v1137 = vunpack.c.l.b16 %v1073
        %v1138 = vunpack.c.l.b16 %v1074
        %v1139 = vunpack.c.l.b16 %v1075
        %v1140 = vunpack.c.l.b16 %v1076
        %v1141 = vunpack.c.l.b16 %v1077
        %v1142 = vunpack.c.l.b16 %v1078
        %v1143 = vunpack.c.l.b16 %v1079
        %v1144 = vunpack.c.l.b16 %v1080
        %v1145 = vunpack.c.l.b16 %v1081
        %v1146 = vunpack.c.l.b16 %v1082
        %v1147 = vunpack.c.l.b16 %v1083
        %v1148 = vunpack.c.l.b16 %v1084
        %v1149 = vunpack.c.l.b16 %v1085
        %v1150 = vpack.c.b16 %v1119, %v1118
        %v1151 = vpack.c.b16 %v1121, %v1120
        %v1152 = vpack.c.b16 %v1123, %v1122
        %v1153 = vpack.c.b16 %v1125, %v1124
        %v1154 = vpack.c.b16 %v1127, %v1126
        %v1155 = vpack.c.b16 %v1129, %v1128
        %v1156 = vpack.c.b16 %v1131, %v1130
        %v1157 = vpack.c.b16 %v1133, %v1132
        %v1158 = vpack.c.b16 %v1135, %v1134
        %v1159 = vpack.c.b16 %v1137, %v1136
        %v1160 = vpack.c.b16 %v1139, %v1138
        %v1161 = vpack.c.b16 %v1141, %v1140
        %v1162 = vpack.c.b16 %v1143, %v1142
        %v1163 = vpack.c.b16 %v1145, %v1144
        %v1164 = vpack.c.b16 %v1147, %v1146
        %v1165 = vpack.c.b16 %v1149, %v1148
        %v1214 = vunpack.c.l.b16 %v1022
        %v1215 = vunpack.c.l.b16 %v1023
        %v1216 = vunpack.c.l.b16 %v1024
        %v1217 = vunpack.c.l.b16 %v1025
        %v1218 = vunpack.c.l.b16 %v1026
        %v1219 = vunpack.c.l.b16 %v1027
        %v1220 = vunpack.c.l.b16 %v1028
        %v1221 = vunpack.c.l.b16 %v1029
        %v1222 = vunpack.c.l.b16 %v1030
        %v1223 = vunpack.c.l.b16 %v1031
        %v1224 = vunpack.c.l.b16 %v1032
        %v1225 = vunpack.c.l.b16 %v1033
        %v1226 = vunpack.c.l.b16 %v1034
        %v1227 = vunpack.c.l.b16 %v1035
        %v1228 = vunpack.c.l.b16 %v1036
        %v1229 = vunpack.c.l.b16 %v1037
        %v1230 = vunpack.c.l.b16 %v1038
        %v1231 = vunpack.c.l.b16 %v1039
        %v1232 = vunpack.c.l.b16 %v1040
        %v1233 = vunpack.c.l.b16 %v1041
        %v1234 = vunpack.c.l.b16 %v1042
        %v1235 = vunpack.c.l.b16 %v1043
        %v1236 = vunpack.c.l.b16 %v1044
        %v1237 = vunpack.c.l.b16 %v1045
        %v1238 = vunpack.c.l.b16 %v1046
        %v1239 = vunpack.c.l.b16 %v1047
        %v1240 = vunpack.c.l.b16 %v1048
        %v1241 = vunpack.c.l.b16 %v1049
        %v1242 = vunpack.c.l.b16 %v1050
        %v1243 = vunpack.c.l.b16 %v1051
        %v1244 = vunpack.c.l.b16 %v1052
        %v1245 = vunpack.c.l.b16 %v1053
        %v1246 = vpack.c.b16 %v1215, %v1214
        %v1247 = vpack.c.b16 %v1217, %v1216
        %v1248 = vpack.c.b16 %v1219, %v1218
        %v1249 = vpack.c.b16 %v1221, %v1220
        %v1250 = vpack.c.b16 %v1223, %v1222
        %v1251 = vpack.c.b16 %v1225, %v1224
        %v1252 = vpack.c.b16 %v1227, %v1226
        %v1253 = vpack.c.b16 %v1229, %v1228
        %v1254 = vpack.c.b16 %v1231, %v1230
        %v1255 = vpack.c.b16 %v1233, %v1232
        %v1256 = vpack.c.b16 %v1235, %v1234
        %v1257 = vpack.c.b16 %v1237, %v1236
        %v1258 = vpack.c.b16 %v1239, %v1238
        %v1259 = vpack.c.b16 %v1241, %v1240
        %v1260 = vpack.c.b16 %v1243, %v1242
        %v1261 = vpack.c.b16 %v1245, %v1244
        %1278 = vmatprep.subr.bf16.mxu0 0
        %1279 = vmatpush1.bf16.xpose.msra.mxu0 %v1253
        %1280 = vmatprep.subr.bf16.mxu0 0
        %1281 = vmatpush1.bf16.xpose.msra.mxu0 %v1252
        %1282 = vmatprep.subr.bf16.mxu0 0
        %1283 = vmatpush1.bf16.xpose.msra.mxu0 %v1251
        %1284 = vmatprep.subr.bf16.mxu0 0
        %1285 = vmatpush1.bf16.xpose.msra.mxu0 %v1250
        %1286 = vmatprep.subr.bf16.mxu0 0
        %1287 = vmatpush1.bf16.xpose.msra.mxu0 %v1249
        %1288 = vmatprep.subr.bf16.mxu0 0
        %1289 = vmatpush1.bf16.xpose.msra.mxu0 %v1248
        %1290 = vmatprep.subr.bf16.mxu0 0
        %1291 = vmatpush1.bf16.xpose.msra.mxu0 %v1247
        %1292 = vmatprep.subr.bf16.mxu0 0
        %1293 = vmatpush1.bf16.xpose.msra.mxu0 %v1246
        %1294 = vmatprep.subr.bf16.mxu0 0
        %1295 = vmatpush2.bf16.xpose.msra.mxu0 %v1261
        %1296 = vmatprep.subr.bf16.mxu0 0
        %1297 = vmatpush2.bf16.xpose.msra.mxu0 %v1260
        %1298 = vmatprep.subr.bf16.mxu0 0
        %1299 = vmatpush2.bf16.xpose.msra.mxu0 %v1259
        %1300 = vmatprep.subr.bf16.mxu0 0
        %1301 = vmatpush2.bf16.xpose.msra.mxu0 %v1258
        %1302 = vmatprep.subr.bf16.mxu0 0
        %1303 = vmatpush2.bf16.xpose.msra.mxu0 %v1257
        %1304 = vmatprep.subr.bf16.mxu0 0
        %1305 = vmatpush2.bf16.xpose.msra.mxu0 %v1256
        %1306 = vmatprep.subr.bf16.mxu0 0
        %1307 = vmatpush2.bf16.xpose.msra.mxu0 %v1255
        %1308 = vmatprep.subr.bf16.mxu0 0
        %1309 = vmatpush2.bf16.xpose.msra.mxu0 %v1254
        %1310 = vmatprep.mubr.bf16.mxu0 0
        %1311 = vmatmul.mubr.bf16.gmra.mxu0 %v1150
        %v1312 = vpop.f32.mrf.mxu0
        %v1313 = vadd.f32 0.0, %v1312
        %v1314 = vpop.f32.mrf.mxu0
        %v1315 = vadd.f32 0.0, %v1314
        %v1316 = vpop.f32.mrf.mxu0
        %v1317 = vadd.f32 0.0, %v1316
        %v1318 = vpop.f32.mrf.mxu0
        %v1319 = vadd.f32 0.0, %v1318
        %1320 = vmatprep.mubr.bf16.mxu0 0
        %1321 = vmatmul.mubr.bf16.gmra.mxu0 %v1151
        %v1322 = vpop.f32.mrf.mxu0
        %v1323 = vadd.f32 0.0, %v1322
        %v1324 = vpop.f32.mrf.mxu0
        %v1325 = vadd.f32 0.0, %v1324
        %v1326 = vpop.f32.mrf.mxu0
        %v1327 = vadd.f32 0.0, %v1326
        %v1328 = vpop.f32.mrf.mxu0
        %v1329 = vadd.f32 0.0, %v1328
        %1330 = vmatprep.mubr.bf16.mxu0 0
        %1331 = vmatmul.mubr.bf16.gmra.mxu0 %v1152
        %v1332 = vpop.f32.mrf.mxu0
        %v1333 = vadd.f32 0.0, %v1332
        %v1334 = vpop.f32.mrf.mxu0
        %v1335 = vadd.f32 0.0, %v1334
        %v1336 = vpop.f32.mrf.mxu0
        %v1337 = vadd.f32 0.0, %v1336
        %v1338 = vpop.f32.mrf.mxu0
        %v1339 = vadd.f32 0.0, %v1338
        %1340 = vmatprep.mubr.bf16.mxu0 0
        %1341 = vmatmul.mubr.bf16.gmra.mxu0 %v1153
        %v1342 = vpop.f32.mrf.mxu0
        %v1343 = vadd.f32 0.0, %v1342
        %v1344 = vpop.f32.mrf.mxu0
        %v1345 = vadd.f32 0.0, %v1344
        %v1346 = vpop.f32.mrf.mxu0
        %v1347 = vadd.f32 0.0, %v1346
        %v1348 = vpop.f32.mrf.mxu0
        %v1349 = vadd.f32 0.0, %v1348
        %1350 = vmatprep.mubr.bf16.mxu0 0
        %1351 = vmatmul.mubr.bf16.gmra.mxu0 %v1154
        %v1352 = vpop.f32.mrf.mxu0
        %v1353 = vadd.f32 0.0, %v1352
        %v1354 = vpop.f32.mrf.mxu0
        %v1355 = vadd.f32 0.0, %v1354
        %v1356 = vpop.f32.mrf.mxu0
        %v1357 = vadd.f32 0.0, %v1356
        %v1358 = vpop.f32.mrf.mxu0
        %v1359 = vadd.f32 0.0, %v1358
        %1360 = vmatprep.mubr.bf16.mxu0 0
        %1361 = vmatmul.mubr.bf16.gmra.mxu0 %v1155
        %v1362 = vpop.f32.mrf.mxu0
        %v1363 = vadd.f32 0.0, %v1362
        %v1364 = vpop.f32.mrf.mxu0
        %v1365 = vadd.f32 0.0, %v1364
        %v1366 = vpop.f32.mrf.mxu0
        %v1367 = vadd.f32 0.0, %v1366
        %v1368 = vpop.f32.mrf.mxu0
        %v1369 = vadd.f32 0.0, %v1368
        %1370 = vmatprep.mubr.bf16.mxu0 0
        %1371 = vmatmul.mubr.bf16.gmra.mxu0 %v1156
        %v1372 = vpop.f32.mrf.mxu0
        %v1373 = vadd.f32 0.0, %v1372
        %v1374 = vpop.f32.mrf.mxu0
        %v1375 = vadd.f32 0.0, %v1374
        %v1376 = vpop.f32.mrf.mxu0
        %v1377 = vadd.f32 0.0, %v1376
        %v1378 = vpop.f32.mrf.mxu0
        %v1379 = vadd.f32 0.0, %v1378
        %1380 = vmatprep.mubr.bf16.mxu0 0
        %1381 = vmatmul.mubr.bf16.gmra.mxu0 %v1157
        %v1382 = vpop.f32.mrf.mxu0
        %v1383 = vadd.f32 0.0, %v1382
        %v1384 = vpop.f32.mrf.mxu0
        %v1385 = vadd.f32 0.0, %v1384
        %v1386 = vpop.f32.mrf.mxu0
        %v1387 = vadd.f32 0.0, %v1386
        %v1388 = vpop.f32.mrf.mxu0
        %v1389 = vadd.f32 0.0, %v1388
        %1390 = vmatprep.mubr.bf16.mxu0 0
        %1391 = vmatmul.mubr.bf16.gmra.mxu0 %v1158
        %v1392 = vpop.f32.mrf.mxu0
        %v1393 = vadd.f32 0.0, %v1392
        %v1394 = vpop.f32.mrf.mxu0
        %v1395 = vadd.f32 0.0, %v1394
        %v1396 = vpop.f32.mrf.mxu0
        %v1397 = vadd.f32 0.0, %v1396
        %v1398 = vpop.f32.mrf.mxu0
        %v1399 = vadd.f32 0.0, %v1398
        %1400 = vmatprep.mubr.bf16.mxu0 0
        %1401 = vmatmul.mubr.bf16.gmra.mxu0 %v1159
        %v1402 = vpop.f32.mrf.mxu0
        %v1403 = vadd.f32 0.0, %v1402
        %v1404 = vpop.f32.mrf.mxu0
        %v1405 = vadd.f32 0.0, %v1404
        %v1406 = vpop.f32.mrf.mxu0
        %v1407 = vadd.f32 0.0, %v1406
        %v1408 = vpop.f32.mrf.mxu0
        %v1409 = vadd.f32 0.0, %v1408
        %1410 = vmatprep.mubr.bf16.mxu0 0
        %1411 = vmatmul.mubr.bf16.gmra.mxu0 %v1160
        %v1412 = vpop.f32.mrf.mxu0
        %v1413 = vadd.f32 0.0, %v1412
        %v1414 = vpop.f32.mrf.mxu0
        %v1415 = vadd.f32 0.0, %v1414
        %v1416 = vpop.f32.mrf.mxu0
        %v1417 = vadd.f32 0.0, %v1416
        %v1418 = vpop.f32.mrf.mxu0
        %v1419 = vadd.f32 0.0, %v1418
        %1420 = vmatprep.mubr.bf16.mxu0 0
        %1421 = vmatmul.mubr.bf16.gmra.mxu0 %v1161
        %v1422 = vpop.f32.mrf.mxu0
        %v1423 = vadd.f32 0.0, %v1422
        %v1424 = vpop.f32.mrf.mxu0
        %v1425 = vadd.f32 0.0, %v1424
        %v1426 = vpop.f32.mrf.mxu0
        %v1427 = vadd.f32 0.0, %v1426
        %v1428 = vpop.f32.mrf.mxu0
        %v1429 = vadd.f32 0.0, %v1428
        %1430 = vmatprep.mubr.bf16.mxu0 0
        %1431 = vmatmul.mubr.bf16.gmra.mxu0 %v1162
        %v1432 = vpop.f32.mrf.mxu0
        %v1433 = vadd.f32 0.0, %v1432
        %v1434 = vpop.f32.mrf.mxu0
        %v1435 = vadd.f32 0.0, %v1434
        %v1436 = vpop.f32.mrf.mxu0
        %v1437 = vadd.f32 0.0, %v1436
        %v1438 = vpop.f32.mrf.mxu0
        %v1439 = vadd.f32 0.0, %v1438
        %1440 = vmatprep.mubr.bf16.mxu0 0
        %1441 = vmatmul.mubr.bf16.gmra.mxu0 %v1163
        %v1442 = vpop.f32.mrf.mxu0
        %v1443 = vadd.f32 0.0, %v1442
        %v1444 = vpop.f32.mrf.mxu0
        %v1445 = vadd.f32 0.0, %v1444
        %v1446 = vpop.f32.mrf.mxu0
        %v1447 = vadd.f32 0.0, %v1446
        %v1448 = vpop.f32.mrf.mxu0
        %v1449 = vadd.f32 0.0, %v1448
        %1450 = vmatprep.mubr.bf16.mxu0 0
        %1451 = vmatmul.mubr.bf16.gmra.mxu0 %v1164
        %v1452 = vpop.f32.mrf.mxu0
        %v1453 = vadd.f32 0.0, %v1452
        %v1454 = vpop.f32.mrf.mxu0
        %v1455 = vadd.f32 0.0, %v1454
        %v1456 = vpop.f32.mrf.mxu0
        %v1457 = vadd.f32 0.0, %v1456
        %v1458 = vpop.f32.mrf.mxu0
        %v1459 = vadd.f32 0.0, %v1458
        %1460 = vmatprep.mubr.bf16.mxu0 0
        %1461 = vmatmul.mubr.bf16.gmra.mxu0 %v1165
        %v1462 = vpop.f32.mrf.mxu0
        %v1463 = vadd.f32 0.0, %v1462
        %v1464 = vpop.f32.mrf.mxu0
        %v1465 = vadd.f32 0.0, %v1464
        %v1466 = vpop.f32.mrf.mxu0
        %v1467 = vadd.f32 0.0, %v1466
        %v1468 = vpop.f32.mrf.mxu0
        %v1469 = vadd.f32 0.0, %v1468
        %1470 = vdwg.mxu0
        %v1471 = vld [vmem:[#allocation3] sm:$0xff]
        %v1472 = vld [vmem:[#allocation3 + $0x8] sm:$0xff]
        %v1473 = vld [vmem:[#allocation3 + $0x10] sm:$0xff]
        %v1474 = vld [vmem:[#allocation3 + $0x18] sm:$0xff]
        %v1475 = vld [vmem:[#allocation3 + $0x20] sm:$0xff]
        %v1476 = vld [vmem:[#allocation3 + $0x28] sm:$0xff]
        %v1477 = vld [vmem:[#allocation3 + $0x30] sm:$0xff]
        %v1478 = vld [vmem:[#allocation3 + $0x38] sm:$0xff]
        %v1479 = vld [vmem:[#allocation3 + $0x40] sm:$0xff]
        %v1480 = vld [vmem:[#allocation3 + $0x48] sm:$0xff]
        %v1481 = vld [vmem:[#allocation3 + $0x50] sm:$0xff]
        %v1482 = vld [vmem:[#allocation3 + $0x58] sm:$0xff]
        %v1483 = vld [vmem:[#allocation3 + $0x60] sm:$0xff]
        %v1484 = vld [vmem:[#allocation3 + $0x68] sm:$0xff]
        %v1485 = vld [vmem:[#allocation3 + $0x70] sm:$0xff]
        %v1486 = vld [vmem:[#allocation3 + $0x78] sm:$0xff]
        %v1487 = vld [vmem:[#allocation3 + $0x80] sm:$0xff]
        %v1488 = vld [vmem:[#allocation3 + $0x88] sm:$0xff]
        %v1489 = vld [vmem:[#allocation3 + $0x90] sm:$0xff]
        %v1490 = vld [vmem:[#allocation3 + $0x98] sm:$0xff]
        %v1491 = vld [vmem:[#allocation3 + $0xa0] sm:$0xff]
        %v1492 = vld [vmem:[#allocation3 + $0xa8] sm:$0xff]
        %v1493 = vld [vmem:[#allocation3 + $0xb0] sm:$0xff]
        %v1494 = vld [vmem:[#allocation3 + $0xb8] sm:$0xff]
        %v1495 = vld [vmem:[#allocation3 + $0xc0] sm:$0xff]
        %v1496 = vld [vmem:[#allocation3 + $0xc8] sm:$0xff]
        %v1497 = vld [vmem:[#allocation3 + $0xd0] sm:$0xff]
        %v1498 = vld [vmem:[#allocation3 + $0xd8] sm:$0xff]
        %v1499 = vld [vmem:[#allocation3 + $0xe0] sm:$0xff]
        %v1500 = vld [vmem:[#allocation3 + $0xe8] sm:$0xff]
        %v1501 = vld [vmem:[#allocation3 + $0xf0] sm:$0xff]
        %v1502 = vld [vmem:[#allocation3 + $0xf8] sm:$0xff]
        %v1503 = vmax.f32 %v1313, %v1315
        %1504 = vmax.xlane.f32.xlu0 %v1503
        %v1505 = vpop.xlane.xlu0 %1504
        %v1506 = vmax.f32 %v1317, %v1319
        %1507 = vmax.xlane.f32.xlu0 %v1506
        %v1508 = vpop.xlane.xlu0 %1507
        %v1509 = vmax.f32 %v1323, %v1325
        %1510 = vmax.xlane.f32.xlu0 %v1509
        %v1511 = vpop.xlane.xlu0 %1510
        %v1512 = vmax.f32 %v1327, %v1329
        %1513 = vmax.xlane.f32.xlu0 %v1512
        %v1514 = vpop.xlane.xlu0 %1513
        %v1515 = vmax.f32 %v1333, %v1335
        %1516 = vmax.xlane.f32.xlu0 %v1515
        %v1517 = vpop.xlane.xlu0 %1516
        %v1518 = vmax.f32 %v1337, %v1339
        %1519 = vmax.xlane.f32.xlu0 %v1518
        %v1520 = vpop.xlane.xlu0 %1519
        %v1521 = vmax.f32 %v1343, %v1345
        %1522 = vmax.xlane.f32.xlu0 %v1521
        %v1523 = vpop.xlane.xlu0 %1522
        %v1524 = vmax.f32 %v1347, %v1349
        %1525 = vmax.xlane.f32.xlu0 %v1524
        %v1526 = vpop.xlane.xlu0 %1525
        %v1527 = vmax.f32 %v1353, %v1355
        %1528 = vmax.xlane.f32.xlu0 %v1527
        %v1529 = vpop.xlane.xlu0 %1528
        %v1530 = vmax.f32 %v1357, %v1359
        %1531 = vmax.xlane.f32.xlu0 %v1530
        %v1532 = vpop.xlane.xlu0 %1531
        %v1533 = vmax.f32 %v1363, %v1365
        %1534 = vmax.xlane.f32.xlu0 %v1533
        %v1535 = vpop.xlane.xlu0 %1534
        %v1536 = vmax.f32 %v1367, %v1369
        %1537 = vmax.xlane.f32.xlu0 %v1536
        %v1538 = vpop.xlane.xlu0 %1537
        %v1539 = vmax.f32 %v1373, %v1375
        %1540 = vmax.xlane.f32.xlu0 %v1539
        %v1541 = vpop.xlane.xlu0 %1540
        %v1542 = vmax.f32 %v1377, %v1379
        %1543 = vmax.xlane.f32.xlu0 %v1542
        %v1544 = vpop.xlane.xlu0 %1543
        %v1545 = vmax.f32 %v1383, %v1385
        %1546 = vmax.xlane.f32.xlu0 %v1545
        %v1547 = vpop.xlane.xlu0 %1546
        %v1548 = vmax.f32 %v1387, %v1389
        %1549 = vmax.xlane.f32.xlu0 %v1548
        %v1550 = vpop.xlane.xlu0 %1549
        %v1551 = vmax.f32 %v1393, %v1395
        %1552 = vmax.xlane.f32.xlu0 %v1551
        %v1553 = vpop.xlane.xlu0 %1552
        %v1554 = vmax.f32 %v1397, %v1399
        %1555 = vmax.xlane.f32.xlu0 %v1554
        %v1556 = vpop.xlane.xlu0 %1555
        %v1557 = vmax.f32 %v1403, %v1405
        %1558 = vmax.xlane.f32.xlu0 %v1557
        %v1559 = vpop.xlane.xlu0 %1558
        %v1560 = vmax.f32 %v1407, %v1409
        %1561 = vmax.xlane.f32.xlu0 %v1560
        %v1562 = vpop.xlane.xlu0 %1561
        %v1563 = vmax.f32 %v1413, %v1415
        %1564 = vmax.xlane.f32.xlu0 %v1563
        %v1565 = vpop.xlane.xlu0 %1564
        %v1566 = vmax.f32 %v1417, %v1419
        %1567 = vmax.xlane.f32.xlu0 %v1566
        %v1568 = vpop.xlane.xlu0 %1567
        %v1569 = vmax.f32 %v1423, %v1425
        %1570 = vmax.xlane.f32.xlu0 %v1569
        %v1571 = vpop.xlane.xlu0 %1570
        %v1572 = vmax.f32 %v1427, %v1429
        %1573 = vmax.xlane.f32.xlu0 %v1572
        %v1574 = vpop.xlane.xlu0 %1573
        %v1575 = vmax.f32 %v1433, %v1435
        %1576 = vmax.xlane.f32.xlu0 %v1575
        %v1577 = vpop.xlane.xlu0 %1576
        %v1578 = vmax.f32 %v1437, %v1439
        %1579 = vmax.xlane.f32.xlu0 %v1578
        %v1580 = vpop.xlane.xlu0 %1579
        %v1581 = vmax.f32 %v1443, %v1445
        %1582 = vmax.xlane.f32.xlu0 %v1581
        %v1583 = vpop.xlane.xlu0 %1582
        %v1584 = vmax.f32 %v1447, %v1449
        %1585 = vmax.xlane.f32.xlu0 %v1584
        %v1586 = vpop.xlane.xlu0 %1585
        %v1587 = vmax.f32 %v1453, %v1455
        %1588 = vmax.xlane.f32.xlu0 %v1587
        %v1589 = vpop.xlane.xlu0 %1588
        %v1590 = vmax.f32 %v1457, %v1459
        %1591 = vmax.xlane.f32.xlu0 %v1590
        %v1592 = vpop.xlane.xlu0 %1591
        %v1593 = vmax.f32 %v1463, %v1465
        %1594 = vmax.xlane.f32.xlu0 %v1593
        %v1595 = vpop.xlane.xlu0 %1594
        %v1596 = vmax.f32 %v1467, %v1469
        %1597 = vmax.xlane.f32.xlu0 %v1596
        %v1598 = vpop.xlane.xlu0 %1597
        %v1599 = vmax.f32 %v1471, %v1505
        %v1600 = vmax.f32 %v1472, %v1508
        %v1601 = vmax.f32 %v1473, %v1511
        %v1602 = vmax.f32 %v1474, %v1514
        %v1603 = vmax.f32 %v1475, %v1517
        %v1604 = vmax.f32 %v1476, %v1520
        %v1605 = vmax.f32 %v1477, %v1523
        %v1606 = vmax.f32 %v1478, %v1526
        %v1607 = vmax.f32 %v1479, %v1529
        %v1608 = vmax.f32 %v1480, %v1532
        %v1609 = vmax.f32 %v1481, %v1535
        %v1610 = vmax.f32 %v1482, %v1538
        %v1611 = vmax.f32 %v1483, %v1541
        %v1612 = vmax.f32 %v1484, %v1544
        %v1613 = vmax.f32 %v1485, %v1547
        %v1614 = vmax.f32 %v1486, %v1550
        %v1615 = vmax.f32 %v1487, %v1553
        %v1616 = vmax.f32 %v1488, %v1556
        %v1617 = vmax.f32 %v1489, %v1559
        %v1618 = vmax.f32 %v1490, %v1562
        %v1619 = vmax.f32 %v1491, %v1565
        %v1620 = vmax.f32 %v1492, %v1568
        %v1621 = vmax.f32 %v1493, %v1571
        %v1622 = vmax.f32 %v1494, %v1574
        %v1623 = vmax.f32 %v1495, %v1577
        %v1624 = vmax.f32 %v1496, %v1580
        %v1625 = vmax.f32 %v1497, %v1583
        %v1626 = vmax.f32 %v1498, %v1586
        %v1627 = vmax.f32 %v1499, %v1589
        %v1628 = vmax.f32 %v1500, %v1592
        %v1629 = vmax.f32 %v1501, %v1595
        %v1630 = vmax.f32 %v1502, %v1598
        %v1631 = vsub.f32 %v1471, %v1599
        %v1632 = vsub.f32 %v1472, %v1600
        %v1633 = vsub.f32 %v1473, %v1601
        %v1634 = vsub.f32 %v1474, %v1602
        %v1635 = vsub.f32 %v1475, %v1603
        %v1636 = vsub.f32 %v1476, %v1604
        %v1637 = vsub.f32 %v1477, %v1605
        %v1638 = vsub.f32 %v1478, %v1606
        %v1639 = vsub.f32 %v1479, %v1607
        %v1640 = vsub.f32 %v1480, %v1608
        %v1641 = vsub.f32 %v1481, %v1609
        %v1642 = vsub.f32 %v1482, %v1610
        %v1643 = vsub.f32 %v1483, %v1611
        %v1644 = vsub.f32 %v1484, %v1612
        %v1645 = vsub.f32 %v1485, %v1613
        %v1646 = vsub.f32 %v1486, %v1614
        %v1647 = vsub.f32 %v1487, %v1615
        %v1648 = vsub.f32 %v1488, %v1616
        %v1649 = vsub.f32 %v1489, %v1617
        %v1650 = vsub.f32 %v1490, %v1618
        %v1651 = vsub.f32 %v1491, %v1619
        %v1652 = vsub.f32 %v1492, %v1620
        %v1653 = vsub.f32 %v1493, %v1621
        %v1654 = vsub.f32 %v1494, %v1622
        %v1655 = vsub.f32 %v1495, %v1623
        %v1656 = vsub.f32 %v1496, %v1624
        %v1657 = vsub.f32 %v1497, %v1625
        %v1658 = vsub.f32 %v1498, %v1626
        %v1659 = vsub.f32 %v1499, %v1627
        %v1660 = vsub.f32 %v1500, %v1628
        %v1661 = vsub.f32 %v1501, %v1629
        %v1662 = vsub.f32 %v1502, %v1630
        %v1663 = vmul.f32 %v1631, 1.442695
        %v1664 = vpow.pop %v1663
        %v1665 = vmul.f32 %v1632, 1.442695
        %v1666 = vpow.pop %v1665
        %v1667 = vmul.f32 %v1633, 1.442695
        %v1668 = vpow.pop %v1667
        %v1669 = vmul.f32 %v1634, 1.442695
        %v1670 = vpow.pop %v1669
        %v1671 = vmul.f32 %v1635, 1.442695
        %v1672 = vpow.pop %v1671
        %v1673 = vmul.f32 %v1636, 1.442695
        %v1674 = vpow.pop %v1673
        %v1675 = vmul.f32 %v1637, 1.442695
        %v1676 = vpow.pop %v1675
        %v1677 = vmul.f32 %v1638, 1.442695
        %v1678 = vpow.pop %v1677
        %v1679 = vmul.f32 %v1639, 1.442695
        %v1680 = vpow.pop %v1679
        %v1681 = vmul.f32 %v1640, 1.442695
        %v1682 = vpow.pop %v1681
        %v1683 = vmul.f32 %v1641, 1.442695
        %v1684 = vpow.pop %v1683
        %v1685 = vmul.f32 %v1642, 1.442695
        %v1686 = vpow.pop %v1685
        %v1687 = vmul.f32 %v1643, 1.442695
        %v1688 = vpow.pop %v1687
        %v1689 = vmul.f32 %v1644, 1.442695
        %v1690 = vpow.pop %v1689
        %v1691 = vmul.f32 %v1645, 1.442695
        %v1692 = vpow.pop %v1691
        %v1693 = vmul.f32 %v1646, 1.442695
        %v1694 = vpow.pop %v1693
        %v1695 = vmul.f32 %v1647, 1.442695
        %v1696 = vpow.pop %v1695
        %v1697 = vmul.f32 %v1648, 1.442695
        %v1698 = vpow.pop %v1697
        %v1699 = vmul.f32 %v1649, 1.442695
        %v1700 = vpow.pop %v1699
        %v1701 = vmul.f32 %v1650, 1.442695
        %v1702 = vpow.pop %v1701
        %v1703 = vmul.f32 %v1651, 1.442695
        %v1704 = vpow.pop %v1703
        %v1705 = vmul.f32 %v1652, 1.442695
        %v1706 = vpow.pop %v1705
        %v1707 = vmul.f32 %v1653, 1.442695
        %v1708 = vpow.pop %v1707
        %v1709 = vmul.f32 %v1654, 1.442695
        %v1710 = vpow.pop %v1709
        %v1711 = vmul.f32 %v1655, 1.442695
        %v1712 = vpow.pop %v1711
        %v1713 = vmul.f32 %v1656, 1.442695
        %v1714 = vpow.pop %v1713
        %v1715 = vmul.f32 %v1657, 1.442695
        %v1716 = vpow.pop %v1715
        %v1717 = vmul.f32 %v1658, 1.442695
        %v1718 = vpow.pop %v1717
        %v1719 = vmul.f32 %v1659, 1.442695
        %v1720 = vpow.pop %v1719
        %v1721 = vmul.f32 %v1660, 1.442695
        %v1722 = vpow.pop %v1721
        %v1723 = vmul.f32 %v1661, 1.442695
        %v1724 = vpow.pop %v1723
        %v1725 = vmul.f32 %v1662, 1.442695
        %v1726 = vpow.pop %v1725
        %1728 = vset.pattern.permute.xlu0 0
        %1729 = vperm.xlu0 %1728, %v1599
        %v1730 = vpop.permute.xlu0 %1729
        %1733 = vset.pattern.permute.xlu0 0
        %1734 = vperm.xlu0 %1733, %v1600
        %v1735 = vpop.permute.xlu0 %1734
        %1738 = vset.pattern.permute.xlu0 0
        %1739 = vperm.xlu0 %1738, %v1601
        %v1740 = vpop.permute.xlu0 %1739
        %1743 = vset.pattern.permute.xlu0 0
        %1744 = vperm.xlu0 %1743, %v1602
        %v1745 = vpop.permute.xlu0 %1744
        %1748 = vset.pattern.permute.xlu0 0
        %1749 = vperm.xlu0 %1748, %v1603
        %v1750 = vpop.permute.xlu0 %1749
        %1753 = vset.pattern.permute.xlu0 0
        %1754 = vperm.xlu0 %1753, %v1604
        %v1755 = vpop.permute.xlu0 %1754
        %1758 = vset.pattern.permute.xlu0 0
        %1759 = vperm.xlu0 %1758, %v1605
        %v1760 = vpop.permute.xlu0 %1759
        %1763 = vset.pattern.permute.xlu0 0
        %1764 = vperm.xlu0 %1763, %v1606
        %v1765 = vpop.permute.xlu0 %1764
        %1768 = vset.pattern.permute.xlu0 0
        %1769 = vperm.xlu0 %1768, %v1607
        %v1770 = vpop.permute.xlu0 %1769
        %1773 = vset.pattern.permute.xlu0 0
        %1774 = vperm.xlu0 %1773, %v1608
        %v1775 = vpop.permute.xlu0 %1774
        %1778 = vset.pattern.permute.xlu0 0
        %1779 = vperm.xlu0 %1778, %v1609
        %v1780 = vpop.permute.xlu0 %1779
        %1783 = vset.pattern.permute.xlu0 0
        %1784 = vperm.xlu0 %1783, %v1610
        %v1785 = vpop.permute.xlu0 %1784
        %1788 = vset.pattern.permute.xlu0 0
        %1789 = vperm.xlu0 %1788, %v1611
        %v1790 = vpop.permute.xlu0 %1789
        %1793 = vset.pattern.permute.xlu0 0
        %1794 = vperm.xlu0 %1793, %v1612
        %v1795 = vpop.permute.xlu0 %1794
        %1798 = vset.pattern.permute.xlu0 0
        %1799 = vperm.xlu0 %1798, %v1613
        %v1800 = vpop.permute.xlu0 %1799
        %1803 = vset.pattern.permute.xlu0 0
        %1804 = vperm.xlu0 %1803, %v1614
        %v1805 = vpop.permute.xlu0 %1804
        %1808 = vset.pattern.permute.xlu0 0
        %1809 = vperm.xlu0 %1808, %v1615
        %v1810 = vpop.permute.xlu0 %1809
        %1813 = vset.pattern.permute.xlu0 0
        %1814 = vperm.xlu0 %1813, %v1616
        %v1815 = vpop.permute.xlu0 %1814
        %1818 = vset.pattern.permute.xlu0 0
        %1819 = vperm.xlu0 %1818, %v1617
        %v1820 = vpop.permute.xlu0 %1819
        %1823 = vset.pattern.permute.xlu0 0
        %1824 = vperm.xlu0 %1823, %v1618
        %v1825 = vpop.permute.xlu0 %1824
        %1828 = vset.pattern.permute.xlu0 0
        %1829 = vperm.xlu0 %1828, %v1619
        %v1830 = vpop.permute.xlu0 %1829
        %1833 = vset.pattern.permute.xlu0 0
        %1834 = vperm.xlu0 %1833, %v1620
        %v1835 = vpop.permute.xlu0 %1834
        %1838 = vset.pattern.permute.xlu0 0
        %1839 = vperm.xlu0 %1838, %v1621
        %v1840 = vpop.permute.xlu0 %1839
        %1843 = vset.pattern.permute.xlu0 0
        %1844 = vperm.xlu0 %1843, %v1622
        %v1845 = vpop.permute.xlu0 %1844
        %1848 = vset.pattern.permute.xlu0 0
        %1849 = vperm.xlu0 %1848, %v1623
        %v1850 = vpop.permute.xlu0 %1849
        %1853 = vset.pattern.permute.xlu0 0
        %1854 = vperm.xlu0 %1853, %v1624
        %v1855 = vpop.permute.xlu0 %1854
        %1858 = vset.pattern.permute.xlu0 0
        %1859 = vperm.xlu0 %1858, %v1625
        %v1860 = vpop.permute.xlu0 %1859
        %1863 = vset.pattern.permute.xlu0 0
        %1864 = vperm.xlu0 %1863, %v1626
        %v1865 = vpop.permute.xlu0 %1864
        %1868 = vset.pattern.permute.xlu0 0
        %1869 = vperm.xlu0 %1868, %v1627
        %v1870 = vpop.permute.xlu0 %1869
        %1873 = vset.pattern.permute.xlu0 0
        %1874 = vperm.xlu0 %1873, %v1628
        %v1875 = vpop.permute.xlu0 %1874
        %1878 = vset.pattern.permute.xlu0 0
        %1879 = vperm.xlu0 %1878, %v1629
        %v1880 = vpop.permute.xlu0 %1879
        %1883 = vset.pattern.permute.xlu0 0
        %1884 = vperm.xlu0 %1883, %v1630
        %v1885 = vpop.permute.xlu0 %1884
        %v1887 = vsub.f32 %v1313, %v1730
        %v1888 = vsub.f32 %v1315, %v1730
        %v1889 = vsub.f32 %v1317, %v1735
        %v1890 = vsub.f32 %v1319, %v1735
        %v1891 = vsub.f32 %v1323, %v1740
        %v1892 = vsub.f32 %v1325, %v1740
        %v1893 = vsub.f32 %v1327, %v1745
        %v1894 = vsub.f32 %v1329, %v1745
        %v1895 = vsub.f32 %v1333, %v1750
        %v1896 = vsub.f32 %v1335, %v1750
        %v1897 = vsub.f32 %v1337, %v1755
        %v1898 = vsub.f32 %v1339, %v1755
        %v1899 = vsub.f32 %v1343, %v1760
        %v1900 = vsub.f32 %v1345, %v1760
        %v1901 = vsub.f32 %v1347, %v1765
        %v1902 = vsub.f32 %v1349, %v1765
        %v1903 = vsub.f32 %v1353, %v1770
        %v1904 = vsub.f32 %v1355, %v1770
        %v1905 = vsub.f32 %v1357, %v1775
        %v1906 = vsub.f32 %v1359, %v1775
        %v1907 = vsub.f32 %v1363, %v1780
        %v1908 = vsub.f32 %v1365, %v1780
        %v1909 = vsub.f32 %v1367, %v1785
        %v1910 = vsub.f32 %v1369, %v1785
        %v1911 = vsub.f32 %v1373, %v1790
        %v1912 = vsub.f32 %v1375, %v1790
        %v1913 = vsub.f32 %v1377, %v1795
        %v1914 = vsub.f32 %v1379, %v1795
        %v1915 = vsub.f32 %v1383, %v1800
        %v1916 = vsub.f32 %v1385, %v1800
        %v1917 = vsub.f32 %v1387, %v1805
        %v1918 = vsub.f32 %v1389, %v1805
        %v1919 = vsub.f32 %v1393, %v1810
        %v1920 = vsub.f32 %v1395, %v1810
        %v1921 = vsub.f32 %v1397, %v1815
        %v1922 = vsub.f32 %v1399, %v1815
        %v1923 = vsub.f32 %v1403, %v1820
        %v1924 = vsub.f32 %v1405, %v1820
        %v1925 = vsub.f32 %v1407, %v1825
        %v1926 = vsub.f32 %v1409, %v1825
        %v1927 = vsub.f32 %v1413, %v1830
        %v1928 = vsub.f32 %v1415, %v1830
        %v1929 = vsub.f32 %v1417, %v1835
        %v1930 = vsub.f32 %v1419, %v1835
        %v1931 = vsub.f32 %v1423, %v1840
        %v1932 = vsub.f32 %v1425, %v1840
        %v1933 = vsub.f32 %v1427, %v1845
        %v1934 = vsub.f32 %v1429, %v1845
        %v1935 = vsub.f32 %v1433, %v1850
        %v1936 = vsub.f32 %v1435, %v1850
        %v1937 = vsub.f32 %v1437, %v1855
        %v1938 = vsub.f32 %v1439, %v1855
        %v1939 = vsub.f32 %v1443, %v1860
        %v1940 = vsub.f32 %v1445, %v1860
        %v1941 = vsub.f32 %v1447, %v1865
        %v1942 = vsub.f32 %v1449, %v1865
        %v1943 = vsub.f32 %v1453, %v1870
        %v1944 = vsub.f32 %v1455, %v1870
        %v1945 = vsub.f32 %v1457, %v1875
        %v1946 = vsub.f32 %v1459, %v1875
        %v1947 = vsub.f32 %v1463, %v1880
        %v1948 = vsub.f32 %v1465, %v1880
        %v1949 = vsub.f32 %v1467, %v1885
        %v1950 = vsub.f32 %v1469, %v1885
        %v1951 = vmul.f32 %v1887, 1.442695
        %v1952 = vpow.pop %v1951
        %v1953 = vmul.f32 %v1888, 1.442695
        %v1954 = vpow.pop %v1953
        %v1955 = vmul.f32 %v1889, 1.442695
        %v1956 = vpow.pop %v1955
        %v1957 = vmul.f32 %v1890, 1.442695
        %v1958 = vpow.pop %v1957
        %v1959 = vmul.f32 %v1891, 1.442695
        %v1960 = vpow.pop %v1959
        %v1961 = vmul.f32 %v1892, 1.442695
        %v1962 = vpow.pop %v1961
        %v1963 = vmul.f32 %v1893, 1.442695
        %v1964 = vpow.pop %v1963
        %v1965 = vmul.f32 %v1894, 1.442695
        %v1966 = vpow.pop %v1965
        %v1967 = vmul.f32 %v1895, 1.442695
        %v1968 = vpow.pop %v1967
        %v1969 = vmul.f32 %v1896, 1.442695
        %v1970 = vpow.pop %v1969
        %v1971 = vmul.f32 %v1897, 1.442695
        %v1972 = vpow.pop %v1971
        %v1973 = vmul.f32 %v1898, 1.442695
        %v1974 = vpow.pop %v1973
        %v1975 = vmul.f32 %v1899, 1.442695
        %v1976 = vpow.pop %v1975
        %v1977 = vmul.f32 %v1900, 1.442695
        %v1978 = vpow.pop %v1977
        %v1979 = vmul.f32 %v1901, 1.442695
        %v1980 = vpow.pop %v1979
        %v1981 = vmul.f32 %v1902, 1.442695
        %v1982 = vpow.pop %v1981
        %v1983 = vmul.f32 %v1903, 1.442695
        %v1984 = vpow.pop %v1983
        %v1985 = vmul.f32 %v1904, 1.442695
        %v1986 = vpow.pop %v1985
        %v1987 = vmul.f32 %v1905, 1.442695
        %v1988 = vpow.pop %v1987
        %v1989 = vmul.f32 %v1906, 1.442695
        %v1990 = vpow.pop %v1989
        %v1991 = vmul.f32 %v1907, 1.442695
        %v1992 = vpow.pop %v1991
        %v1993 = vmul.f32 %v1908, 1.442695
        %v1994 = vpow.pop %v1993
        %v1995 = vmul.f32 %v1909, 1.442695
        %v1996 = vpow.pop %v1995
        %v1997 = vmul.f32 %v1910, 1.442695
        %v1998 = vpow.pop %v1997
        %v1999 = vmul.f32 %v1911, 1.442695
        %v2000 = vpow.pop %v1999
        %v2001 = vmul.f32 %v1912, 1.442695
        %v2002 = vpow.pop %v2001
        %v2003 = vmul.f32 %v1913, 1.442695
        %v2004 = vpow.pop %v2003
        %v2005 = vmul.f32 %v1914, 1.442695
        %v2006 = vpow.pop %v2005
        %v2007 = vmul.f32 %v1915, 1.442695
        %v2008 = vpow.pop %v2007
        %v2009 = vmul.f32 %v1916, 1.442695
        %v2010 = vpow.pop %v2009
        %v2011 = vmul.f32 %v1917, 1.442695
        %v2012 = vpow.pop %v2011
        %v2013 = vmul.f32 %v1918, 1.442695
        %v2014 = vpow.pop %v2013
        %v2015 = vmul.f32 %v1919, 1.442695
        %v2016 = vpow.pop %v2015
        %v2017 = vmul.f32 %v1920, 1.442695
        %v2018 = vpow.pop %v2017
        %v2019 = vmul.f32 %v1921, 1.442695
        %v2020 = vpow.pop %v2019
        %v2021 = vmul.f32 %v1922, 1.442695
        %v2022 = vpow.pop %v2021
        %v2023 = vmul.f32 %v1923, 1.442695
        %v2024 = vpow.pop %v2023
        %v2025 = vmul.f32 %v1924, 1.442695
        %v2026 = vpow.pop %v2025
        %v2027 = vmul.f32 %v1925, 1.442695
        %v2028 = vpow.pop %v2027
        %v2029 = vmul.f32 %v1926, 1.442695
        %v2030 = vpow.pop %v2029
        %v2031 = vmul.f32 %v1927, 1.442695
        %v2032 = vpow.pop %v2031
        %v2033 = vmul.f32 %v1928, 1.442695
        %v2034 = vpow.pop %v2033
        %v2035 = vmul.f32 %v1929, 1.442695
        %v2036 = vpow.pop %v2035
        %v2037 = vmul.f32 %v1930, 1.442695
        %v2038 = vpow.pop %v2037
        %v2039 = vmul.f32 %v1931, 1.442695
        %v2040 = vpow.pop %v2039
        %v2041 = vmul.f32 %v1932, 1.442695
        %v2042 = vpow.pop %v2041
        %v2043 = vmul.f32 %v1933, 1.442695
        %v2044 = vpow.pop %v2043
        %v2045 = vmul.f32 %v1934, 1.442695
        %v2046 = vpow.pop %v2045
        %v2047 = vmul.f32 %v1935, 1.442695
        %v2048 = vpow.pop %v2047
        %v2049 = vmul.f32 %v1936, 1.442695
        %v2050 = vpow.pop %v2049
        %v2051 = vmul.f32 %v1937, 1.442695
        %v2052 = vpow.pop %v2051
        %v2053 = vmul.f32 %v1938, 1.442695
        %v2054 = vpow.pop %v2053
        %v2055 = vmul.f32 %v1939, 1.442695
        %v2056 = vpow.pop %v2055
        %v2057 = vmul.f32 %v1940, 1.442695
        %v2058 = vpow.pop %v2057
        %v2059 = vmul.f32 %v1941, 1.442695
        %v2060 = vpow.pop %v2059
        %v2061 = vmul.f32 %v1942, 1.442695
        %v2062 = vpow.pop %v2061
        %v2063 = vmul.f32 %v1943, 1.442695
        %v2064 = vpow.pop %v2063
        %v2065 = vmul.f32 %v1944, 1.442695
        %v2066 = vpow.pop %v2065
        %v2067 = vmul.f32 %v1945, 1.442695
        %v2068 = vpow.pop %v2067
        %v2069 = vmul.f32 %v1946, 1.442695
        %v2070 = vpow.pop %v2069
        %v2071 = vmul.f32 %v1947, 1.442695
        %v2072 = vpow.pop %v2071
        %v2073 = vmul.f32 %v1948, 1.442695
        %v2074 = vpow.pop %v2073
        %v2075 = vmul.f32 %v1949, 1.442695
        %v2076 = vpow.pop %v2075
        %v2077 = vmul.f32 %v1950, 1.442695
        %v2078 = vpow.pop %v2077
        %v2079 = vld [vmem:[#allocation4] sm:$0xff]
        %v2080 = vld [vmem:[#allocation4 + $0x8] sm:$0xff]
        %v2081 = vld [vmem:[#allocation4 + $0x10] sm:$0xff]
        %v2082 = vld [vmem:[#allocation4 + $0x18] sm:$0xff]
        %v2083 = vld [vmem:[#allocation4 + $0x20] sm:$0xff]
        %v2084 = vld [vmem:[#allocation4 + $0x28] sm:$0xff]
        %v2085 = vld [vmem:[#allocation4 + $0x30] sm:$0xff]
        %v2086 = vld [vmem:[#allocation4 + $0x38] sm:$0xff]
        %v2087 = vld [vmem:[#allocation4 + $0x40] sm:$0xff]
        %v2088 = vld [vmem:[#allocation4 + $0x48] sm:$0xff]
        %v2089 = vld [vmem:[#allocation4 + $0x50] sm:$0xff]
        %v2090 = vld [vmem:[#allocation4 + $0x58] sm:$0xff]
        %v2091 = vld [vmem:[#allocation4 + $0x60] sm:$0xff]
        %v2092 = vld [vmem:[#allocation4 + $0x68] sm:$0xff]
        %v2093 = vld [vmem:[#allocation4 + $0x70] sm:$0xff]
        %v2094 = vld [vmem:[#allocation4 + $0x78] sm:$0xff]
        %v2095 = vld [vmem:[#allocation4 + $0x80] sm:$0xff]
        %v2096 = vld [vmem:[#allocation4 + $0x88] sm:$0xff]
        %v2097 = vld [vmem:[#allocation4 + $0x90] sm:$0xff]
        %v2098 = vld [vmem:[#allocation4 + $0x98] sm:$0xff]
        %v2099 = vld [vmem:[#allocation4 + $0xa0] sm:$0xff]
        %v2100 = vld [vmem:[#allocation4 + $0xa8] sm:$0xff]
        %v2101 = vld [vmem:[#allocation4 + $0xb0] sm:$0xff]
        %v2102 = vld [vmem:[#allocation4 + $0xb8] sm:$0xff]
        %v2103 = vld [vmem:[#allocation4 + $0xc0] sm:$0xff]
        %v2104 = vld [vmem:[#allocation4 + $0xc8] sm:$0xff]
        %v2105 = vld [vmem:[#allocation4 + $0xd0] sm:$0xff]
        %v2106 = vld [vmem:[#allocation4 + $0xd8] sm:$0xff]
        %v2107 = vld [vmem:[#allocation4 + $0xe0] sm:$0xff]
        %v2108 = vld [vmem:[#allocation4 + $0xe8] sm:$0xff]
        %v2109 = vld [vmem:[#allocation4 + $0xf0] sm:$0xff]
        %v2110 = vld [vmem:[#allocation4 + $0xf8] sm:$0xff]
        %v2111 = vmul.f32 %v1664, %v2079
        %v2112 = vmul.f32 %v1666, %v2080
        %v2113 = vmul.f32 %v1668, %v2081
        %v2114 = vmul.f32 %v1670, %v2082
        %v2115 = vmul.f32 %v1672, %v2083
        %v2116 = vmul.f32 %v1674, %v2084
        %v2117 = vmul.f32 %v1676, %v2085
        %v2118 = vmul.f32 %v1678, %v2086
        %v2119 = vmul.f32 %v1680, %v2087
        %v2120 = vmul.f32 %v1682, %v2088
        %v2121 = vmul.f32 %v1684, %v2089
        %v2122 = vmul.f32 %v1686, %v2090
        %v2123 = vmul.f32 %v1688, %v2091
        %v2124 = vmul.f32 %v1690, %v2092
        %v2125 = vmul.f32 %v1692, %v2093
        %v2126 = vmul.f32 %v1694, %v2094
        %v2127 = vmul.f32 %v1696, %v2095
        %v2128 = vmul.f32 %v1698, %v2096
        %v2129 = vmul.f32 %v1700, %v2097
        %v2130 = vmul.f32 %v1702, %v2098
        %v2131 = vmul.f32 %v1704, %v2099
        %v2132 = vmul.f32 %v1706, %v2100
        %v2133 = vmul.f32 %v1708, %v2101
        %v2134 = vmul.f32 %v1710, %v2102
        %v2135 = vmul.f32 %v1712, %v2103
        %v2136 = vmul.f32 %v1714, %v2104
        %v2137 = vmul.f32 %v1716, %v2105
        %v2138 = vmul.f32 %v1718, %v2106
        %v2139 = vmul.f32 %v1720, %v2107
        %v2140 = vmul.f32 %v1722, %v2108
        %v2141 = vmul.f32 %v1724, %v2109
        %v2142 = vmul.f32 %v1726, %v2110
        %v2143 = vadd.f32 %v1952, %v1954
        %2144 = vadd.xlane.f32.xlu0 %v2143
        %v2145 = vpop.xlane.xlu0 %2144
        %v2146 = vadd.f32 %v1956, %v1958
        %2147 = vadd.xlane.f32.xlu0 %v2146
        %v2148 = vpop.xlane.xlu0 %2147
        %v2149 = vadd.f32 %v1960, %v1962
        %2150 = vadd.xlane.f32.xlu0 %v2149
        %v2151 = vpop.xlane.xlu0 %2150
        %v2152 = vadd.f32 %v1964, %v1966
        %2153 = vadd.xlane.f32.xlu0 %v2152
        %v2154 = vpop.xlane.xlu0 %2153
        %v2155 = vadd.f32 %v1968, %v1970
        %2156 = vadd.xlane.f32.xlu0 %v2155
        %v2157 = vpop.xlane.xlu0 %2156
        %v2158 = vadd.f32 %v1972, %v1974
        %2159 = vadd.xlane.f32.xlu0 %v2158
        %v2160 = vpop.xlane.xlu0 %2159
        %v2161 = vadd.f32 %v1976, %v1978
        %2162 = vadd.xlane.f32.xlu0 %v2161
        %v2163 = vpop.xlane.xlu0 %2162
        %v2164 = vadd.f32 %v1980, %v1982
        %2165 = vadd.xlane.f32.xlu0 %v2164
        %v2166 = vpop.xlane.xlu0 %2165
        %v2167 = vadd.f32 %v1984, %v1986
        %2168 = vadd.xlane.f32.xlu0 %v2167
        %v2169 = vpop.xlane.xlu0 %2168
        %v2170 = vadd.f32 %v1988, %v1990
        %2171 = vadd.xlane.f32.xlu0 %v2170
        %v2172 = vpop.xlane.xlu0 %2171
        %v2173 = vadd.f32 %v1992, %v1994
        %2174 = vadd.xlane.f32.xlu0 %v2173
        %v2175 = vpop.xlane.xlu0 %2174
        %v2176 = vadd.f32 %v1996, %v1998
        %2177 = vadd.xlane.f32.xlu0 %v2176
        %v2178 = vpop.xlane.xlu0 %2177
        %v2179 = vadd.f32 %v2000, %v2002
        %2180 = vadd.xlane.f32.xlu0 %v2179
        %v2181 = vpop.xlane.xlu0 %2180
        %v2182 = vadd.f32 %v2004, %v2006
        %2183 = vadd.xlane.f32.xlu0 %v2182
        %v2184 = vpop.xlane.xlu0 %2183
        %v2185 = vadd.f32 %v2008, %v2010
        %2186 = vadd.xlane.f32.xlu0 %v2185
        %v2187 = vpop.xlane.xlu0 %2186
        %v2188 = vadd.f32 %v2012, %v2014
        %2189 = vadd.xlane.f32.xlu0 %v2188
        %v2190 = vpop.xlane.xlu0 %2189
        %v2191 = vadd.f32 %v2016, %v2018
        %2192 = vadd.xlane.f32.xlu0 %v2191
        %v2193 = vpop.xlane.xlu0 %2192
        %v2194 = vadd.f32 %v2020, %v2022
        %2195 = vadd.xlane.f32.xlu0 %v2194
        %v2196 = vpop.xlane.xlu0 %2195
        %v2197 = vadd.f32 %v2024, %v2026
        %2198 = vadd.xlane.f32.xlu0 %v2197
        %v2199 = vpop.xlane.xlu0 %2198
        %v2200 = vadd.f32 %v2028, %v2030
        %2201 = vadd.xlane.f32.xlu0 %v2200
        %v2202 = vpop.xlane.xlu0 %2201
        %v2203 = vadd.f32 %v2032, %v2034
        %2204 = vadd.xlane.f32.xlu0 %v2203
        %v2205 = vpop.xlane.xlu0 %2204
        %v2206 = vadd.f32 %v2036, %v2038
        %2207 = vadd.xlane.f32.xlu0 %v2206
        %v2208 = vpop.xlane.xlu0 %2207
        %v2209 = vadd.f32 %v2040, %v2042
        %2210 = vadd.xlane.f32.xlu0 %v2209
        %v2211 = vpop.xlane.xlu0 %2210
        %v2212 = vadd.f32 %v2044, %v2046
        %2213 = vadd.xlane.f32.xlu0 %v2212
        %v2214 = vpop.xlane.xlu0 %2213
        %v2215 = vadd.f32 %v2048, %v2050
        %2216 = vadd.xlane.f32.xlu0 %v2215
        %v2217 = vpop.xlane.xlu0 %2216
        %v2218 = vadd.f32 %v2052, %v2054
        %2219 = vadd.xlane.f32.xlu0 %v2218
        %v2220 = vpop.xlane.xlu0 %2219
        %v2221 = vadd.f32 %v2056, %v2058
        %2222 = vadd.xlane.f32.xlu0 %v2221
        %v2223 = vpop.xlane.xlu0 %2222
        %v2224 = vadd.f32 %v2060, %v2062
        %2225 = vadd.xlane.f32.xlu0 %v2224
        %v2226 = vpop.xlane.xlu0 %2225
        %v2227 = vadd.f32 %v2064, %v2066
        %2228 = vadd.xlane.f32.xlu0 %v2227
        %v2229 = vpop.xlane.xlu0 %2228
        %v2230 = vadd.f32 %v2068, %v2070
        %2231 = vadd.xlane.f32.xlu0 %v2230
        %v2232 = vpop.xlane.xlu0 %2231
        %v2233 = vadd.f32 %v2072, %v2074
        %2234 = vadd.xlane.f32.xlu0 %v2233
        %v2235 = vpop.xlane.xlu0 %2234
        %v2236 = vadd.f32 %v2076, %v2078
        %2237 = vadd.xlane.f32.xlu0 %v2236
        %v2238 = vpop.xlane.xlu0 %2237
        %v2239 = vadd.f32 %v2111, %v2145
        %v2240 = vadd.f32 %v2112, %v2148
        %v2241 = vadd.f32 %v2113, %v2151
        %v2242 = vadd.f32 %v2114, %v2154
        %v2243 = vadd.f32 %v2115, %v2157
        %v2244 = vadd.f32 %v2116, %v2160
        %v2245 = vadd.f32 %v2117, %v2163
        %v2246 = vadd.f32 %v2118, %v2166
        %v2247 = vadd.f32 %v2119, %v2169
        %v2248 = vadd.f32 %v2120, %v2172
        %v2249 = vadd.f32 %v2121, %v2175
        %v2250 = vadd.f32 %v2122, %v2178
        %v2251 = vadd.f32 %v2123, %v2181
        %v2252 = vadd.f32 %v2124, %v2184
        %v2253 = vadd.f32 %v2125, %v2187
        %v2254 = vadd.f32 %v2126, %v2190
        %v2255 = vadd.f32 %v2127, %v2193
        %v2256 = vadd.f32 %v2128, %v2196
        %v2257 = vadd.f32 %v2129, %v2199
        %v2258 = vadd.f32 %v2130, %v2202
        %v2259 = vadd.f32 %v2131, %v2205
        %v2260 = vadd.f32 %v2132, %v2208
        %v2261 = vadd.f32 %v2133, %v2211
        %v2262 = vadd.f32 %v2134, %v2214
        %v2263 = vadd.f32 %v2135, %v2217
        %v2264 = vadd.f32 %v2136, %v2220
        %v2265 = vadd.f32 %v2137, %v2223
        %v2266 = vadd.f32 %v2138, %v2226
        %v2267 = vadd.f32 %v2139, %v2229
        %v2268 = vadd.f32 %v2140, %v2232
        %v2269 = vadd.f32 %v2141, %v2235
        %v2270 = vadd.f32 %v2142, %v2238
        %vm2271 = vcmask 7168
        %2272 = vst.msk [vmem:[#allocation4] sm:$0xff] %vm2271, %v2239
        %2273 = vst.msk [vmem:[#allocation4 + $0x8] sm:$0xff] %vm2271, %v2240
        %2274 = vst.msk [vmem:[#allocation4 + $0x10] sm:$0xff] %vm2271, %v2241
        %2275 = vst.msk [vmem:[#allocation4 + $0x18] sm:$0xff] %vm2271, %v2242
        %2276 = vst.msk [vmem:[#allocation4 + $0x20] sm:$0xff] %vm2271, %v2243
        %2277 = vst.msk [vmem:[#allocation4 + $0x28] sm:$0xff] %vm2271, %v2244
        %2278 = vst.msk [vmem:[#allocation4 + $0x30] sm:$0xff] %vm2271, %v2245
        %2279 = vst.msk [vmem:[#allocation4 + $0x38] sm:$0xff] %vm2271, %v2246
        %2280 = vst.msk [vmem:[#allocation4 + $0x40] sm:$0xff] %vm2271, %v2247
        %2281 = vst.msk [vmem:[#allocation4 + $0x48] sm:$0xff] %vm2271, %v2248
        %2282 = vst.msk [vmem:[#allocation4 + $0x50] sm:$0xff] %vm2271, %v2249
        %2283 = vst.msk [vmem:[#allocation4 + $0x58] sm:$0xff] %vm2271, %v2250
        %2284 = vst.msk [vmem:[#allocation4 + $0x60] sm:$0xff] %vm2271, %v2251
        %2285 = vst.msk [vmem:[#allocation4 + $0x68] sm:$0xff] %vm2271, %v2252
        %2286 = vst.msk [vmem:[#allocation4 + $0x70] sm:$0xff] %vm2271, %v2253
        %2287 = vst.msk [vmem:[#allocation4 + $0x78] sm:$0xff] %vm2271, %v2254
        %2288 = vst.msk [vmem:[#allocation4 + $0x80] sm:$0xff] %vm2271, %v2255
        %2289 = vst.msk [vmem:[#allocation4 + $0x88] sm:$0xff] %vm2271, %v2256
        %2290 = vst.msk [vmem:[#allocation4 + $0x90] sm:$0xff] %vm2271, %v2257
        %2291 = vst.msk [vmem:[#allocation4 + $0x98] sm:$0xff] %vm2271, %v2258
        %2292 = vst.msk [vmem:[#allocation4 + $0xa0] sm:$0xff] %vm2271, %v2259
        %2293 = vst.msk [vmem:[#allocation4 + $0xa8] sm:$0xff] %vm2271, %v2260
        %2294 = vst.msk [vmem:[#allocation4 + $0xb0] sm:$0xff] %vm2271, %v2261
        %2295 = vst.msk [vmem:[#allocation4 + $0xb8] sm:$0xff] %vm2271, %v2262
        %2296 = vst.msk [vmem:[#allocation4 + $0xc0] sm:$0xff] %vm2271, %v2263
        %2297 = vst.msk [vmem:[#allocation4 + $0xc8] sm:$0xff] %vm2271, %v2264
        %2298 = vst.msk [vmem:[#allocation4 + $0xd0] sm:$0xff] %vm2271, %v2265
        %2299 = vst.msk [vmem:[#allocation4 + $0xd8] sm:$0xff] %vm2271, %v2266
        %2300 = vst.msk [vmem:[#allocation4 + $0xe0] sm:$0xff] %vm2271, %v2267
        %2301 = vst.msk [vmem:[#allocation4 + $0xe8] sm:$0xff] %vm2271, %v2268
        %2302 = vst.msk [vmem:[#allocation4 + $0xf0] sm:$0xff] %vm2271, %v2269
        %2303 = vst.msk [vmem:[#allocation4 + $0xf8] sm:$0xff] %vm2271, %v2270
        %v2304 = vld [vmem:[#allocation5] sm:$0xff]
        %v2305 = vld [vmem:[#allocation5 + $0x8] sm:$0xff]
        %v2306 = vld [vmem:[#allocation5 + $0x10] sm:$0xff]
        %v2307 = vld [vmem:[#allocation5 + $0x18] sm:$0xff]
        %v2308 = vld [vmem:[#allocation5 + $0x20] sm:$0xff]
        %v2309 = vld [vmem:[#allocation5 + $0x28] sm:$0xff]
        %v2310 = vld [vmem:[#allocation5 + $0x30] sm:$0xff]
        %v2311 = vld [vmem:[#allocation5 + $0x38] sm:$0xff]
        %v2312 = vld [vmem:[#allocation5 + $0x40] sm:$0xff]
        %v2313 = vld [vmem:[#allocation5 + $0x48] sm:$0xff]
        %v2314 = vld [vmem:[#allocation5 + $0x50] sm:$0xff]
        %v2315 = vld [vmem:[#allocation5 + $0x58] sm:$0xff]
        %v2316 = vld [vmem:[#allocation5 + $0x60] sm:$0xff]
        %v2317 = vld [vmem:[#allocation5 + $0x68] sm:$0xff]
        %v2318 = vld [vmem:[#allocation5 + $0x70] sm:$0xff]
        %v2319 = vld [vmem:[#allocation5 + $0x78] sm:$0xff]
        %v2320 = vld [vmem:[#allocation5 + $0x80] sm:$0xff]
        %v2321 = vld [vmem:[#allocation5 + $0x88] sm:$0xff]
        %v2322 = vld [vmem:[#allocation5 + $0x90] sm:$0xff]
        %v2323 = vld [vmem:[#allocation5 + $0x98] sm:$0xff]
        %v2324 = vld [vmem:[#allocation5 + $0xa0] sm:$0xff]
        %v2325 = vld [vmem:[#allocation5 + $0xa8] sm:$0xff]
        %v2326 = vld [vmem:[#allocation5 + $0xb0] sm:$0xff]
        %v2327 = vld [vmem:[#allocation5 + $0xb8] sm:$0xff]
        %v2328 = vld [vmem:[#allocation5 + $0xc0] sm:$0xff]
        %v2329 = vld [vmem:[#allocation5 + $0xc8] sm:$0xff]
        %v2330 = vld [vmem:[#allocation5 + $0xd0] sm:$0xff]
        %v2331 = vld [vmem:[#allocation5 + $0xd8] sm:$0xff]
        %v2332 = vld [vmem:[#allocation5 + $0xe0] sm:$0xff]
        %v2333 = vld [vmem:[#allocation5 + $0xe8] sm:$0xff]
        %v2334 = vld [vmem:[#allocation5 + $0xf0] sm:$0xff]
        %v2335 = vld [vmem:[#allocation5 + $0xf8] sm:$0xff]
        %2337 = vset.pattern.permute.xlu0 0
        %2338 = vperm.xlu0 %2337, %v1664
        %v2339 = vpop.permute.xlu0 %2338
        %2342 = vset.pattern.permute.xlu0 0
        %2343 = vperm.xlu0 %2342, %v1666
        %v2344 = vpop.permute.xlu0 %2343
        %2347 = vset.pattern.permute.xlu0 0
        %2348 = vperm.xlu0 %2347, %v1668
        %v2349 = vpop.permute.xlu0 %2348
        %2352 = vset.pattern.permute.xlu0 0
        %2353 = vperm.xlu0 %2352, %v1670
        %v2354 = vpop.permute.xlu0 %2353
        %2357 = vset.pattern.permute.xlu0 0
        %2358 = vperm.xlu0 %2357, %v1672
        %v2359 = vpop.permute.xlu0 %2358
        %2362 = vset.pattern.permute.xlu0 0
        %2363 = vperm.xlu0 %2362, %v1674
        %v2364 = vpop.permute.xlu0 %2363
        %2367 = vset.pattern.permute.xlu0 0
        %2368 = vperm.xlu0 %2367, %v1676
        %v2369 = vpop.permute.xlu0 %2368
        %2372 = vset.pattern.permute.xlu0 0
        %2373 = vperm.xlu0 %2372, %v1678
        %v2374 = vpop.permute.xlu0 %2373
        %2377 = vset.pattern.permute.xlu0 0
        %2378 = vperm.xlu0 %2377, %v1680
        %v2379 = vpop.permute.xlu0 %2378
        %2382 = vset.pattern.permute.xlu0 0
        %2383 = vperm.xlu0 %2382, %v1682
        %v2384 = vpop.permute.xlu0 %2383
        %2387 = vset.pattern.permute.xlu0 0
        %2388 = vperm.xlu0 %2387, %v1684
        %v2389 = vpop.permute.xlu0 %2388
        %2392 = vset.pattern.permute.xlu0 0
        %2393 = vperm.xlu0 %2392, %v1686
        %v2394 = vpop.permute.xlu0 %2393
        %2397 = vset.pattern.permute.xlu0 0
        %2398 = vperm.xlu0 %2397, %v1688
        %v2399 = vpop.permute.xlu0 %2398
        %2402 = vset.pattern.permute.xlu0 0
        %2403 = vperm.xlu0 %2402, %v1690
        %v2404 = vpop.permute.xlu0 %2403
        %2407 = vset.pattern.permute.xlu0 0
        %2408 = vperm.xlu0 %2407, %v1692
        %v2409 = vpop.permute.xlu0 %2408
        %2412 = vset.pattern.permute.xlu0 0
        %2413 = vperm.xlu0 %2412, %v1694
        %v2414 = vpop.permute.xlu0 %2413
        %2417 = vset.pattern.permute.xlu0 0
        %2418 = vperm.xlu0 %2417, %v1696
        %v2419 = vpop.permute.xlu0 %2418
        %2422 = vset.pattern.permute.xlu0 0
        %2423 = vperm.xlu0 %2422, %v1698
        %v2424 = vpop.permute.xlu0 %2423
        %2427 = vset.pattern.permute.xlu0 0
        %2428 = vperm.xlu0 %2427, %v1700
        %v2429 = vpop.permute.xlu0 %2428
        %2432 = vset.pattern.permute.xlu0 0
        %2433 = vperm.xlu0 %2432, %v1702
        %v2434 = vpop.permute.xlu0 %2433
        %2437 = vset.pattern.permute.xlu0 0
        %2438 = vperm.xlu0 %2437, %v1704
        %v2439 = vpop.permute.xlu0 %2438
        %2442 = vset.pattern.permute.xlu0 0
        %2443 = vperm.xlu0 %2442, %v1706
        %v2444 = vpop.permute.xlu0 %2443
        %2447 = vset.pattern.permute.xlu0 0
        %2448 = vperm.xlu0 %2447, %v1708
        %v2449 = vpop.permute.xlu0 %2448
        %2452 = vset.pattern.permute.xlu0 0
        %2453 = vperm.xlu0 %2452, %v1710
        %v2454 = vpop.permute.xlu0 %2453
        %2457 = vset.pattern.permute.xlu0 0
        %2458 = vperm.xlu0 %2457, %v1712
        %v2459 = vpop.permute.xlu0 %2458
        %2462 = vset.pattern.permute.xlu0 0
        %2463 = vperm.xlu0 %2462, %v1714
        %v2464 = vpop.permute.xlu0 %2463
        %2467 = vset.pattern.permute.xlu0 0
        %2468 = vperm.xlu0 %2467, %v1716
        %v2469 = vpop.permute.xlu0 %2468
        %2472 = vset.pattern.permute.xlu0 0
        %2473 = vperm.xlu0 %2472, %v1718
        %v2474 = vpop.permute.xlu0 %2473
        %2477 = vset.pattern.permute.xlu0 0
        %2478 = vperm.xlu0 %2477, %v1720
        %v2479 = vpop.permute.xlu0 %2478
        %2482 = vset.pattern.permute.xlu0 0
        %2483 = vperm.xlu0 %2482, %v1722
        %v2484 = vpop.permute.xlu0 %2483
        %2487 = vset.pattern.permute.xlu0 0
        %2488 = vperm.xlu0 %2487, %v1724
        %v2489 = vpop.permute.xlu0 %2488
        %2492 = vset.pattern.permute.xlu0 0
        %2493 = vperm.xlu0 %2492, %v1726
        %v2494 = vpop.permute.xlu0 %2493
        %v2496 = vmul.f32 %v2339, %v2304
        %v2497 = vmul.f32 %v2344, %v2305
        %v2498 = vmul.f32 %v2349, %v2306
        %v2499 = vmul.f32 %v2354, %v2307
        %v2500 = vmul.f32 %v2359, %v2308
        %v2501 = vmul.f32 %v2364, %v2309
        %v2502 = vmul.f32 %v2369, %v2310
        %v2503 = vmul.f32 %v2374, %v2311
        %v2504 = vmul.f32 %v2379, %v2312
        %v2505 = vmul.f32 %v2384, %v2313
        %v2506 = vmul.f32 %v2389, %v2314
        %v2507 = vmul.f32 %v2394, %v2315
        %v2508 = vmul.f32 %v2399, %v2316
        %v2509 = vmul.f32 %v2404, %v2317
        %v2510 = vmul.f32 %v2409, %v2318
        %v2511 = vmul.f32 %v2414, %v2319
        %v2512 = vmul.f32 %v2419, %v2320
        %v2513 = vmul.f32 %v2424, %v2321
        %v2514 = vmul.f32 %v2429, %v2322
        %v2515 = vmul.f32 %v2434, %v2323
        %v2516 = vmul.f32 %v2439, %v2324
        %v2517 = vmul.f32 %v2444, %v2325
        %v2518 = vmul.f32 %v2449, %v2326
        %v2519 = vmul.f32 %v2454, %v2327
        %v2520 = vmul.f32 %v2459, %v2328
        %v2521 = vmul.f32 %v2464, %v2329
        %v2522 = vmul.f32 %v2469, %v2330
        %v2523 = vmul.f32 %v2474, %v2331
        %v2524 = vmul.f32 %v2479, %v2332
        %v2525 = vmul.f32 %v2484, %v2333
        %v2526 = vmul.f32 %v2489, %v2334
        %v2527 = vmul.f32 %v2494, %v2335
        %v2528 = vpack.c.bf16 %v1956, %v1952
        %v2529 = vpack.c.bf16 %v1958, %v1954
        %v2530 = vpack.c.bf16 %v1964, %v1960
        %v2531 = vpack.c.bf16 %v1966, %v1962
        %v2532 = vpack.c.bf16 %v1972, %v1968
        %v2533 = vpack.c.bf16 %v1974, %v1970
        %v2534 = vpack.c.bf16 %v1980, %v1976
        %v2535 = vpack.c.bf16 %v1982, %v1978
        %v2536 = vpack.c.bf16 %v1988, %v1984
        %v2537 = vpack.c.bf16 %v1990, %v1986
        %v2538 = vpack.c.bf16 %v1996, %v1992
        %v2539 = vpack.c.bf16 %v1998, %v1994
        %v2540 = vpack.c.bf16 %v2004, %v2000
        %v2541 = vpack.c.bf16 %v2006, %v2002
        %v2542 = vpack.c.bf16 %v2012, %v2008
        %v2543 = vpack.c.bf16 %v2014, %v2010
        %v2544 = vpack.c.bf16 %v2020, %v2016
        %v2545 = vpack.c.bf16 %v2022, %v2018
        %v2546 = vpack.c.bf16 %v2028, %v2024
        %v2547 = vpack.c.bf16 %v2030, %v2026
        %v2548 = vpack.c.bf16 %v2036, %v2032
        %v2549 = vpack.c.bf16 %v2038, %v2034
        %v2550 = vpack.c.bf16 %v2044, %v2040
        %v2551 = vpack.c.bf16 %v2046, %v2042
        %v2552 = vpack.c.bf16 %v2052, %v2048
        %v2553 = vpack.c.bf16 %v2054, %v2050
        %v2554 = vpack.c.bf16 %v2060, %v2056
        %v2555 = vpack.c.bf16 %v2062, %v2058
        %v2556 = vpack.c.bf16 %v2068, %v2064
        %v2557 = vpack.c.bf16 %v2070, %v2066
        %v2558 = vpack.c.bf16 %v2076, %v2072
        %v2559 = vpack.c.bf16 %v2078, %v2074
        %v2560 = vld [vmem:[%s353] sm:$0xf]
        %v2561 = vld [vmem:[%s353 + $0x4] sm:$0xf]
        %v2562 = vld [vmem:[%s353 + $0x8] sm:$0xf]
        %v2563 = vld [vmem:[%s353 + $0xc] sm:$0xf]
        %v2564 = vld [vmem:[%s353 + $0x10] sm:$0xf]
        %v2565 = vld [vmem:[%s353 + $0x14] sm:$0xf]
        %v2566 = vld [vmem:[%s353 + $0x18] sm:$0xf]
        %v2567 = vld [vmem:[%s353 + $0x1c] sm:$0xf]
        %v2568 = vld [vmem:[%s353 + $0x20] sm:$0xf]
        %v2569 = vld [vmem:[%s353 + $0x24] sm:$0xf]
        %v2570 = vld [vmem:[%s353 + $0x28] sm:$0xf]
        %v2571 = vld [vmem:[%s353 + $0x2c] sm:$0xf]
        %v2572 = vld [vmem:[%s353 + $0x30] sm:$0xf]
        %v2573 = vld [vmem:[%s353 + $0x34] sm:$0xf]
        %v2574 = vld [vmem:[%s353 + $0x38] sm:$0xf]
        %v2575 = vld [vmem:[%s353 + $0x3c] sm:$0xf]
        %v2576 = vld [vmem:[%s353 + $0x40] sm:$0xf]
        %v2577 = vld [vmem:[%s353 + $0x44] sm:$0xf]
        %v2578 = vld [vmem:[%s353 + $0x48] sm:$0xf]
        %v2579 = vld [vmem:[%s353 + $0x4c] sm:$0xf]
        %v2580 = vld [vmem:[%s353 + $0x50] sm:$0xf]
        %v2581 = vld [vmem:[%s353 + $0x54] sm:$0xf]
        %v2582 = vld [vmem:[%s353 + $0x58] sm:$0xf]
        %v2583 = vld [vmem:[%s353 + $0x5c] sm:$0xf]
        %v2584 = vld [vmem:[%s353 + $0x60] sm:$0xf]
        %v2585 = vld [vmem:[%s353 + $0x64] sm:$0xf]
        %v2586 = vld [vmem:[%s353 + $0x68] sm:$0xf]
        %v2587 = vld [vmem:[%s353 + $0x6c] sm:$0xf]
        %v2588 = vld [vmem:[%s353 + $0x70] sm:$0xf]
        %v2589 = vld [vmem:[%s353 + $0x74] sm:$0xf]
        %v2590 = vld [vmem:[%s353 + $0x78] sm:$0xf]
        %v2591 = vld [vmem:[%s353 + $0x7c] sm:$0xf]
        %v2624 = vunpack.c.l.b16 %v2560
        %v2625 = vunpack.c.l.b16 %v2561
        %v2626 = vunpack.c.l.b16 %v2562
        %v2627 = vunpack.c.l.b16 %v2563
        %v2628 = vunpack.c.l.b16 %v2564
        %v2629 = vunpack.c.l.b16 %v2565
        %v2630 = vunpack.c.l.b16 %v2566
        %v2631 = vunpack.c.l.b16 %v2567
        %v2632 = vunpack.c.l.b16 %v2568
        %v2633 = vunpack.c.l.b16 %v2569
        %v2634 = vunpack.c.l.b16 %v2570
        %v2635 = vunpack.c.l.b16 %v2571
        %v2636 = vunpack.c.l.b16 %v2572
        %v2637 = vunpack.c.l.b16 %v2573
        %v2638 = vunpack.c.l.b16 %v2574
        %v2639 = vunpack.c.l.b16 %v2575
        %v2640 = vunpack.c.l.b16 %v2576
        %v2641 = vunpack.c.l.b16 %v2577
        %v2642 = vunpack.c.l.b16 %v2578
        %v2643 = vunpack.c.l.b16 %v2579
        %v2644 = vunpack.c.l.b16 %v2580
        %v2645 = vunpack.c.l.b16 %v2581
        %v2646 = vunpack.c.l.b16 %v2582
        %v2647 = vunpack.c.l.b16 %v2583
        %v2648 = vunpack.c.l.b16 %v2584
        %v2649 = vunpack.c.l.b16 %v2585
        %v2650 = vunpack.c.l.b16 %v2586
        %v2651 = vunpack.c.l.b16 %v2587
        %v2652 = vunpack.c.l.b16 %v2588
        %v2653 = vunpack.c.l.b16 %v2589
        %v2654 = vunpack.c.l.b16 %v2590
        %v2655 = vunpack.c.l.b16 %v2591
        %v2656 = vpack.c.b16 %v2625, %v2624
        %v2657 = vpack.c.b16 %v2627, %v2626
        %v2658 = vpack.c.b16 %v2629, %v2628
        %v2659 = vpack.c.b16 %v2631, %v2630
        %v2660 = vpack.c.b16 %v2633, %v2632
        %v2661 = vpack.c.b16 %v2635, %v2634
        %v2662 = vpack.c.b16 %v2637, %v2636
        %v2663 = vpack.c.b16 %v2639, %v2638
        %v2664 = vpack.c.b16 %v2641, %v2640
        %v2665 = vpack.c.b16 %v2643, %v2642
        %v2666 = vpack.c.b16 %v2645, %v2644
        %v2667 = vpack.c.b16 %v2647, %v2646
        %v2668 = vpack.c.b16 %v2649, %v2648
        %v2669 = vpack.c.b16 %v2651, %v2650
        %v2670 = vpack.c.b16 %v2653, %v2652
        %v2671 = vpack.c.b16 %v2655, %v2654
        %2688 = vmatprep.subr.bf16.mxu0 0
        %2689 = vmatpush1.bf16.msra.mxu0 %v2663
        %2690 = vmatprep.subr.bf16.mxu0 0
        %2691 = vmatpush1.bf16.msra.mxu0 %v2662
        %2692 = vmatprep.subr.bf16.mxu0 0
        %2693 = vmatpush1.bf16.msra.mxu0 %v2661
        %2694 = vmatprep.subr.bf16.mxu0 0
        %2695 = vmatpush1.bf16.msra.mxu0 %v2660
        %2696 = vmatprep.subr.bf16.mxu0 0
        %2697 = vmatpush1.bf16.msra.mxu0 %v2659
        %2698 = vmatprep.subr.bf16.mxu0 0
        %2699 = vmatpush1.bf16.msra.mxu0 %v2658
        %2700 = vmatprep.subr.bf16.mxu0 0
        %2701 = vmatpush1.bf16.msra.mxu0 %v2657
        %2702 = vmatprep.subr.bf16.mxu0 0
        %2703 = vmatpush1.bf16.msra.mxu0 %v2656
        %2704 = vmatprep.subr.bf16.mxu0 0
        %2705 = vmatpush2.bf16.msra.mxu0 %v2671
        %2706 = vmatprep.subr.bf16.mxu0 0
        %2707 = vmatpush2.bf16.msra.mxu0 %v2670
        %2708 = vmatprep.subr.bf16.mxu0 0
        %2709 = vmatpush2.bf16.msra.mxu0 %v2669
        %2710 = vmatprep.subr.bf16.mxu0 0
        %2711 = vmatpush2.bf16.msra.mxu0 %v2668
        %2712 = vmatprep.subr.bf16.mxu0 0
        %2713 = vmatpush2.bf16.msra.mxu0 %v2667
        %2714 = vmatprep.subr.bf16.mxu0 0
        %2715 = vmatpush2.bf16.msra.mxu0 %v2666
        %2716 = vmatprep.subr.bf16.mxu0 0
        %2717 = vmatpush2.bf16.msra.mxu0 %v2665
        %2718 = vmatprep.subr.bf16.mxu0 0
        %2719 = vmatpush2.bf16.msra.mxu0 %v2664
        %2720 = vmatprep.mubr.bf16.mxu0 %v2529
        %2721 = vmatmul.mubr.bf16.gmra.mxu0 %v2528
        %v2722 = vpop.f32.mrf.mxu0
        %v2723 = vadd.f32 0.0, %v2722
        %v2724 = vpop.f32.mrf.mxu0
        %v2725 = vpop.f32.mrf.mxu0
        %v2726 = vadd.f32 0.0, %v2725
        %v2727 = vpop.f32.mrf.mxu0
        %2728 = vmatprep.mubr.bf16.mxu0 %v2531
        %2729 = vmatmul.mubr.bf16.gmra.mxu0 %v2530
        %v2730 = vpop.f32.mrf.mxu0
        %v2731 = vadd.f32 0.0, %v2730
        %v2732 = vpop.f32.mrf.mxu0
        %v2733 = vpop.f32.mrf.mxu0
        %v2734 = vadd.f32 0.0, %v2733
        %v2735 = vpop.f32.mrf.mxu0
        %2736 = vmatprep.mubr.bf16.mxu0 %v2533
        %2737 = vmatmul.mubr.bf16.gmra.mxu0 %v2532
        %v2738 = vpop.f32.mrf.mxu0
        %v2739 = vadd.f32 0.0, %v2738
        %v2740 = vpop.f32.mrf.mxu0
        %v2741 = vpop.f32.mrf.mxu0
        %v2742 = vadd.f32 0.0, %v2741
        %v2743 = vpop.f32.mrf.mxu0
        %2744 = vmatprep.mubr.bf16.mxu0 %v2535
        %2745 = vmatmul.mubr.bf16.gmra.mxu0 %v2534
        %v2746 = vpop.f32.mrf.mxu0
        %v2747 = vadd.f32 0.0, %v2746
        %v2748 = vpop.f32.mrf.mxu0
        %v2749 = vpop.f32.mrf.mxu0
        %v2750 = vadd.f32 0.0, %v2749
        %v2751 = vpop.f32.mrf.mxu0
        %2752 = vmatprep.mubr.bf16.mxu0 %v2537
        %2753 = vmatmul.mubr.bf16.gmra.mxu0 %v2536
        %v2754 = vpop.f32.mrf.mxu0
        %v2755 = vadd.f32 0.0, %v2754
        %v2756 = vpop.f32.mrf.mxu0
        %v2757 = vpop.f32.mrf.mxu0
        %v2758 = vadd.f32 0.0, %v2757
        %v2759 = vpop.f32.mrf.mxu0
        %2760 = vmatprep.mubr.bf16.mxu0 %v2539
        %2761 = vmatmul.mubr.bf16.gmra.mxu0 %v2538
        %v2762 = vpop.f32.mrf.mxu0
        %v2763 = vadd.f32 0.0, %v2762
        %v2764 = vpop.f32.mrf.mxu0
        %v2765 = vpop.f32.mrf.mxu0
        %v2766 = vadd.f32 0.0, %v2765
        %v2767 = vpop.f32.mrf.mxu0
        %2768 = vmatprep.mubr.bf16.mxu0 %v2541
        %2769 = vmatmul.mubr.bf16.gmra.mxu0 %v2540
        %v2770 = vpop.f32.mrf.mxu0
        %v2771 = vadd.f32 0.0, %v2770
        %v2772 = vpop.f32.mrf.mxu0
        %v2773 = vpop.f32.mrf.mxu0
        %v2774 = vadd.f32 0.0, %v2773
        %v2775 = vpop.f32.mrf.mxu0
        %2776 = vmatprep.mubr.bf16.mxu0 %v2543
        %2777 = vmatmul.mubr.bf16.gmra.mxu0 %v2542
        %v2778 = vpop.f32.mrf.mxu0
        %v2779 = vadd.f32 0.0, %v2778
        %v2780 = vpop.f32.mrf.mxu0
        %v2781 = vpop.f32.mrf.mxu0
        %v2782 = vadd.f32 0.0, %v2781
        %v2783 = vpop.f32.mrf.mxu0
        %2784 = vmatprep.mubr.bf16.mxu0 %v2545
        %2785 = vmatmul.mubr.bf16.gmra.mxu0 %v2544
        %v2786 = vpop.f32.mrf.mxu0
        %v2787 = vadd.f32 0.0, %v2786
        %v2788 = vpop.f32.mrf.mxu0
        %v2789 = vpop.f32.mrf.mxu0
        %v2790 = vadd.f32 0.0, %v2789
        %v2791 = vpop.f32.mrf.mxu0
        %2792 = vmatprep.mubr.bf16.mxu0 %v2547
        %2793 = vmatmul.mubr.bf16.gmra.mxu0 %v2546
        %v2794 = vpop.f32.mrf.mxu0
        %v2795 = vadd.f32 0.0, %v2794
        %v2796 = vpop.f32.mrf.mxu0
        %v2797 = vpop.f32.mrf.mxu0
        %v2798 = vadd.f32 0.0, %v2797
        %v2799 = vpop.f32.mrf.mxu0
        %2800 = vmatprep.mubr.bf16.mxu0 %v2549
        %2801 = vmatmul.mubr.bf16.gmra.mxu0 %v2548
        %v2802 = vpop.f32.mrf.mxu0
        %v2803 = vadd.f32 0.0, %v2802
        %v2804 = vpop.f32.mrf.mxu0
        %v2805 = vpop.f32.mrf.mxu0
        %v2806 = vadd.f32 0.0, %v2805
        %v2807 = vpop.f32.mrf.mxu0
        %2808 = vmatprep.mubr.bf16.mxu0 %v2551
        %2809 = vmatmul.mubr.bf16.gmra.mxu0 %v2550
        %v2810 = vpop.f32.mrf.mxu0
        %v2811 = vadd.f32 0.0, %v2810
        %v2812 = vpop.f32.mrf.mxu0
        %v2813 = vpop.f32.mrf.mxu0
        %v2814 = vadd.f32 0.0, %v2813
        %v2815 = vpop.f32.mrf.mxu0
        %2816 = vmatprep.mubr.bf16.mxu0 %v2553
        %2817 = vmatmul.mubr.bf16.gmra.mxu0 %v2552
        %v2818 = vpop.f32.mrf.mxu0
        %v2819 = vadd.f32 0.0, %v2818
        %v2820 = vpop.f32.mrf.mxu0
        %v2821 = vpop.f32.mrf.mxu0
        %v2822 = vadd.f32 0.0, %v2821
        %v2823 = vpop.f32.mrf.mxu0
        %2824 = vmatprep.mubr.bf16.mxu0 %v2555
        %2825 = vmatmul.mubr.bf16.gmra.mxu0 %v2554
        %v2826 = vpop.f32.mrf.mxu0
        %v2827 = vadd.f32 0.0, %v2826
        %v2828 = vpop.f32.mrf.mxu0
        %v2829 = vpop.f32.mrf.mxu0
        %v2830 = vadd.f32 0.0, %v2829
        %v2831 = vpop.f32.mrf.mxu0
        %2832 = vmatprep.mubr.bf16.mxu0 %v2557
        %2833 = vmatmul.mubr.bf16.gmra.mxu0 %v2556
        %v2834 = vpop.f32.mrf.mxu0
        %v2835 = vadd.f32 0.0, %v2834
        %v2836 = vpop.f32.mrf.mxu0
        %v2837 = vpop.f32.mrf.mxu0
        %v2838 = vadd.f32 0.0, %v2837
        %v2839 = vpop.f32.mrf.mxu0
        %2840 = vmatprep.mubr.bf16.mxu0 %v2559
        %2841 = vmatmul.mubr.bf16.gmra.mxu0 %v2558
        %v2842 = vpop.f32.mrf.mxu0
        %v2843 = vadd.f32 0.0, %v2842
        %v2844 = vpop.f32.mrf.mxu0
        %v2845 = vpop.f32.mrf.mxu0
        %v2846 = vadd.f32 0.0, %v2845
        %v2847 = vpop.f32.mrf.mxu0
        %2848 = vdwg.mxu0
        %v2849 = vadd.f32 %v2496, %v2723
        %v2850 = vadd.f32 %v2497, %v2726
        %v2851 = vadd.f32 %v2498, %v2731
        %v2852 = vadd.f32 %v2499, %v2734
        %v2853 = vadd.f32 %v2500, %v2739
        %v2854 = vadd.f32 %v2501, %v2742
        %v2855 = vadd.f32 %v2502, %v2747
        %v2856 = vadd.f32 %v2503, %v2750
        %v2857 = vadd.f32 %v2504, %v2755
        %v2858 = vadd.f32 %v2505, %v2758
        %v2859 = vadd.f32 %v2506, %v2763
        %v2860 = vadd.f32 %v2507, %v2766
        %v2861 = vadd.f32 %v2508, %v2771
        %v2862 = vadd.f32 %v2509, %v2774
        %v2863 = vadd.f32 %v2510, %v2779
        %v2864 = vadd.f32 %v2511, %v2782
        %v2865 = vadd.f32 %v2512, %v2787
        %v2866 = vadd.f32 %v2513, %v2790
        %v2867 = vadd.f32 %v2514, %v2795
        %v2868 = vadd.f32 %v2515, %v2798
        %v2869 = vadd.f32 %v2516, %v2803
        %v2870 = vadd.f32 %v2517, %v2806
        %v2871 = vadd.f32 %v2518, %v2811
        %v2872 = vadd.f32 %v2519, %v2814
        %v2873 = vadd.f32 %v2520, %v2819
        %v2874 = vadd.f32 %v2521, %v2822
        %v2875 = vadd.f32 %v2522, %v2827
        %v2876 = vadd.f32 %v2523, %v2830
        %v2877 = vadd.f32 %v2524, %v2835
        %v2878 = vadd.f32 %v2525, %v2838
        %v2879 = vadd.f32 %v2526, %v2843
        %v2880 = vadd.f32 %v2527, %v2846
        %2881 = vst [vmem:[#allocation5] sm:$0xff] %v2849
        %2882 = vst [vmem:[#allocation5 + $0x8] sm:$0xff] %v2850
        %2883 = vst [vmem:[#allocation5 + $0x10] sm:$0xff] %v2851
        %2884 = vst [vmem:[#allocation5 + $0x18] sm:$0xff] %v2852
        %2885 = vst [vmem:[#allocation5 + $0x20] sm:$0xff] %v2853
        %2886 = vst [vmem:[#allocation5 + $0x28] sm:$0xff] %v2854
        %2887 = vst [vmem:[#allocation5 + $0x30] sm:$0xff] %v2855
        %2888 = vst [vmem:[#allocation5 + $0x38] sm:$0xff] %v2856
        %2889 = vst [vmem:[#allocation5 + $0x40] sm:$0xff] %v2857
        %2890 = vst [vmem:[#allocation5 + $0x48] sm:$0xff] %v2858
        %2891 = vst [vmem:[#allocation5 + $0x50] sm:$0xff] %v2859
        %2892 = vst [vmem:[#allocation5 + $0x58] sm:$0xff] %v2860
        %2893 = vst [vmem:[#allocation5 + $0x60] sm:$0xff] %v2861
        %2894 = vst [vmem:[#allocation5 + $0x68] sm:$0xff] %v2862
        %2895 = vst [vmem:[#allocation5 + $0x70] sm:$0xff] %v2863
        %2896 = vst [vmem:[#allocation5 + $0x78] sm:$0xff] %v2864
        %2897 = vst [vmem:[#allocation5 + $0x80] sm:$0xff] %v2865
        %2898 = vst [vmem:[#allocation5 + $0x88] sm:$0xff] %v2866
        %2899 = vst [vmem:[#allocation5 + $0x90] sm:$0xff] %v2867
        %2900 = vst [vmem:[#allocation5 + $0x98] sm:$0xff] %v2868
        %2901 = vst [vmem:[#allocation5 + $0xa0] sm:$0xff] %v2869
        %2902 = vst [vmem:[#allocation5 + $0xa8] sm:$0xff] %v2870
        %2903 = vst [vmem:[#allocation5 + $0xb0] sm:$0xff] %v2871
        %2904 = vst [vmem:[#allocation5 + $0xb8] sm:$0xff] %v2872
        %2905 = vst [vmem:[#allocation5 + $0xc0] sm:$0xff] %v2873
        %2906 = vst [vmem:[#allocation5 + $0xc8] sm:$0xff] %v2874
        %2907 = vst [vmem:[#allocation5 + $0xd0] sm:$0xff] %v2875
        %2908 = vst [vmem:[#allocation5 + $0xd8] sm:$0xff] %v2876
        %2909 = vst [vmem:[#allocation5 + $0xe0] sm:$0xff] %v2877
        %2910 = vst [vmem:[#allocation5 + $0xe8] sm:$0xff] %v2878
        %2911 = vst [vmem:[#allocation5 + $0xf0] sm:$0xff] %v2879
        %2912 = vst [vmem:[#allocation5 + $0xf8] sm:$0xff] %v2880
        %2913 = vst.msk [vmem:[#allocation3] sm:$0xff] %vm2271, %v1599
        %2914 = vst.msk [vmem:[#allocation3 + $0x8] sm:$0xff] %vm2271, %v1600
        %2915 = vst.msk [vmem:[#allocation3 + $0x10] sm:$0xff] %vm2271, %v1601
        %2916 = vst.msk [vmem:[#allocation3 + $0x18] sm:$0xff] %vm2271, %v1602
        %2917 = vst.msk [vmem:[#allocation3 + $0x20] sm:$0xff] %vm2271, %v1603
        %2918 = vst.msk [vmem:[#allocation3 + $0x28] sm:$0xff] %vm2271, %v1604
        %2919 = vst.msk [vmem:[#allocation3 + $0x30] sm:$0xff] %vm2271, %v1605
        %2920 = vst.msk [vmem:[#allocation3 + $0x38] sm:$0xff] %vm2271, %v1606
        %2921 = vst.msk [vmem:[#allocation3 + $0x40] sm:$0xff] %vm2271, %v1607
        %2922 = vst.msk [vmem:[#allocation3 + $0x48] sm:$0xff] %vm2271, %v1608
        %2923 = vst.msk [vmem:[#allocation3 + $0x50] sm:$0xff] %vm2271, %v1609
        %2924 = vst.msk [vmem:[#allocation3 + $0x58] sm:$0xff] %vm2271, %v1610
        %2925 = vst.msk [vmem:[#allocation3 + $0x60] sm:$0xff] %vm2271, %v1611
        %2926 = vst.msk [vmem:[#allocation3 + $0x68] sm:$0xff] %vm2271, %v1612
        %2927 = vst.msk [vmem:[#allocation3 + $0x70] sm:$0xff] %vm2271, %v1613
        %2928 = vst.msk [vmem:[#allocation3 + $0x78] sm:$0xff] %vm2271, %v1614
        %2929 = vst.msk [vmem:[#allocation3 + $0x80] sm:$0xff] %vm2271, %v1615
        %2930 = vst.msk [vmem:[#allocation3 + $0x88] sm:$0xff] %vm2271, %v1616
        %2931 = vst.msk [vmem:[#allocation3 + $0x90] sm:$0xff] %vm2271, %v1617
        %2932 = vst.msk [vmem:[#allocation3 + $0x98] sm:$0xff] %vm2271, %v1618
        %2933 = vst.msk [vmem:[#allocation3 + $0xa0] sm:$0xff] %vm2271, %v1619
        %2934 = vst.msk [vmem:[#allocation3 + $0xa8] sm:$0xff] %vm2271, %v1620
        %2935 = vst.msk [vmem:[#allocation3 + $0xb0] sm:$0xff] %vm2271, %v1621
        %2936 = vst.msk [vmem:[#allocation3 + $0xb8] sm:$0xff] %vm2271, %v1622
        %2937 = vst.msk [vmem:[#allocation3 + $0xc0] sm:$0xff] %vm2271, %v1623
        %2938 = vst.msk [vmem:[#allocation3 + $0xc8] sm:$0xff] %vm2271, %v1624
        %2939 = vst.msk [vmem:[#allocation3 + $0xd0] sm:$0xff] %vm2271, %v1625
        %2940 = vst.msk [vmem:[#allocation3 + $0xd8] sm:$0xff] %vm2271, %v1626
        %2941 = vst.msk [vmem:[#allocation3 + $0xe0] sm:$0xff] %vm2271, %v1627
        %2942 = vst.msk [vmem:[#allocation3 + $0xe8] sm:$0xff] %vm2271, %v1628
        %2943 = vst.msk [vmem:[#allocation3 + $0xf0] sm:$0xff] %vm2271, %v1629
        %2944 = vst.msk [vmem:[#allocation3 + $0xf8] sm:$0xff] %vm2271, %v1630
        // Predicated region
        $region65: #{tpu_custom_call.1} parent=43 // pred_check
          %p2945 = pneg %p401
        $region66: #{tpu_custom_call.1} parent=43 // pred_check_branch
          %2947 = sbr.rel (%p2945) target = $region68
        $region67: #{tpu_custom_call.1} parent=43 // pred_region
          %v2948 = vld [vmem:[#allocation4] sm:$0xff]
          %v2949 = vld [vmem:[#allocation4 + $0x8] sm:$0xff]
          %v2950 = vld [vmem:[#allocation4 + $0x10] sm:$0xff]
          %v2951 = vld [vmem:[#allocation4 + $0x18] sm:$0xff]
          %v2952 = vld [vmem:[#allocation4 + $0x20] sm:$0xff]
          %v2953 = vld [vmem:[#allocation4 + $0x28] sm:$0xff]
          %v2954 = vld [vmem:[#allocation4 + $0x30] sm:$0xff]
          %v2955 = vld [vmem:[#allocation4 + $0x38] sm:$0xff]
          %v2956 = vld [vmem:[#allocation4 + $0x40] sm:$0xff]
          %v2957 = vld [vmem:[#allocation4 + $0x48] sm:$0xff]
          %v2958 = vld [vmem:[#allocation4 + $0x50] sm:$0xff]
          %v2959 = vld [vmem:[#allocation4 + $0x58] sm:$0xff]
          %v2960 = vld [vmem:[#allocation4 + $0x60] sm:$0xff]
          %v2961 = vld [vmem:[#allocation4 + $0x68] sm:$0xff]
          %v2962 = vld [vmem:[#allocation4 + $0x70] sm:$0xff]
          %v2963 = vld [vmem:[#allocation4 + $0x78] sm:$0xff]
          %v2964 = vld [vmem:[#allocation4 + $0x80] sm:$0xff]
          %v2965 = vld [vmem:[#allocation4 + $0x88] sm:$0xff]
          %v2966 = vld [vmem:[#allocation4 + $0x90] sm:$0xff]
          %v2967 = vld [vmem:[#allocation4 + $0x98] sm:$0xff]
          %v2968 = vld [vmem:[#allocation4 + $0xa0] sm:$0xff]
          %v2969 = vld [vmem:[#allocation4 + $0xa8] sm:$0xff]
          %v2970 = vld [vmem:[#allocation4 + $0xb0] sm:$0xff]
          %v2971 = vld [vmem:[#allocation4 + $0xb8] sm:$0xff]
          %v2972 = vld [vmem:[#allocation4 + $0xc0] sm:$0xff]
          %v2973 = vld [vmem:[#allocation4 + $0xc8] sm:$0xff]
          %v2974 = vld [vmem:[#allocation4 + $0xd0] sm:$0xff]
          %v2975 = vld [vmem:[#allocation4 + $0xd8] sm:$0xff]
          %v2976 = vld [vmem:[#allocation4 + $0xe0] sm:$0xff]
          %v2977 = vld [vmem:[#allocation4 + $0xe8] sm:$0xff]
          %v2978 = vld [vmem:[#allocation4 + $0xf0] sm:$0xff]
          %v2979 = vld [vmem:[#allocation4 + $0xf8] sm:$0xff]
          %v2980 = vrcp.pop %v2948
          %v2981 = vrcp.pop %v2949
          %v2982 = vrcp.pop %v2950
          %v2983 = vrcp.pop %v2951
          %v2984 = vrcp.pop %v2952
          %v2985 = vrcp.pop %v2953
          %v2986 = vrcp.pop %v2954
          %v2987 = vrcp.pop %v2955
          %v2988 = vrcp.pop %v2956
          %v2989 = vrcp.pop %v2957
          %v2990 = vrcp.pop %v2958
          %v2991 = vrcp.pop %v2959
          %v2992 = vrcp.pop %v2960
          %v2993 = vrcp.pop %v2961
          %v2994 = vrcp.pop %v2962
          %v2995 = vrcp.pop %v2963
          %v2996 = vrcp.pop %v2964
          %v2997 = vrcp.pop %v2965
          %v2998 = vrcp.pop %v2966
          %v2999 = vrcp.pop %v2967
          %v3000 = vrcp.pop %v2968
          %v3001 = vrcp.pop %v2969
          %v3002 = vrcp.pop %v2970
          %v3003 = vrcp.pop %v2971
          %v3004 = vrcp.pop %v2972
          %v3005 = vrcp.pop %v2973
          %v3006 = vrcp.pop %v2974
          %v3007 = vrcp.pop %v2975
          %v3008 = vrcp.pop %v2976
          %v3009 = vrcp.pop %v2977
          %v3010 = vrcp.pop %v2978
          %v3011 = vrcp.pop %v2979
          %v3012 = vld [vmem:[#allocation5] sm:$0xff]
          %v3013 = vld [vmem:[#allocation5 + $0x8] sm:$0xff]
          %v3014 = vld [vmem:[#allocation5 + $0x10] sm:$0xff]
          %v3015 = vld [vmem:[#allocation5 + $0x18] sm:$0xff]
          %v3016 = vld [vmem:[#allocation5 + $0x20] sm:$0xff]
          %v3017 = vld [vmem:[#allocation5 + $0x28] sm:$0xff]
          %v3018 = vld [vmem:[#allocation5 + $0x30] sm:$0xff]
          %v3019 = vld [vmem:[#allocation5 + $0x38] sm:$0xff]
          %v3020 = vld [vmem:[#allocation5 + $0x40] sm:$0xff]
          %v3021 = vld [vmem:[#allocation5 + $0x48] sm:$0xff]
          %v3022 = vld [vmem:[#allocation5 + $0x50] sm:$0xff]
          %v3023 = vld [vmem:[#allocation5 + $0x58] sm:$0xff]
          %v3024 = vld [vmem:[#allocation5 + $0x60] sm:$0xff]
          %v3025 = vld [vmem:[#allocation5 + $0x68] sm:$0xff]
          %v3026 = vld [vmem:[#allocation5 + $0x70] sm:$0xff]
          %v3027 = vld [vmem:[#allocation5 + $0x78] sm:$0xff]
          %v3028 = vld [vmem:[#allocation5 + $0x80] sm:$0xff]
          %v3029 = vld [vmem:[#allocation5 + $0x88] sm:$0xff]
          %v3030 = vld [vmem:[#allocation5 + $0x90] sm:$0xff]
          %v3031 = vld [vmem:[#allocation5 + $0x98] sm:$0xff]
          %v3032 = vld [vmem:[#allocation5 + $0xa0] sm:$0xff]
          %v3033 = vld [vmem:[#allocation5 + $0xa8] sm:$0xff]
          %v3034 = vld [vmem:[#allocation5 + $0xb0] sm:$0xff]
          %v3035 = vld [vmem:[#allocation5 + $0xb8] sm:$0xff]
          %v3036 = vld [vmem:[#allocation5 + $0xc0] sm:$0xff]
          %v3037 = vld [vmem:[#allocation5 + $0xc8] sm:$0xff]
          %v3038 = vld [vmem:[#allocation5 + $0xd0] sm:$0xff]
          %v3039 = vld [vmem:[#allocation5 + $0xd8] sm:$0xff]
          %v3040 = vld [vmem:[#allocation5 + $0xe0] sm:$0xff]
          %v3041 = vld [vmem:[#allocation5 + $0xe8] sm:$0xff]
          %v3042 = vld [vmem:[#allocation5 + $0xf0] sm:$0xff]
          %v3043 = vld [vmem:[#allocation5 + $0xf8] sm:$0xff]
          %3045 = vset.pattern.permute.xlu0 0
          %3046 = vperm.xlu0 %3045, %v2980
          %v3047 = vpop.permute.xlu0 %3046
          %3050 = vset.pattern.permute.xlu0 0
          %3051 = vperm.xlu0 %3050, %v2981
          %v3052 = vpop.permute.xlu0 %3051
          %3055 = vset.pattern.permute.xlu0 0
          %3056 = vperm.xlu0 %3055, %v2982
          %v3057 = vpop.permute.xlu0 %3056
          %3060 = vset.pattern.permute.xlu0 0
          %3061 = vperm.xlu0 %3060, %v2983
          %v3062 = vpop.permute.xlu0 %3061
          %3065 = vset.pattern.permute.xlu0 0
          %3066 = vperm.xlu0 %3065, %v2984
          %v3067 = vpop.permute.xlu0 %3066
          %3070 = vset.pattern.permute.xlu0 0
          %3071 = vperm.xlu0 %3070, %v2985
          %v3072 = vpop.permute.xlu0 %3071
          %3075 = vset.pattern.permute.xlu0 0
          %3076 = vperm.xlu0 %3075, %v2986
          %v3077 = vpop.permute.xlu0 %3076
          %3080 = vset.pattern.permute.xlu0 0
          %3081 = vperm.xlu0 %3080, %v2987
          %v3082 = vpop.permute.xlu0 %3081
          %3085 = vset.pattern.permute.xlu0 0
          %3086 = vperm.xlu0 %3085, %v2988
          %v3087 = vpop.permute.xlu0 %3086
          %3090 = vset.pattern.permute.xlu0 0
          %3091 = vperm.xlu0 %3090, %v2989
          %v3092 = vpop.permute.xlu0 %3091
          %3095 = vset.pattern.permute.xlu0 0
          %3096 = vperm.xlu0 %3095, %v2990
          %v3097 = vpop.permute.xlu0 %3096
          %3100 = vset.pattern.permute.xlu0 0
          %3101 = vperm.xlu0 %3100, %v2991
          %v3102 = vpop.permute.xlu0 %3101
          %3105 = vset.pattern.permute.xlu0 0
          %3106 = vperm.xlu0 %3105, %v2992
          %v3107 = vpop.permute.xlu0 %3106
          %3110 = vset.pattern.permute.xlu0 0
          %3111 = vperm.xlu0 %3110, %v2993
          %v3112 = vpop.permute.xlu0 %3111
          %3115 = vset.pattern.permute.xlu0 0
          %3116 = vperm.xlu0 %3115, %v2994
          %v3117 = vpop.permute.xlu0 %3116
          %3120 = vset.pattern.permute.xlu0 0
          %3121 = vperm.xlu0 %3120, %v2995
          %v3122 = vpop.permute.xlu0 %3121
          %3125 = vset.pattern.permute.xlu0 0
          %3126 = vperm.xlu0 %3125, %v2996
          %v3127 = vpop.permute.xlu0 %3126
          %3130 = vset.pattern.permute.xlu0 0
          %3131 = vperm.xlu0 %3130, %v2997
          %v3132 = vpop.permute.xlu0 %3131
          %3135 = vset.pattern.permute.xlu0 0
          %3136 = vperm.xlu0 %3135, %v2998
          %v3137 = vpop.permute.xlu0 %3136
          %3140 = vset.pattern.permute.xlu0 0
          %3141 = vperm.xlu0 %3140, %v2999
          %v3142 = vpop.permute.xlu0 %3141
          %3145 = vset.pattern.permute.xlu0 0
          %3146 = vperm.xlu0 %3145, %v3000
          %v3147 = vpop.permute.xlu0 %3146
          %3150 = vset.pattern.permute.xlu0 0
          %3151 = vperm.xlu0 %3150, %v3001
          %v3152 = vpop.permute.xlu0 %3151
          %3155 = vset.pattern.permute.xlu0 0
          %3156 = vperm.xlu0 %3155, %v3002
          %v3157 = vpop.permute.xlu0 %3156
          %3160 = vset.pattern.permute.xlu0 0
          %3161 = vperm.xlu0 %3160, %v3003
          %v3162 = vpop.permute.xlu0 %3161
          %3165 = vset.pattern.permute.xlu0 0
          %3166 = vperm.xlu0 %3165, %v3004
          %v3167 = vpop.permute.xlu0 %3166
          %3170 = vset.pattern.permute.xlu0 0
          %3171 = vperm.xlu0 %3170, %v3005
          %v3172 = vpop.permute.xlu0 %3171
          %3175 = vset.pattern.permute.xlu0 0
          %3176 = vperm.xlu0 %3175, %v3006
          %v3177 = vpop.permute.xlu0 %3176
          %3180 = vset.pattern.permute.xlu0 0
          %3181 = vperm.xlu0 %3180, %v3007
          %v3182 = vpop.permute.xlu0 %3181
          %3185 = vset.pattern.permute.xlu0 0
          %3186 = vperm.xlu0 %3185, %v3008
          %v3187 = vpop.permute.xlu0 %3186
          %3190 = vset.pattern.permute.xlu0 0
          %3191 = vperm.xlu0 %3190, %v3009
          %v3192 = vpop.permute.xlu0 %3191
          %3195 = vset.pattern.permute.xlu0 0
          %3196 = vperm.xlu0 %3195, %v3010
          %v3197 = vpop.permute.xlu0 %3196
          %3200 = vset.pattern.permute.xlu0 0
          %3201 = vperm.xlu0 %3200, %v3011
          %v3202 = vpop.permute.xlu0 %3201
          %v3204 = vmul.f32 %v3012, %v3047
          %v3205 = vmul.f32 %v3013, %v3052
          %v3206 = vmul.f32 %v3014, %v3057
          %v3207 = vmul.f32 %v3015, %v3062
          %v3208 = vmul.f32 %v3016, %v3067
          %v3209 = vmul.f32 %v3017, %v3072
          %v3210 = vmul.f32 %v3018, %v3077
          %v3211 = vmul.f32 %v3019, %v3082
          %v3212 = vmul.f32 %v3020, %v3087
          %v3213 = vmul.f32 %v3021, %v3092
          %v3214 = vmul.f32 %v3022, %v3097
          %v3215 = vmul.f32 %v3023, %v3102
          %v3216 = vmul.f32 %v3024, %v3107
          %v3217 = vmul.f32 %v3025, %v3112
          %v3218 = vmul.f32 %v3026, %v3117
          %v3219 = vmul.f32 %v3027, %v3122
          %v3220 = vmul.f32 %v3028, %v3127
          %v3221 = vmul.f32 %v3029, %v3132
          %v3222 = vmul.f32 %v3030, %v3137
          %v3223 = vmul.f32 %v3031, %v3142
          %v3224 = vmul.f32 %v3032, %v3147
          %v3225 = vmul.f32 %v3033, %v3152
          %v3226 = vmul.f32 %v3034, %v3157
          %v3227 = vmul.f32 %v3035, %v3162
          %v3228 = vmul.f32 %v3036, %v3167
          %v3229 = vmul.f32 %v3037, %v3172
          %v3230 = vmul.f32 %v3038, %v3177
          %v3231 = vmul.f32 %v3039, %v3182
          %v3232 = vmul.f32 %v3040, %v3187
          %v3233 = vmul.f32 %v3041, %v3192
          %v3234 = vmul.f32 %v3042, %v3197
          %v3235 = vmul.f32 %v3043, %v3202
          %s3236 = sld [smem:[#allocation6]]
          %v3237 = vstv %s3236
          %v3238 = vmul.f32 %v3237, %v3204
          %v3239 = vmul.f32 %v3237, %v3205
          %v3240 = vmul.f32 %v3237, %v3206
          %v3241 = vmul.f32 %v3237, %v3207
          %v3242 = vmul.f32 %v3237, %v3208
          %v3243 = vmul.f32 %v3237, %v3209
          %v3244 = vmul.f32 %v3237, %v3210
          %v3245 = vmul.f32 %v3237, %v3211
          %v3246 = vmul.f32 %v3237, %v3212
          %v3247 = vmul.f32 %v3237, %v3213
          %v3248 = vmul.f32 %v3237, %v3214
          %v3249 = vmul.f32 %v3237, %v3215
          %v3250 = vmul.f32 %v3237, %v3216
          %v3251 = vmul.f32 %v3237, %v3217
          %v3252 = vmul.f32 %v3237, %v3218
          %v3253 = vmul.f32 %v3237, %v3219
          %v3254 = vmul.f32 %v3237, %v3220
          %v3255 = vmul.f32 %v3237, %v3221
          %v3256 = vmul.f32 %v3237, %v3222
          %v3257 = vmul.f32 %v3237, %v3223
          %v3258 = vmul.f32 %v3237, %v3224
          %v3259 = vmul.f32 %v3237, %v3225
          %v3260 = vmul.f32 %v3237, %v3226
          %v3261 = vmul.f32 %v3237, %v3227
          %v3262 = vmul.f32 %v3237, %v3228
          %v3263 = vmul.f32 %v3237, %v3229
          %v3264 = vmul.f32 %v3237, %v3230
          %v3265 = vmul.f32 %v3237, %v3231
          %v3266 = vmul.f32 %v3237, %v3232
          %v3267 = vmul.f32 %v3237, %v3233
          %v3268 = vmul.f32 %v3237, %v3234
          %v3269 = vmul.f32 %v3237, %v3235
          %v3270 = vld [vmem:[%s335] sm:$0xf]
          %v3271 = vld [vmem:[%s335 + $0x4] sm:$0xf]
          %v3272 = vld [vmem:[%s335 + $0x8] sm:$0xf]
          %v3273 = vld [vmem:[%s335 + $0xc] sm:$0xf]
          %v3274 = vld [vmem:[%s335 + $0x10] sm:$0xf]
          %v3275 = vld [vmem:[%s335 + $0x14] sm:$0xf]
          %v3276 = vld [vmem:[%s335 + $0x18] sm:$0xf]
          %v3277 = vld [vmem:[%s335 + $0x1c] sm:$0xf]
          %v3278 = vld [vmem:[%s335 + $0x20] sm:$0xf]
          %v3279 = vld [vmem:[%s335 + $0x24] sm:$0xf]
          %v3280 = vld [vmem:[%s335 + $0x28] sm:$0xf]
          %v3281 = vld [vmem:[%s335 + $0x2c] sm:$0xf]
          %v3282 = vld [vmem:[%s335 + $0x30] sm:$0xf]
          %v3283 = vld [vmem:[%s335 + $0x34] sm:$0xf]
          %v3284 = vld [vmem:[%s335 + $0x38] sm:$0xf]
          %v3285 = vld [vmem:[%s335 + $0x3c] sm:$0xf]
          %v3286 = vld [vmem:[%s335 + $0x40] sm:$0xf]
          %v3287 = vld [vmem:[%s335 + $0x44] sm:$0xf]
          %v3288 = vld [vmem:[%s335 + $0x48] sm:$0xf]
          %v3289 = vld [vmem:[%s335 + $0x4c] sm:$0xf]
          %v3290 = vld [vmem:[%s335 + $0x50] sm:$0xf]
          %v3291 = vld [vmem:[%s335 + $0x54] sm:$0xf]
          %v3292 = vld [vmem:[%s335 + $0x58] sm:$0xf]
          %v3293 = vld [vmem:[%s335 + $0x5c] sm:$0xf]
          %v3294 = vld [vmem:[%s335 + $0x60] sm:$0xf]
          %v3295 = vld [vmem:[%s335 + $0x64] sm:$0xf]
          %v3296 = vld [vmem:[%s335 + $0x68] sm:$0xf]
          %v3297 = vld [vmem:[%s335 + $0x6c] sm:$0xf]
          %v3298 = vld [vmem:[%s335 + $0x70] sm:$0xf]
          %v3299 = vld [vmem:[%s335 + $0x74] sm:$0xf]
          %v3300 = vld [vmem:[%s335 + $0x78] sm:$0xf]
          %v3301 = vld [vmem:[%s335 + $0x7c] sm:$0xf]
          %v3302 = vunpack.c.l.bf16 %v3270
          %v3303 = vunpack.c.l.bf16 %v3271
          %v3304 = vunpack.c.l.bf16 %v3272
          %v3305 = vunpack.c.l.bf16 %v3273
          %v3306 = vunpack.c.l.bf16 %v3274
          %v3307 = vunpack.c.l.bf16 %v3275
          %v3308 = vunpack.c.l.bf16 %v3276
          %v3309 = vunpack.c.l.bf16 %v3277
          %v3310 = vunpack.c.l.bf16 %v3278
          %v3311 = vunpack.c.l.bf16 %v3279
          %v3312 = vunpack.c.l.bf16 %v3280
          %v3313 = vunpack.c.l.bf16 %v3281
          %v3314 = vunpack.c.l.bf16 %v3282
          %v3315 = vunpack.c.l.bf16 %v3283
          %v3316 = vunpack.c.l.bf16 %v3284
          %v3317 = vunpack.c.l.bf16 %v3285
          %v3318 = vunpack.c.l.bf16 %v3286
          %v3319 = vunpack.c.l.bf16 %v3287
          %v3320 = vunpack.c.l.bf16 %v3288
          %v3321 = vunpack.c.l.bf16 %v3289
          %v3322 = vunpack.c.l.bf16 %v3290
          %v3323 = vunpack.c.l.bf16 %v3291
          %v3324 = vunpack.c.l.bf16 %v3292
          %v3325 = vunpack.c.l.bf16 %v3293
          %v3326 = vunpack.c.l.bf16 %v3294
          %v3327 = vunpack.c.l.bf16 %v3295
          %v3328 = vunpack.c.l.bf16 %v3296
          %v3329 = vunpack.c.l.bf16 %v3297
          %v3330 = vunpack.c.l.bf16 %v3298
          %v3331 = vunpack.c.l.bf16 %v3299
          %v3332 = vunpack.c.l.bf16 %v3300
          %v3333 = vunpack.c.l.bf16 %v3301
          %v3334 = vadd.f32 %v3238, %v3302
          %v3335 = vadd.f32 %v3239, %v3303
          %v3336 = vadd.f32 %v3240, %v3304
          %v3337 = vadd.f32 %v3241, %v3305
          %v3338 = vadd.f32 %v3242, %v3306
          %v3339 = vadd.f32 %v3243, %v3307
          %v3340 = vadd.f32 %v3244, %v3308
          %v3341 = vadd.f32 %v3245, %v3309
          %v3342 = vadd.f32 %v3246, %v3310
          %v3343 = vadd.f32 %v3247, %v3311
          %v3344 = vadd.f32 %v3248, %v3312
          %v3345 = vadd.f32 %v3249, %v3313
          %v3346 = vadd.f32 %v3250, %v3314
          %v3347 = vadd.f32 %v3251, %v3315
          %v3348 = vadd.f32 %v3252, %v3316
          %v3349 = vadd.f32 %v3253, %v3317
          %v3350 = vadd.f32 %v3254, %v3318
          %v3351 = vadd.f32 %v3255, %v3319
          %v3352 = vadd.f32 %v3256, %v3320
          %v3353 = vadd.f32 %v3257, %v3321
          %v3354 = vadd.f32 %v3258, %v3322
          %v3355 = vadd.f32 %v3259, %v3323
          %v3356 = vadd.f32 %v3260, %v3324
          %v3357 = vadd.f32 %v3261, %v3325
          %v3358 = vadd.f32 %v3262, %v3326
          %v3359 = vadd.f32 %v3263, %v3327
          %v3360 = vadd.f32 %v3264, %v3328
          %v3361 = vadd.f32 %v3265, %v3329
          %v3362 = vadd.f32 %v3266, %v3330
          %v3363 = vadd.f32 %v3267, %v3331
          %v3364 = vadd.f32 %v3268, %v3332
          %v3365 = vadd.f32 %v3269, %v3333
          %3366 = vst [vmem:[%s395] sm:$0xff] %v3334
          %3367 = vst [vmem:[%s395 + $0x8] sm:$0xff] %v3335
          %3368 = vst [vmem:[%s395 + $0x10] sm:$0xff] %v3336
          %3369 = vst [vmem:[%s395 + $0x18] sm:$0xff] %v3337
          %3370 = vst [vmem:[%s395 + $0x20] sm:$0xff] %v3338
          %3371 = vst [vmem:[%s395 + $0x28] sm:$0xff] %v3339
          %3372 = vst [vmem:[%s395 + $0x30] sm:$0xff] %v3340
          %3373 = vst [vmem:[%s395 + $0x38] sm:$0xff] %v3341
          %3374 = vst [vmem:[%s395 + $0x40] sm:$0xff] %v3342
          %3375 = vst [vmem:[%s395 + $0x48] sm:$0xff] %v3343
          %3376 = vst [vmem:[%s395 + $0x50] sm:$0xff] %v3344
          %3377 = vst [vmem:[%s395 + $0x58] sm:$0xff] %v3345
          %3378 = vst [vmem:[%s395 + $0x60] sm:$0xff] %v3346
          %3379 = vst [vmem:[%s395 + $0x68] sm:$0xff] %v3347
          %3380 = vst [vmem:[%s395 + $0x70] sm:$0xff] %v3348
          %3381 = vst [vmem:[%s395 + $0x78] sm:$0xff] %v3349
          %3382 = vst [vmem:[%s395 + $0x80] sm:$0xff] %v3350
          %3383 = vst [vmem:[%s395 + $0x88] sm:$0xff] %v3351
          %3384 = vst [vmem:[%s395 + $0x90] sm:$0xff] %v3352
          %3385 = vst [vmem:[%s395 + $0x98] sm:$0xff] %v3353
          %3386 = vst [vmem:[%s395 + $0xa0] sm:$0xff] %v3354
          %3387 = vst [vmem:[%s395 + $0xa8] sm:$0xff] %v3355
          %3388 = vst [vmem:[%s395 + $0xb0] sm:$0xff] %v3356
          %3389 = vst [vmem:[%s395 + $0xb8] sm:$0xff] %v3357
          %3390 = vst [vmem:[%s395 + $0xc0] sm:$0xff] %v3358
          %3391 = vst [vmem:[%s395 + $0xc8] sm:$0xff] %v3359
          %3392 = vst [vmem:[%s395 + $0xd0] sm:$0xff] %v3360
          %3393 = vst [vmem:[%s395 + $0xd8] sm:$0xff] %v3361
          %3394 = vst [vmem:[%s395 + $0xe0] sm:$0xff] %v3362
          %3395 = vst [vmem:[%s395 + $0xe8] sm:$0xff] %v3363
          %3396 = vst [vmem:[%s395 + $0xf0] sm:$0xff] %v3364
          %3397 = vst [vmem:[%s395 + $0xf8] sm:$0xff] %v3365
        $region68: #{tpu_custom_call.1} parent=43 // pred_fallthru
          _
        %s3398 = sand.u32 %s204, 1
        %s3399 = scalar_lea.sflag [#allocation9], %s3398
        %s3400 = sand.u32 %s204, 1
        %s3401 = smul.addr %s3400, 256
        %s3402 = scalar_lea.vmem [#allocation15], %s3401
        // Predicated region
        $region69: #{tpu_custom_call.1} parent=43 // pred_check
          %p3403 = pneg %p214
        $region70: #{tpu_custom_call.1} parent=43 // pred_check_branch
          %3405 = sbr.rel (%p3403) target = $region72
        $region71: #{tpu_custom_call.1} parent=43 // pred_region
          %s3406 = smul.u32 32, %s34
          %s3408 = ssub.s32 4096, 4096
          %3409 = vsyncadd %s3399, %s3408
          %s3410 = smul.addr %s33, 32
          %s3411 = sadd.s32 %s3406, %s3410
          %s3412 = smul.addr %s3411, 128
          %s3413 = scalar_lea.hbm %s6, %s3412
          %s3414 = sshll.u32 %s3402, 4
          %s3415 = int_to_ptr.vmem [resolvable:$true] %s3414
          %3420 = dma.vmem_to_hbm [thread:$0]  %s3415, 4096, %s3413, %s3399, 128, 128, 8
        $region72: #{tpu_custom_call.1} parent=43 // pred_fallthru
          _
      $region44: #{tpu_custom_call.1} parent=5 // pred_fallthru
        _
      %p3421 = scmp.le.s32.totalorder 2, %s23
      // Predicated region
      $region73: #{tpu_custom_call.1} parent=5 // pred_check
        %p3422 = pneg %p3421
      $region74: #{tpu_custom_call.1} parent=5 // pred_check_branch
        %3424 = sbr.rel (%p3422) target = $region76
      $region75: #{tpu_custom_call.1} parent=5 // pred_region
        %s3425 = ssub.s32 %s23, 2
        // Predicated region
        $region77: #{tpu_custom_call.1} parent=75 // pred_check
          %p3426 = pneg %p220
        $region78: #{tpu_custom_call.1} parent=75 // pred_check_branch
          %3428 = sbr.rel (%p3426) target = $region80
        $region79: #{tpu_custom_call.1} parent=75 // pred_region
          %s3429 = sand.u32 %s205, 1
          %s3430 = scalar_lea.sflag [#allocation9], %s3429
          %s3431 = sand.u32 %s205, 1
          %s3432 = smul.addr %s3431, 256
          %s3433 = scalar_lea.vmem [#allocation15], %s3432
          %3434 = dma.done %s3430, 4096
        $region80: #{tpu_custom_call.1} parent=75 // pred_fallthru
          _
      $region76: #{tpu_custom_call.1} parent=5 // pred_fallthru
        _
    $region6: #{tpu_custom_call.1} parent=1 // loop_footer
      %s27 = sadd.s32 1, %s23
    $region7: #{tpu_custom_call.1} parent=1 // loop_footer_branch
      %22 = sbr.rel target = $region3
    $region8: #{tpu_custom_call.1} parent=1 // loop_exit
      _
    %3435 = vsyncpa [#allocation8], 1
    %s3436 = scalar_lea.sflag [#allocation8], 1
    %3437 = vsyncpa %s3436, 1
    %3438 = vsyncpa [#allocation11], 1
    %s3439 = scalar_lea.sflag [#allocation11], 1
    %3440 = vsyncpa %s3439, 1
    %3441 = vsyncpa [#allocation14], 1
    %3442 = vsyncpa [#allocation9], 1
    %s3443 = scalar_lea.sflag [#allocation9], 1
    %3444 = vsyncpa %s3443, 1

</llo_original>
